<compile_context>
chip_gen: v6e
topology: v6e:2x2x1
jax: 0.10.0
libtpu: 0.0.40
codegen_flags: <defaults>
</compile_context>

<pallas_src>
import functools

import jax
import jax.numpy as jnp
from jax import lax
from jax.experimental import pallas as pl
from jax.experimental.pallas import tpu as pltpu


# ----------------------------------------------------------------------------
# Fused ResBlock kernel (one batch element per grid step)
# ----------------------------------------------------------------------------
def _resblock_kernel(x_ref, w_ref, b_ref, o_ref, xp_ref, *, k, dils, T,
                     pad_lead, slope):
    """x_ref: (1, T, C) input slab.
    w_ref: (L_total, k, C_in, C_out) weight-normed weights (all layers).
    b_ref: (L_total, 1, C_out) biases.
    o_ref: (1, T, C) ResBlock output (sum over conv blocks).
    xp_ref: (pad_lead + T + pad_lead, C) VMEM scratch for the padded activation.
    """
    x = x_ref[0].astype(jnp.float32)                      # (T, C)

    # Zero the padded scratch once; the halo rows stay zero for every layer
    # (only the interior [pad_lead, pad_lead+T) is rewritten per layer), which
    # gives exactly PyTorch's zero 'same' padding of the activated input.
    xp_ref[...] = jnp.zeros(xp_ref.shape, xp_ref.dtype)

    out = None
    li = 0
    for block_dils in dils:                               # static unroll: ConvBlocks
        h = x
        for d in block_dils:                              # static unroll: conv layers
            p = d * (k - 1) // 2                          # 'same' pad (odd k)
            a = jnp.where(h > 0, h, slope * h)            # LeakyReLU
            xp_ref[pad_lead:pad_lead + T, :] = a          # aligned interior store
            xp = xp_ref[...]                              # (Tp, C) padded activation
            acc = None
            for j in range(k):                            # static unroll: taps
                start = pad_lead - p + j * d              # static sublane offset
                tap = xp[start:start + T, :]              # (T, C_in)
                contrib = jnp.dot(tap, w_ref[li, j],
                                  preferred_element_type=jnp.float32)
                acc = contrib if acc is None else acc + contrib
            h = acc + b_ref[li].astype(jnp.float32)       # (T, C_out)
            li += 1
        out = h if out is None else out + h               # residual sum of blocks
    o_ref[0] = out.astype(o_ref.dtype)


# ----------------------------------------------------------------------------
# Wrapper
# ----------------------------------------------------------------------------
def weight_norm_effective(v, g):
    """PyTorch weight_norm (dim=0): w = g * v / ||v||, norm over (in_ch, k) per out_ch."""
    norm = jnp.sqrt(jnp.sum(v * v, axis=(1, 2), keepdims=True))
    return g.reshape(-1, 1, 1) * v / norm


def resblock_forward(x_nct, params, Drs, slope):
    """ResBlock.forward: out = sum_i ConvBlock_i(x).  x_nct: (N, C, T) like PyTorch."""
    N, C, T = x_nct.shape
    dils = tuple(tuple(int(d) for d in row) for row in Drs)
    k = params[0][0][0].shape[-1]
    pad_max = max(d * (k - 1) // 2 for row in dils for d in row)
    pad_lead = ((pad_max + 7) // 8) * 8                   # sublane-aligned halo
    Tp = pad_lead + T + pad_lead

    # Precompute weight_norm + layout once per forward (outside the kernel).
    w_list, b_list = [], []
    for layers in params:
        for (v, g, b) in layers:
            w = weight_norm_effective(v, g)               # (C_out, C_in, k)
            w_list.append(jnp.transpose(w, (2, 1, 0)))    # (k, C_in, C_out)
            b_list.append(b.reshape(1, C))
    w_all = jnp.stack(w_list, axis=0)                     # (L_total, k, C_in, C_out)
    b_all = jnp.stack(b_list, axis=0)                     # (L_total, 1, C)

    x_ntc = jnp.transpose(x_nct, (0, 2, 1))               # (N, T, C): channels on lanes

    kernel = functools.partial(_resblock_kernel, k=k, dils=dils, T=T,
                               pad_lead=pad_lead, slope=slope)
    out_ntc = pl.pallas_call(
        kernel,
        out_shape=jax.ShapeDtypeStruct((N, T, C), x_nct.dtype),
        grid_spec=pltpu.PrefetchScalarGridSpec(
            num_scalar_prefetch=0,
            grid=(N,),
            in_specs=[
                pl.BlockSpec((1, T, C), lambda n: (n, 0, 0)),          # x, per batch
                pl.BlockSpec(w_all.shape, lambda n: (0, 0, 0, 0)),     # all weights
                pl.BlockSpec(b_all.shape, lambda n: (0, 0, 0)),        # all biases
            ],
            out_specs=pl.BlockSpec((1, T, C), lambda n: (n, 0, 0)),
            scratch_shapes=[pltpu.VMEM((Tp, C), jnp.float32)],         # padded act.
        ),
        compiler_params=pltpu.CompilerParams(dimension_semantics=("parallel",)),
    )(x_ntc, w_all, b_all)
    return jnp.transpose(out_ntc, (0, 2, 1))              # back to (N, C, T)


def init_resblock_params(key, channels, k, Drs):
    """Deterministic synthetic parameters matching nn.Conv1d + weight_norm shapes."""
    params = []
    for bi in range(len(Drs)):
        layers = []
        for _li in range(len(Drs[bi])):
            key, k1, k2, k3 = jax.random.split(key, 4)
            v = 0.1 * jax.random.normal(k1, (channels, channels, k), jnp.float32)
            g = 1.0 + 0.05 * jax.random.normal(k2, (channels,), jnp.float32)
            b = 0.1 * jax.random.normal(k3, (channels,), jnp.float32)
            layers.append((v, g, b))
        params.append(layers)
    return params


# ----------------------------------------------------------------------------
# Pure-JAX reference (mirrors the PyTorch module semantics exactly)
# ----------------------------------------------------------------------------
def resblock_reference(x_nct, params, Drs, slope):
    out = 0.0
    for bi, layers in enumerate(params):
        h = x_nct
        for li, (v, g, b) in enumerate(layers):
            w = weight_norm_effective(v, g)
            d = int(Drs[bi][li])
            pad = d * (w.shape[-1] - 1) // 2
            h = jnp.where(h > 0, h, slope * h)
            h = lax.conv_general_dilated(
                h, w, window_strides=(1,), padding=[(pad, pad)],
                rhs_dilation=(d,), dimension_numbers=('NCH', 'OIH', 'NCH'))
            h = h + b.reshape(1, -1, 1)
        out = h + out
    return out


# ----------------------------------------------------------------------------
if __name__ == "__main__":
    channels, k, slope = 32, 3, 0.1
    Drs = ((1, 3, 5), (1, 3, 5))        # Drs.shape == (2, 3) as in HiFi-GAN
    N, T = 2, 64

    key = jax.random.PRNGKey(0)
    kx, kp = jax.random.split(key)
    x = jax.random.normal(kx, (N, channels, T), jnp.float32)  # PyTorch NCT layout
    params = init_resblock_params(kp, channels, k, Drs)

    out = jax.block_until_ready(resblock_forward(x, params, Drs, slope))
    ref = jax.block_until_ready(resblock_reference(x, params, Drs, slope))

    assert out.shape == (N, channels, T)
    err = float(jnp.max(jnp.abs(out - ref)))
    if err > 1e-4:
        raise AssertionError(f"Pallas ResBlock mismatch vs reference: max err {err}")

    print("KERNEL_OK")
</pallas_src>

<mosaic_0001>
module attributes {stable_mosaic.version = 11 : i64} {
  func.func @_resblock_kernel(%arg0: i32, %arg1: memref<1x64x32xf32, #tpu.memory_space<vmem>>, %arg2: memref<6x3x32x32xf32, #tpu.memory_space<vmem>>, %arg3: memref<6x1x32xf32, #tpu.memory_space<vmem>>, %arg4: memref<1x64x32xf32, #tpu.memory_space<vmem>>, %arg5: memref<80x32xf32, #tpu.memory_space<vmem>>) attributes {dimension_semantics = [#tpu.dimension_semantics<parallel>], iteration_bounds = array<i64: 2>, scalar_prefetch = 0 : i64, scratch_operands = 1 : i64, tpu.core_type = #tpu.core_type<tc>, window_params = [{transform_indices = @transform_0, window_bounds = array<i64: 1, 64, 32>}, {pipeline_mode = #tpu.pipeline_mode<synchronous>, transform_indices = @transform_1, window_bounds = array<i64: 6, 3, 32, 32>}, {pipeline_mode = #tpu.pipeline_mode<synchronous>, transform_indices = @transform_2, window_bounds = array<i64: 6, 1, 32>}, {transform_indices = @transform_3, window_bounds = array<i64: 1, 64, 32>}]} {
    %c0 = arith.constant 0 : index
    %c0_0 = arith.constant 0 : index
    %c0_1 = arith.constant 0 : index
    %0 = vector.load %arg1[%c0, %c0_0, %c0_1] : memref<1x64x32xf32, #tpu.memory_space<vmem>>, vector<1x64x32xf32>
    %1 = vector.shape_cast %0 : vector<1x64x32xf32> to vector<64x32xf32>
    %cst = arith.constant 0.000000e+00 : f32
    %2 = vector.broadcast %cst : f32 to vector<80x32xf32>
    %c0_2 = arith.constant 0 : index
    %c0_3 = arith.constant 0 : index
    %3 = vector.load %arg5[%c0_2, %c0_3] : memref<80x32xf32, #tpu.memory_space<vmem>>, vector<80x32xf32>
    tpu.vector_store %arg5[%c0_2, %c0_3], %2 {strides = array<i32>} : memref<80x32xf32, #tpu.memory_space<vmem>>, vector<80x32xf32>,
    %cst_4 = arith.constant 0.000000e+00 : f32
    %4 = vector.broadcast %cst_4 : f32 to vector<64x32xf32>
    %5 = arith.cmpf ogt, %1, %4 : vector<64x32xf32>
    %cst_5 = arith.constant 1.000000e-01 : f32
    %6 = vector.broadcast %cst_5 : f32 to vector<64x32xf32>
    %7 = arith.mulf %6, %1 : vector<64x32xf32>
    %8 = arith.select %5, %1, %7 : vector<64x32xi1>, vector<64x32xf32>
    %c8 = arith.constant 8 : index
    %c0_6 = arith.constant 0 : index
    %9 = vector.load %arg5[%c8, %c0_6] : memref<80x32xf32, #tpu.memory_space<vmem>>, vector<64x32xf32>
    tpu.vector_store %arg5[%c8, %c0_6], %8 {strides = array<i32>} : memref<80x32xf32, #tpu.memory_space<vmem>>, vector<64x32xf32>,
    %c0_7 = arith.constant 0 : index
    %c0_8 = arith.constant 0 : index
    %10 = vector.load %arg5[%c0_7, %c0_8] : memref<80x32xf32, #tpu.memory_space<vmem>>, vector<80x32xf32>
    %11 = vector.extract_strided_slice %10 {offsets = [7, 0], sizes = [64, 32], strides = [1, 1]} : vector<80x32xf32> to vector<64x32xf32>
    %c0_9 = arith.constant 0 : index
    %c0_10 = arith.constant 0 : index
    %c0_11 = arith.constant 0 : index
    %c0_12 = arith.constant 0 : index
    %12 = vector.load %arg2[%c0_9, %c0_10, %c0_11, %c0_12] : memref<6x3x32x32xf32, #tpu.memory_space<vmem>>, vector<1x1x32x32xf32>
    %13 = vector.shape_cast %12 : vector<1x1x32x32xf32> to vector<32x32xf32>
    %cst_13 = arith.constant dense<0.000000e+00> : vector<64x32xf32>
    %14 = tpu.matmul %11, %13, %cst_13 {dimension_numbers = #tpu.dot_dimension_numbers<[1], [0], [0], [1], [0, 0, 1, 1], [], []>} : vector<64x32xf32>, vector<32x32xf32>, vector<64x32xf32> -> vector<64x32xf32>
    %15 = vector.extract_strided_slice %10 {offsets = [8, 0], sizes = [64, 32], strides = [1, 1]} : vector<80x32xf32> to vector<64x32xf32>
    %c0_14 = arith.constant 0 : index
    %c1 = arith.constant 1 : index
    %c0_15 = arith.constant 0 : index
    %c0_16 = arith.constant 0 : index
    %16 = vector.load %arg2[%c0_14, %c1, %c0_15, %c0_16] : memref<6x3x32x32xf32, #tpu.memory_space<vmem>>, vector<1x1x32x32xf32>
    %17 = vector.shape_cast %16 : vector<1x1x32x32xf32> to vector<32x32xf32>
    %cst_17 = arith.constant dense<0.000000e+00> : vector<64x32xf32>
    %18 = tpu.matmul %15, %17, %cst_17 {dimension_numbers = #tpu.dot_dimension_numbers<[1], [0], [0], [1], [0, 0, 1, 1], [], []>} : vector<64x32xf32>, vector<32x32xf32>, vector<64x32xf32> -> vector<64x32xf32>
    %19 = arith.addf %14, %18 : vector<64x32xf32>
    %20 = vector.extract_strided_slice %10 {offsets = [9, 0], sizes = [64, 32], strides = [1, 1]} : vector<80x32xf32> to vector<64x32xf32>
    %c0_18 = arith.constant 0 : index
    %c2 = arith.constant 2 : index
    %c0_19 = arith.constant 0 : index
    %c0_20 = arith.constant 0 : index
    %21 = vector.load %arg2[%c0_18, %c2, %c0_19, %c0_20] : memref<6x3x32x32xf32, #tpu.memory_space<vmem>>, vector<1x1x32x32xf32>
    %22 = vector.shape_cast %21 : vector<1x1x32x32xf32> to vector<32x32xf32>
    %cst_21 = arith.constant dense<0.000000e+00> : vector<64x32xf32>
    %23 = tpu.matmul %20, %22, %cst_21 {dimension_numbers = #tpu.dot_dimension_numbers<[1], [0], [0], [1], [0, 0, 1, 1], [], []>} : vector<64x32xf32>, vector<32x32xf32>, vector<64x32xf32> -> vector<64x32xf32>
    %24 = arith.addf %19, %23 : vector<64x32xf32>
    %c0_22 = arith.constant 0 : index
    %c0_23 = arith.constant 0 : index
    %c0_24 = arith.constant 0 : index
    %25 = vector.load %arg3[%c0_22, %c0_23, %c0_24] : memref<6x1x32xf32, #tpu.memory_space<vmem>>, vector<1x1x32xf32>
    %26 = vector.shape_cast %25 : vector<1x1x32xf32> to vector<1x32xf32>
    %27 = vector.broadcast %26 : vector<1x32xf32> to vector<64x32xf32>
    %28 = arith.addf %24, %27 : vector<64x32xf32>
    %cst_25 = arith.constant 0.000000e+00 : f32
    %29 = vector.broadcast %cst_25 : f32 to vector<64x32xf32>
    %30 = arith.cmpf ogt, %28, %29 : vector<64x32xf32>
    %cst_26 = arith.constant 1.000000e-01 : f32
    %31 = vector.broadcast %cst_26 : f32 to vector<64x32xf32>
    %32 = arith.mulf %31, %28 : vector<64x32xf32>
    %33 = arith.select %30, %28, %32 : vector<64x32xi1>, vector<64x32xf32>
    %c8_27 = arith.constant 8 : index
    %c0_28 = arith.constant 0 : index
    %34 = vector.load %arg5[%c8_27, %c0_28] : memref<80x32xf32, #tpu.memory_space<vmem>>, vector<64x32xf32>
    tpu.vector_store %arg5[%c8_27, %c0_28], %33 {strides = array<i32>} : memref<80x32xf32, #tpu.memory_space<vmem>>, vector<64x32xf32>,
    %c0_29 = arith.constant 0 : index
    %c0_30 = arith.constant 0 : index
    %35 = vector.load %arg5[%c0_29, %c0_30] : memref<80x32xf32, #tpu.memory_space<vmem>>, vector<80x32xf32>
    %36 = vector.extract_strided_slice %35 {offsets = [5, 0], sizes = [64, 32], strides = [1, 1]} : vector<80x32xf32> to vector<64x32xf32>
    %c1_31 = arith.constant 1 : index
    %c0_32 = arith.constant 0 : index
    %c0_33 = arith.constant 0 : index
    %c0_34 = arith.constant 0 : index
    %37 = vector.load %arg2[%c1_31, %c0_32, %c0_33, %c0_34] : memref<6x3x32x32xf32, #tpu.memory_space<vmem>>, vector<1x1x32x32xf32>
    %38 = vector.shape_cast %37 : vector<1x1x32x32xf32> to vector<32x32xf32>
    %cst_35 = arith.constant dense<0.000000e+00> : vector<64x32xf32>
    %39 = tpu.matmul %36, %38, %cst_35 {dimension_numbers = #tpu.dot_dimension_numbers<[1], [0], [0], [1], [0, 0, 1, 1], [], []>} : vector<64x32xf32>, vector<32x32xf32>, vector<64x32xf32> -> vector<64x32xf32>
    %40 = vector.extract_strided_slice %35 {offsets = [8, 0], sizes = [64, 32], strides = [1, 1]} : vector<80x32xf32> to vector<64x32xf32>
    %c1_36 = arith.constant 1 : index
    %c1_37 = arith.constant 1 : index
    %c0_38 = arith.constant 0 : index
    %c0_39 = arith.constant 0 : index
    %41 = vector.load %arg2[%c1_36, %c1_37, %c0_38, %c0_39] : memref<6x3x32x32xf32, #tpu.memory_space<vmem>>, vector<1x1x32x32xf32>
    %42 = vector.shape_cast %41 : vector<1x1x32x32xf32> to vector<32x32xf32>
    %cst_40 = arith.constant dense<0.000000e+00> : vector<64x32xf32>
    %43 = tpu.matmul %40, %42, %cst_40 {dimension_numbers = #tpu.dot_dimension_numbers<[1], [0], [0], [1], [0, 0, 1, 1], [], []>} : vector<64x32xf32>, vector<32x32xf32>, vector<64x32xf32> -> vector<64x32xf32>
    %44 = arith.addf %39, %43 : vector<64x32xf32>
    %45 = vector.extract_strided_slice %35 {offsets = [11, 0], sizes = [64, 32], strides = [1, 1]} : vector<80x32xf32> to vector<64x32xf32>
    %c1_41 = arith.constant 1 : index
    %c2_42 = arith.constant 2 : index
    %c0_43 = arith.constant 0 : index
    %c0_44 = arith.constant 0 : index
    %46 = vector.load %arg2[%c1_41, %c2_42, %c0_43, %c0_44] : memref<6x3x32x32xf32, #tpu.memory_space<vmem>>, vector<1x1x32x32xf32>
    %47 = vector.shape_cast %46 : vector<1x1x32x32xf32> to vector<32x32xf32>
    %cst_45 = arith.constant dense<0.000000e+00> : vector<64x32xf32>
    %48 = tpu.matmul %45, %47, %cst_45 {dimension_numbers = #tpu.dot_dimension_numbers<[1], [0], [0], [1], [0, 0, 1, 1], [], []>} : vector<64x32xf32>, vector<32x32xf32>, vector<64x32xf32> -> vector<64x32xf32>
    %49 = arith.addf %44, %48 : vector<64x32xf32>
    %c1_46 = arith.constant 1 : index
    %c0_47 = arith.constant 0 : index
    %c0_48 = arith.constant 0 : index
    %50 = vector.load %arg3[%c1_46, %c0_47, %c0_48] : memref<6x1x32xf32, #tpu.memory_space<vmem>>, vector<1x1x32xf32>
    %51 = vector.shape_cast %50 : vector<1x1x32xf32> to vector<1x32xf32>
    %52 = vector.broadcast %51 : vector<1x32xf32> to vector<64x32xf32>
    %53 = arith.addf %49, %52 : vector<64x32xf32>
    %cst_49 = arith.constant 0.000000e+00 : f32
    %54 = vector.broadcast %cst_49 : f32 to vector<64x32xf32>
    %55 = arith.cmpf ogt, %53, %54 : vector<64x32xf32>
    %cst_50 = arith.constant 1.000000e-01 : f32
    %56 = vector.broadcast %cst_50 : f32 to vector<64x32xf32>
    %57 = arith.mulf %56, %53 : vector<64x32xf32>
    %58 = arith.select %55, %53, %57 : vector<64x32xi1>, vector<64x32xf32>
    %c8_51 = arith.constant 8 : index
    %c0_52 = arith.constant 0 : index
    %59 = vector.load %arg5[%c8_51, %c0_52] : memref<80x32xf32, #tpu.memory_space<vmem>>, vector<64x32xf32>
    tpu.vector_store %arg5[%c8_51, %c0_52], %58 {strides = array<i32>} : memref<80x32xf32, #tpu.memory_space<vmem>>, vector<64x32xf32>,
    %c0_53 = arith.constant 0 : index
    %c0_54 = arith.constant 0 : index
    %60 = vector.load %arg5[%c0_53, %c0_54] : memref<80x32xf32, #tpu.memory_space<vmem>>, vector<80x32xf32>
    %61 = vector.extract_strided_slice %60 {offsets = [3, 0], sizes = [64, 32], strides = [1, 1]} : vector<80x32xf32> to vector<64x32xf32>
    %c2_55 = arith.constant 2 : index
    %c0_56 = arith.constant 0 : index
    %c0_57 = arith.constant 0 : index
    %c0_58 = arith.constant 0 : index
    %62 = vector.load %arg2[%c2_55, %c0_56, %c0_57, %c0_58] : memref<6x3x32x32xf32, #tpu.memory_space<vmem>>, vector<1x1x32x32xf32>
    %63 = vector.shape_cast %62 : vector<1x1x32x32xf32> to vector<32x32xf32>
    %cst_59 = arith.constant dense<0.000000e+00> : vector<64x32xf32>
    %64 = tpu.matmul %61, %63, %cst_59 {dimension_numbers = #tpu.dot_dimension_numbers<[1], [0], [0], [1], [0, 0, 1, 1], [], []>} : vector<64x32xf32>, vector<32x32xf32>, vector<64x32xf32> -> vector<64x32xf32>
    %65 = vector.extract_strided_slice %60 {offsets = [8, 0], sizes = [64, 32], strides = [1, 1]} : vector<80x32xf32> to vector<64x32xf32>
    %c2_60 = arith.constant 2 : index
    %c1_61 = arith.constant 1 : index
    %c0_62 = arith.constant 0 : index
    %c0_63 = arith.constant 0 : index
    %66 = vector.load %arg2[%c2_60, %c1_61, %c0_62, %c0_63] : memref<6x3x32x32xf32, #tpu.memory_space<vmem>>, vector<1x1x32x32xf32>
    %67 = vector.shape_cast %66 : vector<1x1x32x32xf32> to vector<32x32xf32>
    %cst_64 = arith.constant dense<0.000000e+00> : vector<64x32xf32>
    %68 = tpu.matmul %65, %67, %cst_64 {dimension_numbers = #tpu.dot_dimension_numbers<[1], [0], [0], [1], [0, 0, 1, 1], [], []>} : vector<64x32xf32>, vector<32x32xf32>, vector<64x32xf32> -> vector<64x32xf32>
    %69 = arith.addf %64, %68 : vector<64x32xf32>
    %70 = vector.extract_strided_slice %60 {offsets = [13, 0], sizes = [64, 32], strides = [1, 1]} : vector<80x32xf32> to vector<64x32xf32>
    %c2_65 = arith.constant 2 : index
    %c2_66 = arith.constant 2 : index
    %c0_67 = arith.constant 0 : index
    %c0_68 = arith.constant 0 : index
    %71 = vector.load %arg2[%c2_65, %c2_66, %c0_67, %c0_68] : memref<6x3x32x32xf32, #tpu.memory_space<vmem>>, vector<1x1x32x32xf32>
    %72 = vector.shape_cast %71 : vector<1x1x32x32xf32> to vector<32x32xf32>
    %cst_69 = arith.constant dense<0.000000e+00> : vector<64x32xf32>
    %73 = tpu.matmul %70, %72, %cst_69 {dimension_numbers = #tpu.dot_dimension_numbers<[1], [0], [0], [1], [0, 0, 1, 1], [], []>} : vector<64x32xf32>, vector<32x32xf32>, vector<64x32xf32> -> vector<64x32xf32>
    %74 = arith.addf %69, %73 : vector<64x32xf32>
    %c2_70 = arith.constant 2 : index
    %c0_71 = arith.constant 0 : index
    %c0_72 = arith.constant 0 : index
    %75 = vector.load %arg3[%c2_70, %c0_71, %c0_72] : memref<6x1x32xf32, #tpu.memory_space<vmem>>, vector<1x1x32xf32>
    %76 = vector.shape_cast %75 : vector<1x1x32xf32> to vector<1x32xf32>
    %77 = vector.broadcast %76 : vector<1x32xf32> to vector<64x32xf32>
    %78 = arith.addf %74, %77 : vector<64x32xf32>
    %cst_73 = arith.constant 0.000000e+00 : f32
    %79 = vector.broadcast %cst_73 : f32 to vector<64x32xf32>
    %80 = arith.cmpf ogt, %1, %79 : vector<64x32xf32>
    %cst_74 = arith.constant 1.000000e-01 : f32
    %81 = vector.broadcast %cst_74 : f32 to vector<64x32xf32>
    %82 = arith.mulf %81, %1 : vector<64x32xf32>
    %83 = arith.select %80, %1, %82 : vector<64x32xi1>, vector<64x32xf32>
    %c8_75 = arith.constant 8 : index
    %c0_76 = arith.constant 0 : index
    %84 = vector.load %arg5[%c8_75, %c0_76] : memref<80x32xf32, #tpu.memory_space<vmem>>, vector<64x32xf32>
    tpu.vector_store %arg5[%c8_75, %c0_76], %83 {strides = array<i32>} : memref<80x32xf32, #tpu.memory_space<vmem>>, vector<64x32xf32>,
    %c0_77 = arith.constant 0 : index
    %c0_78 = arith.constant 0 : index
    %85 = vector.load %arg5[%c0_77, %c0_78] : memref<80x32xf32, #tpu.memory_space<vmem>>, vector<80x32xf32>
    %86 = vector.extract_strided_slice %85 {offsets = [7, 0], sizes = [64, 32], strides = [1, 1]} : vector<80x32xf32> to vector<64x32xf32>
    %c3 = arith.constant 3 : index
    %c0_79 = arith.constant 0 : index
    %c0_80 = arith.constant 0 : index
    %c0_81 = arith.constant 0 : index
    %87 = vector.load %arg2[%c3, %c0_79, %c0_80, %c0_81] : memref<6x3x32x32xf32, #tpu.memory_space<vmem>>, vector<1x1x32x32xf32>
    %88 = vector.shape_cast %87 : vector<1x1x32x32xf32> to vector<32x32xf32>
    %cst_82 = arith.constant dense<0.000000e+00> : vector<64x32xf32>
    %89 = tpu.matmul %86, %88, %cst_82 {dimension_numbers = #tpu.dot_dimension_numbers<[1], [0], [0], [1], [0, 0, 1, 1], [], []>} : vector<64x32xf32>, vector<32x32xf32>, vector<64x32xf32> -> vector<64x32xf32>
    %90 = vector.extract_strided_slice %85 {offsets = [8, 0], sizes = [64, 32], strides = [1, 1]} : vector<80x32xf32> to vector<64x32xf32>
    %c3_83 = arith.constant 3 : index
    %c1_84 = arith.constant 1 : index
    %c0_85 = arith.constant 0 : index
    %c0_86 = arith.constant 0 : index
    %91 = vector.load %arg2[%c3_83, %c1_84, %c0_85, %c0_86] : memref<6x3x32x32xf32, #tpu.memory_space<vmem>>, vector<1x1x32x32xf32>
    %92 = vector.shape_cast %91 : vector<1x1x32x32xf32> to vector<32x32xf32>
    %cst_87 = arith.constant dense<0.000000e+00> : vector<64x32xf32>
    %93 = tpu.matmul %90, %92, %cst_87 {dimension_numbers = #tpu.dot_dimension_numbers<[1], [0], [0], [1], [0, 0, 1, 1], [], []>} : vector<64x32xf32>, vector<32x32xf32>, vector<64x32xf32> -> vector<64x32xf32>
    %94 = arith.addf %89, %93 : vector<64x32xf32>
    %95 = vector.extract_strided_slice %85 {offsets = [9, 0], sizes = [64, 32], strides = [1, 1]} : vector<80x32xf32> to vector<64x32xf32>
    %c3_88 = arith.constant 3 : index
    %c2_89 = arith.constant 2 : index
    %c0_90 = arith.constant 0 : index
    %c0_91 = arith.constant 0 : index
    %96 = vector.load %arg2[%c3_88, %c2_89, %c0_90, %c0_91] : memref<6x3x32x32xf32, #tpu.memory_space<vmem>>, vector<1x1x32x32xf32>
    %97 = vector.shape_cast %96 : vector<1x1x32x32xf32> to vector<32x32xf32>
    %cst_92 = arith.constant dense<0.000000e+00> : vector<64x32xf32>
    %98 = tpu.matmul %95, %97, %cst_92 {dimension_numbers = #tpu.dot_dimension_numbers<[1], [0], [0], [1], [0, 0, 1, 1], [], []>} : vector<64x32xf32>, vector<32x32xf32>, vector<64x32xf32> -> vector<64x32xf32>
    %99 = arith.addf %94, %98 : vector<64x32xf32>
    %c3_93 = arith.constant 3 : index
    %c0_94 = arith.constant 0 : index
    %c0_95 = arith.constant 0 : index
    %100 = vector.load %arg3[%c3_93, %c0_94, %c0_95] : memref<6x1x32xf32, #tpu.memory_space<vmem>>, vector<1x1x32xf32>
    %101 = vector.shape_cast %100 : vector<1x1x32xf32> to vector<1x32xf32>
    %102 = vector.broadcast %101 : vector<1x32xf32> to vector<64x32xf32>
    %103 = arith.addf %99, %102 : vector<64x32xf32>
    %cst_96 = arith.constant 0.000000e+00 : f32
    %104 = vector.broadcast %cst_96 : f32 to vector<64x32xf32>
    %105 = arith.cmpf ogt, %103, %104 : vector<64x32xf32>
    %cst_97 = arith.constant 1.000000e-01 : f32
    %106 = vector.broadcast %cst_97 : f32 to vector<64x32xf32>
    %107 = arith.mulf %106, %103 : vector<64x32xf32>
    %108 = arith.select %105, %103, %107 : vector<64x32xi1>, vector<64x32xf32>
    %c8_98 = arith.constant 8 : index
    %c0_99 = arith.constant 0 : index
    %109 = vector.load %arg5[%c8_98, %c0_99] : memref<80x32xf32, #tpu.memory_space<vmem>>, vector<64x32xf32>
    tpu.vector_store %arg5[%c8_98, %c0_99], %108 {strides = array<i32>} : memref<80x32xf32, #tpu.memory_space<vmem>>, vector<64x32xf32>,
    %c0_100 = arith.constant 0 : index
    %c0_101 = arith.constant 0 : index
    %110 = vector.load %arg5[%c0_100, %c0_101] : memref<80x32xf32, #tpu.memory_space<vmem>>, vector<80x32xf32>
    %111 = vector.extract_strided_slice %110 {offsets = [5, 0], sizes = [64, 32], strides = [1, 1]} : vector<80x32xf32> to vector<64x32xf32>
    %c4 = arith.constant 4 : index
    %c0_102 = arith.constant 0 : index
    %c0_103 = arith.constant 0 : index
    %c0_104 = arith.constant 0 : index
    %112 = vector.load %arg2[%c4, %c0_102, %c0_103, %c0_104] : memref<6x3x32x32xf32, #tpu.memory_space<vmem>>, vector<1x1x32x32xf32>
    %113 = vector.shape_cast %112 : vector<1x1x32x32xf32> to vector<32x32xf32>
    %cst_105 = arith.constant dense<0.000000e+00> : vector<64x32xf32>
    %114 = tpu.matmul %111, %113, %cst_105 {dimension_numbers = #tpu.dot_dimension_numbers<[1], [0], [0], [1], [0, 0, 1, 1], [], []>} : vector<64x32xf32>, vector<32x32xf32>, vector<64x32xf32> -> vector<64x32xf32>
    %115 = vector.extract_strided_slice %110 {offsets = [8, 0], sizes = [64, 32], strides = [1, 1]} : vector<80x32xf32> to vector<64x32xf32>
    %c4_106 = arith.constant 4 : index
    %c1_107 = arith.constant 1 : index
    %c0_108 = arith.constant 0 : index
    %c0_109 = arith.constant 0 : index
    %116 = vector.load %arg2[%c4_106, %c1_107, %c0_108, %c0_109] : memref<6x3x32x32xf32, #tpu.memory_space<vmem>>, vector<1x1x32x32xf32>
    %117 = vector.shape_cast %116 : vector<1x1x32x32xf32> to vector<32x32xf32>
    %cst_110 = arith.constant dense<0.000000e+00> : vector<64x32xf32>
    %118 = tpu.matmul %115, %117, %cst_110 {dimension_numbers = #tpu.dot_dimension_numbers<[1], [0], [0], [1], [0, 0, 1, 1], [], []>} : vector<64x32xf32>, vector<32x32xf32>, vector<64x32xf32> -> vector<64x32xf32>
    %119 = arith.addf %114, %118 : vector<64x32xf32>
    %120 = vector.extract_strided_slice %110 {offsets = [11, 0], sizes = [64, 32], strides = [1, 1]} : vector<80x32xf32> to vector<64x32xf32>
    %c4_111 = arith.constant 4 : index
    %c2_112 = arith.constant 2 : index
    %c0_113 = arith.constant 0 : index
    %c0_114 = arith.constant 0 : index
    %121 = vector.load %arg2[%c4_111, %c2_112, %c0_113, %c0_114] : memref<6x3x32x32xf32, #tpu.memory_space<vmem>>, vector<1x1x32x32xf32>
    %122 = vector.shape_cast %121 : vector<1x1x32x32xf32> to vector<32x32xf32>
    %cst_115 = arith.constant dense<0.000000e+00> : vector<64x32xf32>
    %123 = tpu.matmul %120, %122, %cst_115 {dimension_numbers = #tpu.dot_dimension_numbers<[1], [0], [0], [1], [0, 0, 1, 1], [], []>} : vector<64x32xf32>, vector<32x32xf32>, vector<64x32xf32> -> vector<64x32xf32>
    %124 = arith.addf %119, %123 : vector<64x32xf32>
    %c4_116 = arith.constant 4 : index
    %c0_117 = arith.constant 0 : index
    %c0_118 = arith.constant 0 : index
    %125 = vector.load %arg3[%c4_116, %c0_117, %c0_118] : memref<6x1x32xf32, #tpu.memory_space<vmem>>, vector<1x1x32xf32>
    %126 = vector.shape_cast %125 : vector<1x1x32xf32> to vector<1x32xf32>
    %127 = vector.broadcast %126 : vector<1x32xf32> to vector<64x32xf32>
    %128 = arith.addf %124, %127 : vector<64x32xf32>
    %cst_119 = arith.constant 0.000000e+00 : f32
    %129 = vector.broadcast %cst_119 : f32 to vector<64x32xf32>
    %130 = arith.cmpf ogt, %128, %129 : vector<64x32xf32>
    %cst_120 = arith.constant 1.000000e-01 : f32
    %131 = vector.broadcast %cst_120 : f32 to vector<64x32xf32>
    %132 = arith.mulf %131, %128 : vector<64x32xf32>
    %133 = arith.select %130, %128, %132 : vector<64x32xi1>, vector<64x32xf32>
    %c8_121 = arith.constant 8 : index
    %c0_122 = arith.constant 0 : index
    %134 = vector.load %arg5[%c8_121, %c0_122] : memref<80x32xf32, #tpu.memory_space<vmem>>, vector<64x32xf32>
    tpu.vector_store %arg5[%c8_121, %c0_122], %133 {strides = array<i32>} : memref<80x32xf32, #tpu.memory_space<vmem>>, vector<64x32xf32>,
    %c0_123 = arith.constant 0 : index
    %c0_124 = arith.constant 0 : index
    %135 = vector.load %arg5[%c0_123, %c0_124] : memref<80x32xf32, #tpu.memory_space<vmem>>, vector<80x32xf32>
    %136 = vector.extract_strided_slice %135 {offsets = [3, 0], sizes = [64, 32], strides = [1, 1]} : vector<80x32xf32> to vector<64x32xf32>
    %c5 = arith.constant 5 : index
    %c0_125 = arith.constant 0 : index
    %c0_126 = arith.constant 0 : index
    %c0_127 = arith.constant 0 : index
    %137 = vector.load %arg2[%c5, %c0_125, %c0_126, %c0_127] : memref<6x3x32x32xf32, #tpu.memory_space<vmem>>, vector<1x1x32x32xf32>
    %138 = vector.shape_cast %137 : vector<1x1x32x32xf32> to vector<32x32xf32>
    %cst_128 = arith.constant dense<0.000000e+00> : vector<64x32xf32>
    %139 = tpu.matmul %136, %138, %cst_128 {dimension_numbers = #tpu.dot_dimension_numbers<[1], [0], [0], [1], [0, 0, 1, 1], [], []>} : vector<64x32xf32>, vector<32x32xf32>, vector<64x32xf32> -> vector<64x32xf32>
    %140 = vector.extract_strided_slice %135 {offsets = [8, 0], sizes = [64, 32], strides = [1, 1]} : vector<80x32xf32> to vector<64x32xf32>
    %c5_129 = arith.constant 5 : index
    %c1_130 = arith.constant 1 : index
    %c0_131 = arith.constant 0 : index
    %c0_132 = arith.constant 0 : index
    %141 = vector.load %arg2[%c5_129, %c1_130, %c0_131, %c0_132] : memref<6x3x32x32xf32, #tpu.memory_space<vmem>>, vector<1x1x32x32xf32>
    %142 = vector.shape_cast %141 : vector<1x1x32x32xf32> to vector<32x32xf32>
    %cst_133 = arith.constant dense<0.000000e+00> : vector<64x32xf32>
    %143 = tpu.matmul %140, %142, %cst_133 {dimension_numbers = #tpu.dot_dimension_numbers<[1], [0], [0], [1], [0, 0, 1, 1], [], []>} : vector<64x32xf32>, vector<32x32xf32>, vector<64x32xf32> -> vector<64x32xf32>
    %144 = arith.addf %139, %143 : vector<64x32xf32>
    %145 = vector.extract_strided_slice %135 {offsets = [13, 0], sizes = [64, 32], strides = [1, 1]} : vector<80x32xf32> to vector<64x32xf32>
    %c5_134 = arith.constant 5 : index
    %c2_135 = arith.constant 2 : index
    %c0_136 = arith.constant 0 : index
    %c0_137 = arith.constant 0 : index
    %146 = vector.load %arg2[%c5_134, %c2_135, %c0_136, %c0_137] : memref<6x3x32x32xf32, #tpu.memory_space<vmem>>, vector<1x1x32x32xf32>
    %147 = vector.shape_cast %146 : vector<1x1x32x32xf32> to vector<32x32xf32>
    %cst_138 = arith.constant dense<0.000000e+00> : vector<64x32xf32>
    %148 = tpu.matmul %145, %147, %cst_138 {dimension_numbers = #tpu.dot_dimension_numbers<[1], [0], [0], [1], [0, 0, 1, 1], [], []>} : vector<64x32xf32>, vector<32x32xf32>, vector<64x32xf32> -> vector<64x32xf32>
    %149 = arith.addf %144, %148 : vector<64x32xf32>
    %c5_139 = arith.constant 5 : index
    %c0_140 = arith.constant 0 : index
    %c0_141 = arith.constant 0 : index
    %150 = vector.load %arg3[%c5_139, %c0_140, %c0_141] : memref<6x1x32xf32, #tpu.memory_space<vmem>>, vector<1x1x32xf32>
    %151 = vector.shape_cast %150 : vector<1x1x32xf32> to vector<1x32xf32>
    %152 = vector.broadcast %151 : vector<1x32xf32> to vector<64x32xf32>
    %153 = arith.addf %149, %152 : vector<64x32xf32>
    %154 = arith.addf %78, %153 : vector<64x32xf32>
    %c0_142 = arith.constant 0 : index
    %c0_143 = arith.constant 0 : index
    %c0_144 = arith.constant 0 : index
    %155 = vector.load %arg4[%c0_142, %c0_143, %c0_144] : memref<1x64x32xf32, #tpu.memory_space<vmem>>, vector<1x64x32xf32>
    %156 = vector.shape_cast %155 : vector<1x64x32xf32> to vector<64x32xf32>
    %157 = vector.shape_cast %154 : vector<64x32xf32> to vector<1x64x32xf32>
    tpu.vector_store %arg4[%c0_142, %c0_143, %c0_144], %157 {strides = array<i32>} : memref<1x64x32xf32, #tpu.memory_space<vmem>>, vector<1x64x32xf32>,
    return
  }
  func.func @transform_0(%arg0: i32) -> (i32, i32, i32) {
    %c0_i32 = arith.constant 0 : i32
    %c0_i32_0 = arith.constant 0 : i32
    %c0_i32_1 = arith.constant 0 : i32
    return %arg0, %c0_i32, %c0_i32_0 : i32, i32, i32
  }
  func.func @transform_1(%arg0: i32) -> (i32, i32, i32, i32) {
    %c0_i32 = arith.constant 0 : i32
    %c0_i32_0 = arith.constant 0 : i32
    %c0_i32_1 = arith.constant 0 : i32
    %c0_i32_2 = arith.constant 0 : i32
    %c0_i32_3 = arith.constant 0 : i32
    return %c0_i32, %c0_i32_0, %c0_i32_1, %c0_i32_2 : i32, i32, i32, i32
  }
  func.func @transform_2(%arg0: i32) -> (i32, i32, i32) {
    %c0_i32 = arith.constant 0 : i32
    %c0_i32_0 = arith.constant 0 : i32
    %c0_i32_1 = arith.constant 0 : i32
    %c0_i32_2 = arith.constant 0 : i32
    return %c0_i32, %c0_i32_0, %c0_i32_1 : i32, i32, i32
  }
  func.func @transform_3(%arg0: i32) -> (i32, i32, i32) {
    %c0_i32 = arith.constant 0 : i32
    %c0_i32_0 = arith.constant 0 : i32
    %c0_i32_1 = arith.constant 0 : i32
    return %arg0, %c0_i32, %c0_i32_0 : i32, i32, i32
  }
}

</mosaic_0001>

<llo_original>
// kernel: tpu_custom_call.1
$region0: #{tpu_custom_call.1}
  #allocation0 [shape = 'u32[]', space=smem, size = 0x4, offset = 0x4, fixed_abs, tag = 'smem constant byte address 0x4 - core index']
  #allocation1 [shape = 'u32[144,128]{1,0:T(1,128)}', space=vmem, size = 0x12000, scoped, tag = 'internal scratch']
  #allocation2 [shape = 'f32[80,32]{1,0:T(8,128)}', space=vmem, size = 0xa000, scoped, tag = 'scratch operand']
  %s0 = inlined_call_operand.vmem [shape: f32[2,64,32], index: 0, kind: input, shape index: {}]
  %s1 = inlined_call_operand.hbm [shape: f32[6,3,32,32], index: 1, kind: input, shape index: {}]
  %s2 = inlined_call_operand.vmem [shape: f32[6,1,32], index: 2, kind: input, shape index: {}]
  %s3 = inlined_call_operand.vmem [shape: f32[2,64,32], index: 3, kind: output, shape index: {}]
  %s4 = sld [smem:[#allocation0]]
  $region49: #{tpu_custom_call.1} parent=0
    _
  %s6 = ssub.s32 1, %s4
  %s7 = scalar_select 0, %s6, %s4
  $region1: #{tpu_custom_call.1} parent=0
    #allocation3 [shape = 'u8[294912]{0}', space=vmem, size = 0x48000, scoped, tag = 'input window, operand 1, single buffered']
    #allocation4 [shape = 's32[2]{0}', space=sflag, size = 0x8, scoped, tag = 'scoped memory for tpu_custom_call.1']
    %8 = vsyncpa [#allocation4], 0
    loop: start=0, step=1, limit=4
    $region2: #{tpu_custom_call.1} parent=1 // loop_pre_header
      _
    $region3: #{tpu_custom_call.1} parent=1 // loop_header
      %s10 = sphi 0, %s14
      %p11 = scmp.ge.s32.totalorder %s10, 4
      %s20 = sphi 0, %s22
      %s23 = sphi 0, %s20
      %s24 = sphi 0, %s23
      %s40 = sphi 0, %s24
      %s44 = sphi 0, %s44
      %s46 = sphi 0, %s44
      %s47 = sphi 0, %s46
      %s61 = sphi 0, %s47
      %s65 = sphi 0, %s65
      %s67 = sphi 0, %s65
      %s68 = sphi 0, %s67
      %s82 = sphi 0, %s68
      %s88 = sphi 0, %s90
      %s91 = sphi 0, %s88
      %s92 = sphi 0, %s91
      %s108 = sphi 0, %s92
    $region4: #{tpu_custom_call.1} parent=1 // loop_header_branch
      %13 = sbr.rel (%p11) target = $region8
    $region5: #{tpu_custom_call.1} parent=1 // loop_body
      %s15 = ssub.s32 %s10, 1
      %s16 = ssub.s32 %s10, 2
      %s17 = sadd.s32 %s10, 1
      %s18 = ssub.s32 %s10, %s17
      %p19 = scmp.eq.s32.totalorder %s18, 0
      %s21 = sadd.s32 %s20, 1
      %s22 = scalar_select %p19, %s20, %s21
      %p25 = pneg %p19
      %p26 = scmp.eq.s32.totalorder %s10, 1
      %p27 = por %p25, %p26
      %p28 = scmp.ne.s32.totalorder %s20, %s23
      %p29 = scmp.eq.s32.totalorder %s10, 0
      %p30 = por %p28, %p29
      %p31 = scmp.ne.s32.totalorder %s20, %s23
      %p32 = scmp.eq.s32.totalorder %s15, 1
      %p33 = por %p31, %p32
      %p34 = scmp.ne.s32.totalorder %s23, %s24
      %p35 = scmp.eq.s32.totalorder %s15, 0
      %p36 = por %p34, %p35
      %p37 = scmp.ne.s32.totalorder %s23, %s24
      %p38 = scmp.eq.s32.totalorder %s16, 1
      %p39 = por %p37, %p38
      %p41 = scmp.ne.s32.totalorder %s24, %s40
      %p42 = scmp.eq.s32.totalorder %s16, 0
      %p43 = por %p41, %p42
      %s45 = sadd.s32 %s44, 1
      %p48 = scmp.eq.s32.totalorder %s10, 1
      %p49 = scmp.ne.s32.totalorder %s44, %s46
      %p50 = scmp.eq.s32.totalorder %s10, 0
      %p51 = por %p49, %p50
      %p52 = scmp.ne.s32.totalorder %s44, %s46
      %p53 = scmp.eq.s32.totalorder %s15, 1
      %p54 = por %p52, %p53
      %p55 = scmp.ne.s32.totalorder %s46, %s47
      %p56 = scmp.eq.s32.totalorder %s15, 0
      %p57 = por %p55, %p56
      %p58 = scmp.ne.s32.totalorder %s46, %s47
      %p59 = scmp.eq.s32.totalorder %s16, 1
      %p60 = por %p58, %p59
      %p62 = scmp.ne.s32.totalorder %s47, %s61
      %p63 = scmp.eq.s32.totalorder %s16, 0
      %p64 = por %p62, %p63
      %s66 = sadd.s32 %s65, 1
      %p69 = scmp.eq.s32.totalorder %s10, 1
      %p70 = scmp.ne.s32.totalorder %s65, %s67
      %p71 = scmp.eq.s32.totalorder %s10, 0
      %p72 = por %p70, %p71
      %p73 = scmp.ne.s32.totalorder %s65, %s67
      %p74 = scmp.eq.s32.totalorder %s15, 1
      %p75 = por %p73, %p74
      %p76 = scmp.ne.s32.totalorder %s67, %s68
      %p77 = scmp.eq.s32.totalorder %s15, 0
      %p78 = por %p76, %p77
      %p79 = scmp.ne.s32.totalorder %s67, %s68
      %p80 = scmp.eq.s32.totalorder %s16, 1
      %p81 = por %p79, %p80
      %p83 = scmp.ne.s32.totalorder %s68, %s82
      %p84 = scmp.eq.s32.totalorder %s16, 0
      %p85 = por %p83, %p84
      %s86 = ssub.s32 %s10, %s17
      %p87 = scmp.eq.s32.totalorder %s86, 0
      %s89 = sadd.s32 %s88, 1
      %s90 = scalar_select %p87, %s88, %s89
      %p93 = pneg %p87
      %p94 = scmp.eq.s32.totalorder %s10, 1
      %p95 = por %p93, %p94
      %p96 = scmp.ne.s32.totalorder %s88, %s91
      %p97 = scmp.eq.s32.totalorder %s10, 0
      %p98 = por %p96, %p97
      %p99 = scmp.ne.s32.totalorder %s88, %s91
      %p100 = scmp.eq.s32.totalorder %s15, 1
      %p101 = por %p99, %p100
      %p102 = scmp.ne.s32.totalorder %s91, %s92
      %p103 = scmp.eq.s32.totalorder %s15, 0
      %p104 = por %p102, %p103
      %p105 = scmp.ne.s32.totalorder %s91, %s92
      %p106 = scmp.eq.s32.totalorder %s16, 1
      %p107 = por %p105, %p106
      %p109 = scmp.ne.s32.totalorder %s92, %s108
      %p110 = scmp.eq.s32.totalorder %s16, 0
      %p111 = por %p109, %p110
      %p112 = scmp.le.s32.totalorder 1, %s10
      %p113 = scmp.lt.s32.totalorder %s10, 3
      %p114 = pnand %p112, %p113
      %p115 = pneg %p114
      // Predicated region
      $region9: #{tpu_custom_call.1} parent=5 // pred_check
        _
      $region10: #{tpu_custom_call.1} parent=5 // pred_check_branch
        %117 = sbr.rel (%p114) target = $region12
      $region11: #{tpu_custom_call.1} parent=5 // pred_region
        %s118 = ssub.s32 %s10, 1
        // Predicated region
        $region13: #{tpu_custom_call.1} parent=11 // pred_check
          %p119 = pneg %p57
        $region14: #{tpu_custom_call.1} parent=11 // pred_check_branch
          %121 = sbr.rel (%p119) target = $region16
        $region15: #{tpu_custom_call.1} parent=11 // pred_region
          %s123 = ssub.s32 9216, 9216
          %124 = vsyncadd [#allocation4], %s123
          %s125 = sshll.u32 [#allocation3], 4
          %s126 = int_to_ptr.vmem [resolvable:$true] %s125
          %131 = dma.hbm_to_vmem [thread:$0]  %s1, 9216, %s126, [#allocation4], 128, 128, 8
        $region16: #{tpu_custom_call.1} parent=11 // pred_fallthru
          _
        // Predicated region
        $region17: #{tpu_custom_call.1} parent=11 // pred_check
          %p132 = pneg %p78
        $region18: #{tpu_custom_call.1} parent=11 // pred_check_branch
          %134 = sbr.rel (%p132) target = $region20
        $region19: #{tpu_custom_call.1} parent=11 // pred_region
          _
        $region20: #{tpu_custom_call.1} parent=11 // pred_fallthru
          _
      $region12: #{tpu_custom_call.1} parent=5 // pred_fallthru
        _
      %p135 = scmp.lt.s32.totalorder %s10, 2
      // Predicated region
      $region21: #{tpu_custom_call.1} parent=5 // pred_check
        %p136 = pneg %p135
      $region22: #{tpu_custom_call.1} parent=5 // pred_check_branch
        %138 = sbr.rel (%p136) target = $region24
      $region23: #{tpu_custom_call.1} parent=5 // pred_region
        // Predicated region
        $region25: #{tpu_custom_call.1} parent=23 // pred_check
          %p139 = pneg %p30
        $region26: #{tpu_custom_call.1} parent=23 // pred_check_branch
          %141 = sbr.rel (%p139) target = $region28
        $region27: #{tpu_custom_call.1} parent=23 // pred_region
          %p142 = scmp.lt.s32.totalorder %s10, 1
          %s143 = scalar_select %p142, %s10, 1
          %s144 = smul.addr %s143, 8
          %s145 = smul.addr %s144, 8
          %s146 = scalar_lea.vmem %s0, %s145
        $region28: #{tpu_custom_call.1} parent=23 // pred_fallthru
          _
      $region24: #{tpu_custom_call.1} parent=5 // pred_fallthru
        _
      %p147 = scmp.le.s32.totalorder 1, %s10
      %p148 = scmp.lt.s32.totalorder %s10, 3
      %p149 = pnand %p147, %p148
      %p150 = pneg %p149
      // Predicated region
      $region29: #{tpu_custom_call.1} parent=5 // pred_check
        _
      $region30: #{tpu_custom_call.1} parent=5 // pred_check_branch
        %152 = sbr.rel (%p149) target = $region32
      $region31: #{tpu_custom_call.1} parent=5 // pred_region
        %s153 = ssub.s32 %s10, 1
        // Predicated region
        $region33: #{tpu_custom_call.1} parent=31 // pred_check
          %p154 = pneg %p57
        $region34: #{tpu_custom_call.1} parent=31 // pred_check_branch
          %156 = sbr.rel (%p154) target = $region36
        $region35: #{tpu_custom_call.1} parent=31 // pred_region
          %157 = dma.done [#allocation4], 9216
        $region36: #{tpu_custom_call.1} parent=31 // pred_fallthru
          _
        %p158 = scmp.lt.s32.totalorder %s15, 1
        %s159 = scalar_select %p158, %s15, 1
        %s160 = smul.addr %s159, 8
        %s161 = smul.addr %s160, 8
        %s162 = scalar_lea.vmem %s0, %s161
        %p163 = pneg %p36
        %p164 = pneg %p33
        %p165 = pneg %p57
        %p166 = pneg %p54
        %p167 = pneg %p78
        %p168 = pneg %p75
        %p169 = pneg %p104
        %p170 = pneg %p101
        %p171 = scmp.lt.s32.totalorder %s15, 1
        %s172 = scalar_select %p171, %s15, 1
        %s173 = smul.addr %s172, 8
        %s174 = smul.addr %s173, 8
        %s175 = scalar_lea.vmem %s3, %s174
        %p176 = scmp.lt.s32.totalorder %s15, 1
        %s177 = scalar_select %p176, %s15, 1
        %s178 = smul.addr %s177, 8
        %s179 = smul.addr %s178, 8
        %s180 = scalar_lea.vmem %s0, %s179
        %p181 = scmp.lt.s32.totalorder %s15, 1
        %s182 = scalar_select %p181, %s15, 1
        %s183 = smul.addr %s182, 8
        %s184 = smul.addr %s183, 8
        %s185 = scalar_lea.vmem %s3, %s184
        %v186 = vld [vmem:[%s180] sm:$0xff]
        %v187 = vld [vmem:[%s180 + $0x8] sm:$0xff]
        %v188 = vld [vmem:[%s180 + $0x10] sm:$0xff]
        %v189 = vld [vmem:[%s180 + $0x18] sm:$0xff]
        %v190 = vld [vmem:[%s180 + $0x20] sm:$0xff]
        %v191 = vld [vmem:[%s180 + $0x28] sm:$0xff]
        %v192 = vld [vmem:[%s180 + $0x30] sm:$0xff]
        %v193 = vld [vmem:[%s180 + $0x38] sm:$0xff]
        %vm194 = vcmask 261120
        %195 = vst.msk [vmem:[#allocation2] sm:$0xff] %vm194, 0.0
        %196 = vst.msk [vmem:[#allocation2 + $0x8] sm:$0xff] %vm194, 0.0
        %197 = vst.msk [vmem:[#allocation2 + $0x10] sm:$0xff] %vm194, 0.0
        %198 = vst.msk [vmem:[#allocation2 + $0x18] sm:$0xff] %vm194, 0.0
        %199 = vst.msk [vmem:[#allocation2 + $0x20] sm:$0xff] %vm194, 0.0
        %200 = vst.msk [vmem:[#allocation2 + $0x28] sm:$0xff] %vm194, 0.0
        %201 = vst.msk [vmem:[#allocation2 + $0x30] sm:$0xff] %vm194, 0.0
        %202 = vst.msk [vmem:[#allocation2 + $0x38] sm:$0xff] %vm194, 0.0
        %203 = vst.msk [vmem:[#allocation2 + $0x40] sm:$0xff] %vm194, 0.0
        %204 = vst.msk [vmem:[#allocation2 + $0x48] sm:$0xff] %vm194, 0.0
        %vm205 = vcmp.gt.f32.partialorder %v186, 0.0
        %vm206 = vcmp.gt.f32.partialorder %v187, 0.0
        %vm207 = vcmp.gt.f32.partialorder %v188, 0.0
        %vm208 = vcmp.gt.f32.partialorder %v189, 0.0
        %vm209 = vcmp.gt.f32.partialorder %v190, 0.0
        %vm210 = vcmp.gt.f32.partialorder %v191, 0.0
        %vm211 = vcmp.gt.f32.partialorder %v192, 0.0
        %vm212 = vcmp.gt.f32.partialorder %v193, 0.0
        %v213 = vmul.f32 %v186, 0.1
        %v214 = vmul.f32 %v187, 0.1
        %v215 = vmul.f32 %v188, 0.1
        %v216 = vmul.f32 %v189, 0.1
        %v217 = vmul.f32 %v190, 0.1
        %v218 = vmul.f32 %v191, 0.1
        %v219 = vmul.f32 %v192, 0.1
        %v220 = vmul.f32 %v193, 0.1
        %v221 = vsel %vm205, %v186, %v213
        %v222 = vsel %vm206, %v187, %v214
        %v223 = vsel %vm207, %v188, %v215
        %v224 = vsel %vm208, %v189, %v216
        %v225 = vsel %vm209, %v190, %v217
        %v226 = vsel %vm210, %v191, %v218
        %v227 = vsel %vm211, %v192, %v219
        %v228 = vsel %vm212, %v193, %v220
        %229 = vst.msk [vmem:[#allocation2 + $0x8] sm:$0xff] %vm194, %v221
        %230 = vst.msk [vmem:[#allocation2 + $0x10] sm:$0xff] %vm194, %v222
        %231 = vst.msk [vmem:[#allocation2 + $0x18] sm:$0xff] %vm194, %v223
        %232 = vst.msk [vmem:[#allocation2 + $0x20] sm:$0xff] %vm194, %v224
        %233 = vst.msk [vmem:[#allocation2 + $0x28] sm:$0xff] %vm194, %v225
        %234 = vst.msk [vmem:[#allocation2 + $0x30] sm:$0xff] %vm194, %v226
        %235 = vst.msk [vmem:[#allocation2 + $0x38] sm:$0xff] %vm194, %v227
        %236 = vst.msk [vmem:[#allocation2 + $0x40] sm:$0xff] %vm194, %v228
        %v237 = vld [vmem:[#allocation2] sm:$0xff]
        %v238 = vld [vmem:[#allocation2 + $0x8] sm:$0xff]
        %v239 = vld [vmem:[#allocation2 + $0x10] sm:$0xff]
        %v240 = vld [vmem:[#allocation2 + $0x18] sm:$0xff]
        %v241 = vld [vmem:[#allocation2 + $0x20] sm:$0xff]
        %v242 = vld [vmem:[#allocation2 + $0x28] sm:$0xff]
        %v243 = vld [vmem:[#allocation2 + $0x30] sm:$0xff]
        %v244 = vld [vmem:[#allocation2 + $0x38] sm:$0xff]
        %v245 = vld [vmem:[#allocation2 + $0x40] sm:$0xff]
        %v246 = vld [vmem:[#allocation2 + $0x48] sm:$0xff]
        %v247 = vld [vmem:[#allocation3] sm:$0xff]
        %v248 = vld [vmem:[#allocation3 + $0x8] sm:$0xff]
        %v249 = vld [vmem:[#allocation3 + $0x10] sm:$0xff]
        %v250 = vld [vmem:[#allocation3 + $0x18] sm:$0xff]
        %s251 = scalar_lea.vmem [#allocation3], 32
        %v252 = vld [vmem:[%s251] sm:$0xff]
        %v253 = vld [vmem:[%s251 + $0x8] sm:$0xff]
        %v254 = vld [vmem:[%s251 + $0x10] sm:$0xff]
        %v255 = vld [vmem:[%s251 + $0x18] sm:$0xff]
        %v257 = vsel %vm194, %v238, 0
        %v260 = vsel %vm194, %v239, 0
        %v263 = vsel %vm194, %v240, 0
        %v266 = vsel %vm194, %v241, 0
        %v269 = vsel %vm194, %v242, 0
        %v272 = vsel %vm194, %v243, 0
        %v275 = vsel %vm194, %v244, 0
        %v278 = vsel %vm194, %v245, 0
        %280 = vmatprep.subr.mxu0 0.0
        %281 = vmatpush1.msra.mxu0 0.0
        %282 = vmatprep.subr.mxu0 0.0
        %283 = vmatpush1.msra.mxu0 0.0
        %284 = vmatprep.subr.mxu0 0.0
        %285 = vmatpush1.msra.mxu0 0.0
        %286 = vmatprep.subr.mxu0 0.0
        %287 = vmatpush1.msra.mxu0 0.0
        %288 = vmatprep.subr.mxu0 0.0
        %289 = vmatpush1.msra.mxu0 0.0
        %290 = vmatprep.subr.mxu0 0.0
        %291 = vmatpush1.msra.mxu0 0.0
        %292 = vmatprep.subr.mxu0 0.0
        %293 = vmatpush1.msra.mxu0 0.0
        %294 = vmatprep.subr.mxu0 0.0
        %295 = vmatpush1.msra.mxu0 0.0
        %296 = vmatprep.subr.mxu0 0.0
        %297 = vmatpush1.msra.mxu0 0.0
        %298 = vmatprep.subr.mxu0 0.0
        %299 = vmatpush1.msra.mxu0 0.0
        %300 = vmatprep.subr.mxu0 0.0
        %301 = vmatpush1.msra.mxu0 0.0
        %302 = vmatprep.subr.mxu0 0.0
        %303 = vmatpush1.msra.mxu0 0.0
        %304 = vmatprep.subr.mxu0 0.0
        %305 = vmatpush1.msra.mxu0 %v255
        %306 = vmatprep.subr.mxu0 0.0
        %307 = vmatpush1.msra.mxu0 %v254
        %308 = vmatprep.subr.mxu0 0.0
        %309 = vmatpush1.msra.mxu0 %v253
        %310 = vmatprep.subr.mxu0 0.0
        %311 = vmatpush1.msra.mxu0 %v252
        %312 = vmatprep.subr.mxu0 0.0
        %313 = vmatpush2.msra.mxu0 0.0
        %314 = vmatprep.subr.mxu0 0.0
        %315 = vmatpush2.msra.mxu0 0.0
        %316 = vmatprep.subr.mxu0 0.0
        %317 = vmatpush2.msra.mxu0 0.0
        %318 = vmatprep.subr.mxu0 0.0
        %319 = vmatpush2.msra.mxu0 0.0
        %320 = vmatprep.subr.mxu0 0.0
        %321 = vmatpush2.msra.mxu0 0.0
        %322 = vmatprep.subr.mxu0 0.0
        %323 = vmatpush2.msra.mxu0 0.0
        %324 = vmatprep.subr.mxu0 0.0
        %325 = vmatpush2.msra.mxu0 0.0
        %326 = vmatprep.subr.mxu0 0.0
        %327 = vmatpush2.msra.mxu0 0.0
        %328 = vmatprep.subr.mxu0 0.0
        %329 = vmatpush2.msra.mxu0 0.0
        %330 = vmatprep.subr.mxu0 0.0
        %331 = vmatpush2.msra.mxu0 0.0
        %332 = vmatprep.subr.mxu0 0.0
        %333 = vmatpush2.msra.mxu0 0.0
        %334 = vmatprep.subr.mxu0 0.0
        %335 = vmatpush2.msra.mxu0 0.0
        %336 = vmatprep.subr.mxu0 0.0
        %337 = vmatpush2.msra.mxu0 0.0
        %338 = vmatprep.subr.mxu0 0.0
        %339 = vmatpush2.msra.mxu0 0.0
        %340 = vmatprep.subr.mxu0 0.0
        %341 = vmatpush2.msra.mxu0 0.0
        %342 = vmatprep.subr.mxu0 0.0
        %343 = vmatpush2.msra.mxu0 0.0
        %344 = vmatprep.mubr.f32.mxu0 0.0
        %345 = vmatmul.mubr.f32.gmra.mxu0 %v257
        %v346 = vpop.f32.mrf.mxu0
        %v347 = vadd.f32 0.0, %v346
        %v348 = vpop.f32.mrf.mxu0
        %349 = vmatprep.mubr.f32.mxu0 0.0
        %350 = vmatmul.mubr.f32.gmra.mxu0 %v260
        %v351 = vpop.f32.mrf.mxu0
        %v352 = vadd.f32 0.0, %v351
        %v353 = vpop.f32.mrf.mxu0
        %354 = vmatprep.mubr.f32.mxu0 0.0
        %355 = vmatmul.mubr.f32.gmra.mxu0 %v263
        %v356 = vpop.f32.mrf.mxu0
        %v357 = vadd.f32 0.0, %v356
        %v358 = vpop.f32.mrf.mxu0
        %359 = vmatprep.mubr.f32.mxu0 0.0
        %360 = vmatmul.mubr.f32.gmra.mxu0 %v266
        %v361 = vpop.f32.mrf.mxu0
        %v362 = vadd.f32 0.0, %v361
        %v363 = vpop.f32.mrf.mxu0
        %364 = vmatprep.mubr.f32.mxu0 0.0
        %365 = vmatmul.mubr.f32.gmra.mxu0 %v269
        %v366 = vpop.f32.mrf.mxu0
        %v367 = vadd.f32 0.0, %v366
        %v368 = vpop.f32.mrf.mxu0
        %369 = vmatprep.mubr.f32.mxu0 0.0
        %370 = vmatmul.mubr.f32.gmra.mxu0 %v272
        %v371 = vpop.f32.mrf.mxu0
        %v372 = vadd.f32 0.0, %v371
        %v373 = vpop.f32.mrf.mxu0
        %374 = vmatprep.mubr.f32.mxu0 0.0
        %375 = vmatmul.mubr.f32.gmra.mxu0 %v275
        %v376 = vpop.f32.mrf.mxu0
        %v377 = vadd.f32 0.0, %v376
        %v378 = vpop.f32.mrf.mxu0
        %379 = vmatprep.mubr.f32.mxu0 0.0
        %380 = vmatmul.mubr.f32.gmra.mxu0 %v278
        %v381 = vpop.f32.mrf.mxu0
        %v382 = vadd.f32 0.0, %v381
        %v383 = vpop.f32.mrf.mxu0
        %384 = vdwg.mxu0
        %vm386 = vcmask 1040384
        %v387 = vrot.slane %v237, 7
        %v388 = vrot.slane %v238, 7
        %v389 = vsel %vm386, %v387, %v388
        %v390 = vrot.slane %v239, 7
        %v391 = vsel %vm386, %v388, %v390
        %v392 = vrot.slane %v240, 7
        %v393 = vsel %vm386, %v390, %v392
        %v394 = vrot.slane %v241, 7
        %v395 = vsel %vm386, %v392, %v394
        %v396 = vrot.slane %v242, 7
        %v397 = vsel %vm386, %v394, %v396
        %v398 = vrot.slane %v243, 7
        %v399 = vsel %vm386, %v396, %v398
        %v400 = vrot.slane %v244, 7
        %v401 = vsel %vm386, %v398, %v400
        %v402 = vrot.slane %v245, 7
        %v403 = vsel %vm386, %v400, %v402
        %v404 = vsel %vm194, %v389, 0
        %v406 = vsel %vm194, %v391, 0
        %v408 = vsel %vm194, %v393, 0
        %v410 = vsel %vm194, %v395, 0
        %v412 = vsel %vm194, %v397, 0
        %v414 = vsel %vm194, %v399, 0
        %v416 = vsel %vm194, %v401, 0
        %v418 = vsel %vm194, %v403, 0
        %420 = vmatprep.subr.mxu0 0.0
        %421 = vmatpush1.msra.mxu0 0.0
        %422 = vmatprep.subr.mxu0 0.0
        %423 = vmatpush1.msra.mxu0 0.0
        %424 = vmatprep.subr.mxu0 0.0
        %425 = vmatpush1.msra.mxu0 0.0
        %426 = vmatprep.subr.mxu0 0.0
        %427 = vmatpush1.msra.mxu0 0.0
        %428 = vmatprep.subr.mxu0 0.0
        %429 = vmatpush1.msra.mxu0 0.0
        %430 = vmatprep.subr.mxu0 0.0
        %431 = vmatpush1.msra.mxu0 0.0
        %432 = vmatprep.subr.mxu0 0.0
        %433 = vmatpush1.msra.mxu0 0.0
        %434 = vmatprep.subr.mxu0 0.0
        %435 = vmatpush1.msra.mxu0 0.0
        %436 = vmatprep.subr.mxu0 0.0
        %437 = vmatpush1.msra.mxu0 0.0
        %438 = vmatprep.subr.mxu0 0.0
        %439 = vmatpush1.msra.mxu0 0.0
        %440 = vmatprep.subr.mxu0 0.0
        %441 = vmatpush1.msra.mxu0 0.0
        %442 = vmatprep.subr.mxu0 0.0
        %443 = vmatpush1.msra.mxu0 0.0
        %444 = vmatprep.subr.mxu0 0.0
        %445 = vmatpush1.msra.mxu0 %v250
        %446 = vmatprep.subr.mxu0 0.0
        %447 = vmatpush1.msra.mxu0 %v249
        %448 = vmatprep.subr.mxu0 0.0
        %449 = vmatpush1.msra.mxu0 %v248
        %450 = vmatprep.subr.mxu0 0.0
        %451 = vmatpush1.msra.mxu0 %v247
        %452 = vmatprep.subr.mxu0 0.0
        %453 = vmatpush2.msra.mxu0 0.0
        %454 = vmatprep.subr.mxu0 0.0
        %455 = vmatpush2.msra.mxu0 0.0
        %456 = vmatprep.subr.mxu0 0.0
        %457 = vmatpush2.msra.mxu0 0.0
        %458 = vmatprep.subr.mxu0 0.0
        %459 = vmatpush2.msra.mxu0 0.0
        %460 = vmatprep.subr.mxu0 0.0
        %461 = vmatpush2.msra.mxu0 0.0
        %462 = vmatprep.subr.mxu0 0.0
        %463 = vmatpush2.msra.mxu0 0.0
        %464 = vmatprep.subr.mxu0 0.0
        %465 = vmatpush2.msra.mxu0 0.0
        %466 = vmatprep.subr.mxu0 0.0
        %467 = vmatpush2.msra.mxu0 0.0
        %468 = vmatprep.subr.mxu0 0.0
        %469 = vmatpush2.msra.mxu0 0.0
        %470 = vmatprep.subr.mxu0 0.0
        %471 = vmatpush2.msra.mxu0 0.0
        %472 = vmatprep.subr.mxu0 0.0
        %473 = vmatpush2.msra.mxu0 0.0
        %474 = vmatprep.subr.mxu0 0.0
        %475 = vmatpush2.msra.mxu0 0.0
        %476 = vmatprep.subr.mxu0 0.0
        %477 = vmatpush2.msra.mxu0 0.0
        %478 = vmatprep.subr.mxu0 0.0
        %479 = vmatpush2.msra.mxu0 0.0
        %480 = vmatprep.subr.mxu0 0.0
        %481 = vmatpush2.msra.mxu0 0.0
        %482 = vmatprep.subr.mxu0 0.0
        %483 = vmatpush2.msra.mxu0 0.0
        %484 = vmatprep.mubr.f32.mxu0 0.0
        %485 = vmatmul.mubr.f32.gmra.mxu0 %v404
        %v486 = vpop.f32.mrf.mxu0
        %v487 = vadd.f32 %v347, %v486
        %v488 = vpop.f32.mrf.mxu0
        %489 = vmatprep.mubr.f32.mxu0 0.0
        %490 = vmatmul.mubr.f32.gmra.mxu0 %v406
        %v491 = vpop.f32.mrf.mxu0
        %v492 = vadd.f32 %v352, %v491
        %v493 = vpop.f32.mrf.mxu0
        %494 = vmatprep.mubr.f32.mxu0 0.0
        %495 = vmatmul.mubr.f32.gmra.mxu0 %v408
        %v496 = vpop.f32.mrf.mxu0
        %v497 = vadd.f32 %v357, %v496
        %v498 = vpop.f32.mrf.mxu0
        %499 = vmatprep.mubr.f32.mxu0 0.0
        %500 = vmatmul.mubr.f32.gmra.mxu0 %v410
        %v501 = vpop.f32.mrf.mxu0
        %v502 = vadd.f32 %v362, %v501
        %v503 = vpop.f32.mrf.mxu0
        %504 = vmatprep.mubr.f32.mxu0 0.0
        %505 = vmatmul.mubr.f32.gmra.mxu0 %v412
        %v506 = vpop.f32.mrf.mxu0
        %v507 = vadd.f32 %v367, %v506
        %v508 = vpop.f32.mrf.mxu0
        %509 = vmatprep.mubr.f32.mxu0 0.0
        %510 = vmatmul.mubr.f32.gmra.mxu0 %v414
        %v511 = vpop.f32.mrf.mxu0
        %v512 = vadd.f32 %v372, %v511
        %v513 = vpop.f32.mrf.mxu0
        %514 = vmatprep.mubr.f32.mxu0 0.0
        %515 = vmatmul.mubr.f32.gmra.mxu0 %v416
        %v516 = vpop.f32.mrf.mxu0
        %v517 = vadd.f32 %v377, %v516
        %v518 = vpop.f32.mrf.mxu0
        %519 = vmatprep.mubr.f32.mxu0 0.0
        %520 = vmatmul.mubr.f32.gmra.mxu0 %v418
        %v521 = vpop.f32.mrf.mxu0
        %v522 = vadd.f32 %v382, %v521
        %v523 = vpop.f32.mrf.mxu0
        %524 = vdwg.mxu0
        %s525 = scalar_lea.vmem [#allocation3], 64
        %v526 = vld [vmem:[%s525] sm:$0xff]
        %v527 = vld [vmem:[%s525 + $0x8] sm:$0xff]
        %v528 = vld [vmem:[%s525 + $0x10] sm:$0xff]
        %v529 = vld [vmem:[%s525 + $0x18] sm:$0xff]
        %vm531 = vcmask 1046528
        %v532 = vrot.slane %v238, 1
        %v533 = vrot.slane %v239, 1
        %v534 = vsel %vm531, %v532, %v533
        %v535 = vrot.slane %v240, 1
        %v536 = vsel %vm531, %v533, %v535
        %v537 = vrot.slane %v241, 1
        %v538 = vsel %vm531, %v535, %v537
        %v539 = vrot.slane %v242, 1
        %v540 = vsel %vm531, %v537, %v539
        %v541 = vrot.slane %v243, 1
        %v542 = vsel %vm531, %v539, %v541
        %v543 = vrot.slane %v244, 1
        %v544 = vsel %vm531, %v541, %v543
        %v545 = vrot.slane %v245, 1
        %v546 = vsel %vm531, %v543, %v545
        %v547 = vrot.slane %v246, 1
        %v548 = vsel %vm531, %v545, %v547
        %v549 = vsel %vm194, %v534, 0
        %v551 = vsel %vm194, %v536, 0
        %v553 = vsel %vm194, %v538, 0
        %v555 = vsel %vm194, %v540, 0
        %v557 = vsel %vm194, %v542, 0
        %v559 = vsel %vm194, %v544, 0
        %v561 = vsel %vm194, %v546, 0
        %v563 = vsel %vm194, %v548, 0
        %565 = vmatprep.subr.mxu0 0.0
        %566 = vmatpush1.msra.mxu0 0.0
        %567 = vmatprep.subr.mxu0 0.0
        %568 = vmatpush1.msra.mxu0 0.0
        %569 = vmatprep.subr.mxu0 0.0
        %570 = vmatpush1.msra.mxu0 0.0
        %571 = vmatprep.subr.mxu0 0.0
        %572 = vmatpush1.msra.mxu0 0.0
        %573 = vmatprep.subr.mxu0 0.0
        %574 = vmatpush1.msra.mxu0 0.0
        %575 = vmatprep.subr.mxu0 0.0
        %576 = vmatpush1.msra.mxu0 0.0
        %577 = vmatprep.subr.mxu0 0.0
        %578 = vmatpush1.msra.mxu0 0.0
        %579 = vmatprep.subr.mxu0 0.0
        %580 = vmatpush1.msra.mxu0 0.0
        %581 = vmatprep.subr.mxu0 0.0
        %582 = vmatpush1.msra.mxu0 0.0
        %583 = vmatprep.subr.mxu0 0.0
        %584 = vmatpush1.msra.mxu0 0.0
        %585 = vmatprep.subr.mxu0 0.0
        %586 = vmatpush1.msra.mxu0 0.0
        %587 = vmatprep.subr.mxu0 0.0
        %588 = vmatpush1.msra.mxu0 0.0
        %589 = vmatprep.subr.mxu0 0.0
        %590 = vmatpush1.msra.mxu0 %v529
        %591 = vmatprep.subr.mxu0 0.0
        %592 = vmatpush1.msra.mxu0 %v528
        %593 = vmatprep.subr.mxu0 0.0
        %594 = vmatpush1.msra.mxu0 %v527
        %595 = vmatprep.subr.mxu0 0.0
        %596 = vmatpush1.msra.mxu0 %v526
        %597 = vmatprep.subr.mxu0 0.0
        %598 = vmatpush2.msra.mxu0 0.0
        %599 = vmatprep.subr.mxu0 0.0
        %600 = vmatpush2.msra.mxu0 0.0
        %601 = vmatprep.subr.mxu0 0.0
        %602 = vmatpush2.msra.mxu0 0.0
        %603 = vmatprep.subr.mxu0 0.0
        %604 = vmatpush2.msra.mxu0 0.0
        %605 = vmatprep.subr.mxu0 0.0
        %606 = vmatpush2.msra.mxu0 0.0
        %607 = vmatprep.subr.mxu0 0.0
        %608 = vmatpush2.msra.mxu0 0.0
        %609 = vmatprep.subr.mxu0 0.0
        %610 = vmatpush2.msra.mxu0 0.0
        %611 = vmatprep.subr.mxu0 0.0
        %612 = vmatpush2.msra.mxu0 0.0
        %613 = vmatprep.subr.mxu0 0.0
        %614 = vmatpush2.msra.mxu0 0.0
        %615 = vmatprep.subr.mxu0 0.0
        %616 = vmatpush2.msra.mxu0 0.0
        %617 = vmatprep.subr.mxu0 0.0
        %618 = vmatpush2.msra.mxu0 0.0
        %619 = vmatprep.subr.mxu0 0.0
        %620 = vmatpush2.msra.mxu0 0.0
        %621 = vmatprep.subr.mxu0 0.0
        %622 = vmatpush2.msra.mxu0 0.0
        %623 = vmatprep.subr.mxu0 0.0
        %624 = vmatpush2.msra.mxu0 0.0
        %625 = vmatprep.subr.mxu0 0.0
        %626 = vmatpush2.msra.mxu0 0.0
        %627 = vmatprep.subr.mxu0 0.0
        %628 = vmatpush2.msra.mxu0 0.0
        %629 = vmatprep.mubr.f32.mxu0 0.0
        %630 = vmatmul.mubr.f32.gmra.mxu0 %v549
        %v631 = vpop.f32.mrf.mxu0
        %v632 = vadd.f32 0.0, %v631
        %v633 = vpop.f32.mrf.mxu0
        %634 = vmatprep.mubr.f32.mxu0 0.0
        %635 = vmatmul.mubr.f32.gmra.mxu0 %v551
        %v636 = vpop.f32.mrf.mxu0
        %v637 = vadd.f32 0.0, %v636
        %v638 = vpop.f32.mrf.mxu0
        %639 = vmatprep.mubr.f32.mxu0 0.0
        %640 = vmatmul.mubr.f32.gmra.mxu0 %v553
        %v641 = vpop.f32.mrf.mxu0
        %v642 = vadd.f32 0.0, %v641
        %v643 = vpop.f32.mrf.mxu0
        %644 = vmatprep.mubr.f32.mxu0 0.0
        %645 = vmatmul.mubr.f32.gmra.mxu0 %v555
        %v646 = vpop.f32.mrf.mxu0
        %v647 = vadd.f32 0.0, %v646
        %v648 = vpop.f32.mrf.mxu0
        %649 = vmatprep.mubr.f32.mxu0 0.0
        %650 = vmatmul.mubr.f32.gmra.mxu0 %v557
        %v651 = vpop.f32.mrf.mxu0
        %v652 = vadd.f32 0.0, %v651
        %v653 = vpop.f32.mrf.mxu0
        %654 = vmatprep.mubr.f32.mxu0 0.0
        %655 = vmatmul.mubr.f32.gmra.mxu0 %v559
        %v656 = vpop.f32.mrf.mxu0
        %v657 = vadd.f32 0.0, %v656
        %v658 = vpop.f32.mrf.mxu0
        %659 = vmatprep.mubr.f32.mxu0 0.0
        %660 = vmatmul.mubr.f32.gmra.mxu0 %v561
        %v661 = vpop.f32.mrf.mxu0
        %v662 = vadd.f32 0.0, %v661
        %v663 = vpop.f32.mrf.mxu0
        %664 = vmatprep.mubr.f32.mxu0 0.0
        %665 = vmatmul.mubr.f32.gmra.mxu0 %v563
        %v666 = vpop.f32.mrf.mxu0
        %v667 = vadd.f32 0.0, %v666
        %v668 = vpop.f32.mrf.mxu0
        %669 = vdwg.mxu0
        %v670 = vadd.f32 %v487, %v632
        %v671 = vadd.f32 %v492, %v637
        %v672 = vadd.f32 %v497, %v642
        %v673 = vadd.f32 %v502, %v647
        %v674 = vadd.f32 %v507, %v652
        %v675 = vadd.f32 %v512, %v657
        %v676 = vadd.f32 %v517, %v662
        %v677 = vadd.f32 %v522, %v667
        %v678 = vld [vmem:[%s2] sm:$0x1]
        %v680 = vlaneseq
        %v681 = vshrl.u32 %v680, 7
        %v682 = vsub.s32 0, %v681
        %v683 = vrot.slane %v678, %v682
        %v685 = vadd.f32 %v670, %v683
        %v686 = vadd.f32 %v671, %v683
        %v687 = vadd.f32 %v672, %v683
        %v688 = vadd.f32 %v673, %v683
        %v689 = vadd.f32 %v674, %v683
        %v690 = vadd.f32 %v675, %v683
        %v691 = vadd.f32 %v676, %v683
        %v692 = vadd.f32 %v677, %v683
        %vm693 = vcmp.gt.f32.partialorder %v685, 0.0
        %vm694 = vcmp.gt.f32.partialorder %v686, 0.0
        %vm695 = vcmp.gt.f32.partialorder %v687, 0.0
        %vm696 = vcmp.gt.f32.partialorder %v688, 0.0
        %vm697 = vcmp.gt.f32.partialorder %v689, 0.0
        %vm698 = vcmp.gt.f32.partialorder %v690, 0.0
        %vm699 = vcmp.gt.f32.partialorder %v691, 0.0
        %vm700 = vcmp.gt.f32.partialorder %v692, 0.0
        %v701 = vmul.f32 %v685, 0.1
        %v702 = vmul.f32 %v686, 0.1
        %v703 = vmul.f32 %v687, 0.1
        %v704 = vmul.f32 %v688, 0.1
        %v705 = vmul.f32 %v689, 0.1
        %v706 = vmul.f32 %v690, 0.1
        %v707 = vmul.f32 %v691, 0.1
        %v708 = vmul.f32 %v692, 0.1
        %v709 = vsel %vm693, %v685, %v701
        %v710 = vsel %vm694, %v686, %v702
        %v711 = vsel %vm695, %v687, %v703
        %v712 = vsel %vm696, %v688, %v704
        %v713 = vsel %vm697, %v689, %v705
        %v714 = vsel %vm698, %v690, %v706
        %v715 = vsel %vm699, %v691, %v707
        %v716 = vsel %vm700, %v692, %v708
        %717 = vst.msk [vmem:[#allocation2 + $0x8] sm:$0xff] %vm194, %v709
        %718 = vst.msk [vmem:[#allocation2 + $0x10] sm:$0xff] %vm194, %v710
        %719 = vst.msk [vmem:[#allocation2 + $0x18] sm:$0xff] %vm194, %v711
        %720 = vst.msk [vmem:[#allocation2 + $0x20] sm:$0xff] %vm194, %v712
        %721 = vst.msk [vmem:[#allocation2 + $0x28] sm:$0xff] %vm194, %v713
        %722 = vst.msk [vmem:[#allocation2 + $0x30] sm:$0xff] %vm194, %v714
        %723 = vst.msk [vmem:[#allocation2 + $0x38] sm:$0xff] %vm194, %v715
        %724 = vst.msk [vmem:[#allocation2 + $0x40] sm:$0xff] %vm194, %v716
        %v725 = vld [vmem:[#allocation2] sm:$0xff]
        %v726 = vld [vmem:[#allocation2 + $0x8] sm:$0xff]
        %v727 = vld [vmem:[#allocation2 + $0x10] sm:$0xff]
        %v728 = vld [vmem:[#allocation2 + $0x18] sm:$0xff]
        %v729 = vld [vmem:[#allocation2 + $0x20] sm:$0xff]
        %v730 = vld [vmem:[#allocation2 + $0x28] sm:$0xff]
        %v731 = vld [vmem:[#allocation2 + $0x30] sm:$0xff]
        %v732 = vld [vmem:[#allocation2 + $0x38] sm:$0xff]
        %v733 = vld [vmem:[#allocation2 + $0x40] sm:$0xff]
        %v734 = vld [vmem:[#allocation2 + $0x48] sm:$0xff]
        %s735 = scalar_lea.vmem [#allocation3], 96
        %v736 = vld [vmem:[%s735] sm:$0xff]
        %v737 = vld [vmem:[%s735 + $0x8] sm:$0xff]
        %v738 = vld [vmem:[%s735 + $0x10] sm:$0xff]
        %v739 = vld [vmem:[%s735 + $0x18] sm:$0xff]
        %s740 = scalar_lea.vmem [#allocation3], 128
        %v741 = vld [vmem:[%s740] sm:$0xff]
        %v742 = vld [vmem:[%s740 + $0x8] sm:$0xff]
        %v743 = vld [vmem:[%s740 + $0x10] sm:$0xff]
        %v744 = vld [vmem:[%s740 + $0x18] sm:$0xff]
        %v746 = vsel %vm194, %v726, 0
        %v749 = vsel %vm194, %v727, 0
        %v752 = vsel %vm194, %v728, 0
        %v755 = vsel %vm194, %v729, 0
        %v758 = vsel %vm194, %v730, 0
        %v761 = vsel %vm194, %v731, 0
        %v764 = vsel %vm194, %v732, 0
        %v767 = vsel %vm194, %v733, 0
        %769 = vmatprep.subr.mxu0 0.0
        %770 = vmatpush1.msra.mxu0 0.0
        %771 = vmatprep.subr.mxu0 0.0
        %772 = vmatpush1.msra.mxu0 0.0
        %773 = vmatprep.subr.mxu0 0.0
        %774 = vmatpush1.msra.mxu0 0.0
        %775 = vmatprep.subr.mxu0 0.0
        %776 = vmatpush1.msra.mxu0 0.0
        %777 = vmatprep.subr.mxu0 0.0
        %778 = vmatpush1.msra.mxu0 0.0
        %779 = vmatprep.subr.mxu0 0.0
        %780 = vmatpush1.msra.mxu0 0.0
        %781 = vmatprep.subr.mxu0 0.0
        %782 = vmatpush1.msra.mxu0 0.0
        %783 = vmatprep.subr.mxu0 0.0
        %784 = vmatpush1.msra.mxu0 0.0
        %785 = vmatprep.subr.mxu0 0.0
        %786 = vmatpush1.msra.mxu0 0.0
        %787 = vmatprep.subr.mxu0 0.0
        %788 = vmatpush1.msra.mxu0 0.0
        %789 = vmatprep.subr.mxu0 0.0
        %790 = vmatpush1.msra.mxu0 0.0
        %791 = vmatprep.subr.mxu0 0.0
        %792 = vmatpush1.msra.mxu0 0.0
        %793 = vmatprep.subr.mxu0 0.0
        %794 = vmatpush1.msra.mxu0 %v744
        %795 = vmatprep.subr.mxu0 0.0
        %796 = vmatpush1.msra.mxu0 %v743
        %797 = vmatprep.subr.mxu0 0.0
        %798 = vmatpush1.msra.mxu0 %v742
        %799 = vmatprep.subr.mxu0 0.0
        %800 = vmatpush1.msra.mxu0 %v741
        %801 = vmatprep.subr.mxu0 0.0
        %802 = vmatpush2.msra.mxu0 0.0
        %803 = vmatprep.subr.mxu0 0.0
        %804 = vmatpush2.msra.mxu0 0.0
        %805 = vmatprep.subr.mxu0 0.0
        %806 = vmatpush2.msra.mxu0 0.0
        %807 = vmatprep.subr.mxu0 0.0
        %808 = vmatpush2.msra.mxu0 0.0
        %809 = vmatprep.subr.mxu0 0.0
        %810 = vmatpush2.msra.mxu0 0.0
        %811 = vmatprep.subr.mxu0 0.0
        %812 = vmatpush2.msra.mxu0 0.0
        %813 = vmatprep.subr.mxu0 0.0
        %814 = vmatpush2.msra.mxu0 0.0
        %815 = vmatprep.subr.mxu0 0.0
        %816 = vmatpush2.msra.mxu0 0.0
        %817 = vmatprep.subr.mxu0 0.0
        %818 = vmatpush2.msra.mxu0 0.0
        %819 = vmatprep.subr.mxu0 0.0
        %820 = vmatpush2.msra.mxu0 0.0
        %821 = vmatprep.subr.mxu0 0.0
        %822 = vmatpush2.msra.mxu0 0.0
        %823 = vmatprep.subr.mxu0 0.0
        %824 = vmatpush2.msra.mxu0 0.0
        %825 = vmatprep.subr.mxu0 0.0
        %826 = vmatpush2.msra.mxu0 0.0
        %827 = vmatprep.subr.mxu0 0.0
        %828 = vmatpush2.msra.mxu0 0.0
        %829 = vmatprep.subr.mxu0 0.0
        %830 = vmatpush2.msra.mxu0 0.0
        %831 = vmatprep.subr.mxu0 0.0
        %832 = vmatpush2.msra.mxu0 0.0
        %833 = vmatprep.mubr.f32.mxu0 0.0
        %834 = vmatmul.mubr.f32.gmra.mxu0 %v746
        %v835 = vpop.f32.mrf.mxu0
        %v836 = vadd.f32 0.0, %v835
        %v837 = vpop.f32.mrf.mxu0
        %838 = vmatprep.mubr.f32.mxu0 0.0
        %839 = vmatmul.mubr.f32.gmra.mxu0 %v749
        %v840 = vpop.f32.mrf.mxu0
        %v841 = vadd.f32 0.0, %v840
        %v842 = vpop.f32.mrf.mxu0
        %843 = vmatprep.mubr.f32.mxu0 0.0
        %844 = vmatmul.mubr.f32.gmra.mxu0 %v752
        %v845 = vpop.f32.mrf.mxu0
        %v846 = vadd.f32 0.0, %v845
        %v847 = vpop.f32.mrf.mxu0
        %848 = vmatprep.mubr.f32.mxu0 0.0
        %849 = vmatmul.mubr.f32.gmra.mxu0 %v755
        %v850 = vpop.f32.mrf.mxu0
        %v851 = vadd.f32 0.0, %v850
        %v852 = vpop.f32.mrf.mxu0
        %853 = vmatprep.mubr.f32.mxu0 0.0
        %854 = vmatmul.mubr.f32.gmra.mxu0 %v758
        %v855 = vpop.f32.mrf.mxu0
        %v856 = vadd.f32 0.0, %v855
        %v857 = vpop.f32.mrf.mxu0
        %858 = vmatprep.mubr.f32.mxu0 0.0
        %859 = vmatmul.mubr.f32.gmra.mxu0 %v761
        %v860 = vpop.f32.mrf.mxu0
        %v861 = vadd.f32 0.0, %v860
        %v862 = vpop.f32.mrf.mxu0
        %863 = vmatprep.mubr.f32.mxu0 0.0
        %864 = vmatmul.mubr.f32.gmra.mxu0 %v764
        %v865 = vpop.f32.mrf.mxu0
        %v866 = vadd.f32 0.0, %v865
        %v867 = vpop.f32.mrf.mxu0
        %868 = vmatprep.mubr.f32.mxu0 0.0
        %869 = vmatmul.mubr.f32.gmra.mxu0 %v767
        %v870 = vpop.f32.mrf.mxu0
        %v871 = vadd.f32 0.0, %v870
        %v872 = vpop.f32.mrf.mxu0
        %873 = vdwg.mxu0
        %vm875 = vcmask 1042432
        %v876 = vrot.slane %v725, 5
        %v877 = vrot.slane %v726, 5
        %v878 = vsel %vm875, %v876, %v877
        %v879 = vrot.slane %v727, 5
        %v880 = vsel %vm875, %v877, %v879
        %v881 = vrot.slane %v728, 5
        %v882 = vsel %vm875, %v879, %v881
        %v883 = vrot.slane %v729, 5
        %v884 = vsel %vm875, %v881, %v883
        %v885 = vrot.slane %v730, 5
        %v886 = vsel %vm875, %v883, %v885
        %v887 = vrot.slane %v731, 5
        %v888 = vsel %vm875, %v885, %v887
        %v889 = vrot.slane %v732, 5
        %v890 = vsel %vm875, %v887, %v889
        %v891 = vrot.slane %v733, 5
        %v892 = vsel %vm875, %v889, %v891
        %v893 = vsel %vm194, %v878, 0
        %v895 = vsel %vm194, %v880, 0
        %v897 = vsel %vm194, %v882, 0
        %v899 = vsel %vm194, %v884, 0
        %v901 = vsel %vm194, %v886, 0
        %v903 = vsel %vm194, %v888, 0
        %v905 = vsel %vm194, %v890, 0
        %v907 = vsel %vm194, %v892, 0
        %909 = vmatprep.subr.mxu0 0.0
        %910 = vmatpush1.msra.mxu0 0.0
        %911 = vmatprep.subr.mxu0 0.0
        %912 = vmatpush1.msra.mxu0 0.0
        %913 = vmatprep.subr.mxu0 0.0
        %914 = vmatpush1.msra.mxu0 0.0
        %915 = vmatprep.subr.mxu0 0.0
        %916 = vmatpush1.msra.mxu0 0.0
        %917 = vmatprep.subr.mxu0 0.0
        %918 = vmatpush1.msra.mxu0 0.0
        %919 = vmatprep.subr.mxu0 0.0
        %920 = vmatpush1.msra.mxu0 0.0
        %921 = vmatprep.subr.mxu0 0.0
        %922 = vmatpush1.msra.mxu0 0.0
        %923 = vmatprep.subr.mxu0 0.0
        %924 = vmatpush1.msra.mxu0 0.0
        %925 = vmatprep.subr.mxu0 0.0
        %926 = vmatpush1.msra.mxu0 0.0
        %927 = vmatprep.subr.mxu0 0.0
        %928 = vmatpush1.msra.mxu0 0.0
        %929 = vmatprep.subr.mxu0 0.0
        %930 = vmatpush1.msra.mxu0 0.0
        %931 = vmatprep.subr.mxu0 0.0
        %932 = vmatpush1.msra.mxu0 0.0
        %933 = vmatprep.subr.mxu0 0.0
        %934 = vmatpush1.msra.mxu0 %v739
        %935 = vmatprep.subr.mxu0 0.0
        %936 = vmatpush1.msra.mxu0 %v738
        %937 = vmatprep.subr.mxu0 0.0
        %938 = vmatpush1.msra.mxu0 %v737
        %939 = vmatprep.subr.mxu0 0.0
        %940 = vmatpush1.msra.mxu0 %v736
        %941 = vmatprep.subr.mxu0 0.0
        %942 = vmatpush2.msra.mxu0 0.0
        %943 = vmatprep.subr.mxu0 0.0
        %944 = vmatpush2.msra.mxu0 0.0
        %945 = vmatprep.subr.mxu0 0.0
        %946 = vmatpush2.msra.mxu0 0.0
        %947 = vmatprep.subr.mxu0 0.0
        %948 = vmatpush2.msra.mxu0 0.0
        %949 = vmatprep.subr.mxu0 0.0
        %950 = vmatpush2.msra.mxu0 0.0
        %951 = vmatprep.subr.mxu0 0.0
        %952 = vmatpush2.msra.mxu0 0.0
        %953 = vmatprep.subr.mxu0 0.0
        %954 = vmatpush2.msra.mxu0 0.0
        %955 = vmatprep.subr.mxu0 0.0
        %956 = vmatpush2.msra.mxu0 0.0
        %957 = vmatprep.subr.mxu0 0.0
        %958 = vmatpush2.msra.mxu0 0.0
        %959 = vmatprep.subr.mxu0 0.0
        %960 = vmatpush2.msra.mxu0 0.0
        %961 = vmatprep.subr.mxu0 0.0
        %962 = vmatpush2.msra.mxu0 0.0
        %963 = vmatprep.subr.mxu0 0.0
        %964 = vmatpush2.msra.mxu0 0.0
        %965 = vmatprep.subr.mxu0 0.0
        %966 = vmatpush2.msra.mxu0 0.0
        %967 = vmatprep.subr.mxu0 0.0
        %968 = vmatpush2.msra.mxu0 0.0
        %969 = vmatprep.subr.mxu0 0.0
        %970 = vmatpush2.msra.mxu0 0.0
        %971 = vmatprep.subr.mxu0 0.0
        %972 = vmatpush2.msra.mxu0 0.0
        %973 = vmatprep.mubr.f32.mxu0 0.0
        %974 = vmatmul.mubr.f32.gmra.mxu0 %v893
        %v975 = vpop.f32.mrf.mxu0
        %v976 = vadd.f32 %v836, %v975
        %v977 = vpop.f32.mrf.mxu0
        %978 = vmatprep.mubr.f32.mxu0 0.0
        %979 = vmatmul.mubr.f32.gmra.mxu0 %v895
        %v980 = vpop.f32.mrf.mxu0
        %v981 = vadd.f32 %v841, %v980
        %v982 = vpop.f32.mrf.mxu0
        %983 = vmatprep.mubr.f32.mxu0 0.0
        %984 = vmatmul.mubr.f32.gmra.mxu0 %v897
        %v985 = vpop.f32.mrf.mxu0
        %v986 = vadd.f32 %v846, %v985
        %v987 = vpop.f32.mrf.mxu0
        %988 = vmatprep.mubr.f32.mxu0 0.0
        %989 = vmatmul.mubr.f32.gmra.mxu0 %v899
        %v990 = vpop.f32.mrf.mxu0
        %v991 = vadd.f32 %v851, %v990
        %v992 = vpop.f32.mrf.mxu0
        %993 = vmatprep.mubr.f32.mxu0 0.0
        %994 = vmatmul.mubr.f32.gmra.mxu0 %v901
        %v995 = vpop.f32.mrf.mxu0
        %v996 = vadd.f32 %v856, %v995
        %v997 = vpop.f32.mrf.mxu0
        %998 = vmatprep.mubr.f32.mxu0 0.0
        %999 = vmatmul.mubr.f32.gmra.mxu0 %v903
        %v1000 = vpop.f32.mrf.mxu0
        %v1001 = vadd.f32 %v861, %v1000
        %v1002 = vpop.f32.mrf.mxu0
        %1003 = vmatprep.mubr.f32.mxu0 0.0
        %1004 = vmatmul.mubr.f32.gmra.mxu0 %v905
        %v1005 = vpop.f32.mrf.mxu0
        %v1006 = vadd.f32 %v866, %v1005
        %v1007 = vpop.f32.mrf.mxu0
        %1008 = vmatprep.mubr.f32.mxu0 0.0
        %1009 = vmatmul.mubr.f32.gmra.mxu0 %v907
        %v1010 = vpop.f32.mrf.mxu0
        %v1011 = vadd.f32 %v871, %v1010
        %v1012 = vpop.f32.mrf.mxu0
        %1013 = vdwg.mxu0
        %s1014 = scalar_lea.vmem [#allocation3], 160
        %v1015 = vld [vmem:[%s1014] sm:$0xff]
        %v1016 = vld [vmem:[%s1014 + $0x8] sm:$0xff]
        %v1017 = vld [vmem:[%s1014 + $0x10] sm:$0xff]
        %v1018 = vld [vmem:[%s1014 + $0x18] sm:$0xff]
        %vm1020 = vcmask 1044480
        %v1021 = vrot.slane %v726, 3
        %v1022 = vrot.slane %v727, 3
        %v1023 = vsel %vm1020, %v1021, %v1022
        %v1024 = vrot.slane %v728, 3
        %v1025 = vsel %vm1020, %v1022, %v1024
        %v1026 = vrot.slane %v729, 3
        %v1027 = vsel %vm1020, %v1024, %v1026
        %v1028 = vrot.slane %v730, 3
        %v1029 = vsel %vm1020, %v1026, %v1028
        %v1030 = vrot.slane %v731, 3
        %v1031 = vsel %vm1020, %v1028, %v1030
        %v1032 = vrot.slane %v732, 3
        %v1033 = vsel %vm1020, %v1030, %v1032
        %v1034 = vrot.slane %v733, 3
        %v1035 = vsel %vm1020, %v1032, %v1034
        %v1036 = vrot.slane %v734, 3
        %v1037 = vsel %vm1020, %v1034, %v1036
        %v1038 = vsel %vm194, %v1023, 0
        %v1040 = vsel %vm194, %v1025, 0
        %v1042 = vsel %vm194, %v1027, 0
        %v1044 = vsel %vm194, %v1029, 0
        %v1046 = vsel %vm194, %v1031, 0
        %v1048 = vsel %vm194, %v1033, 0
        %v1050 = vsel %vm194, %v1035, 0
        %v1052 = vsel %vm194, %v1037, 0
        %1054 = vmatprep.subr.mxu0 0.0
        %1055 = vmatpush1.msra.mxu0 0.0
        %1056 = vmatprep.subr.mxu0 0.0
        %1057 = vmatpush1.msra.mxu0 0.0
        %1058 = vmatprep.subr.mxu0 0.0
        %1059 = vmatpush1.msra.mxu0 0.0
        %1060 = vmatprep.subr.mxu0 0.0
        %1061 = vmatpush1.msra.mxu0 0.0
        %1062 = vmatprep.subr.mxu0 0.0
        %1063 = vmatpush1.msra.mxu0 0.0
        %1064 = vmatprep.subr.mxu0 0.0
        %1065 = vmatpush1.msra.mxu0 0.0
        %1066 = vmatprep.subr.mxu0 0.0
        %1067 = vmatpush1.msra.mxu0 0.0
        %1068 = vmatprep.subr.mxu0 0.0
        %1069 = vmatpush1.msra.mxu0 0.0
        %1070 = vmatprep.subr.mxu0 0.0
        %1071 = vmatpush1.msra.mxu0 0.0
        %1072 = vmatprep.subr.mxu0 0.0
        %1073 = vmatpush1.msra.mxu0 0.0
        %1074 = vmatprep.subr.mxu0 0.0
        %1075 = vmatpush1.msra.mxu0 0.0
        %1076 = vmatprep.subr.mxu0 0.0
        %1077 = vmatpush1.msra.mxu0 0.0
        %1078 = vmatprep.subr.mxu0 0.0
        %1079 = vmatpush1.msra.mxu0 %v1018
        %1080 = vmatprep.subr.mxu0 0.0
        %1081 = vmatpush1.msra.mxu0 %v1017
        %1082 = vmatprep.subr.mxu0 0.0
        %1083 = vmatpush1.msra.mxu0 %v1016
        %1084 = vmatprep.subr.mxu0 0.0
        %1085 = vmatpush1.msra.mxu0 %v1015
        %1086 = vmatprep.subr.mxu0 0.0
        %1087 = vmatpush2.msra.mxu0 0.0
        %1088 = vmatprep.subr.mxu0 0.0
        %1089 = vmatpush2.msra.mxu0 0.0
        %1090 = vmatprep.subr.mxu0 0.0
        %1091 = vmatpush2.msra.mxu0 0.0
        %1092 = vmatprep.subr.mxu0 0.0
        %1093 = vmatpush2.msra.mxu0 0.0
        %1094 = vmatprep.subr.mxu0 0.0
        %1095 = vmatpush2.msra.mxu0 0.0
        %1096 = vmatprep.subr.mxu0 0.0
        %1097 = vmatpush2.msra.mxu0 0.0
        %1098 = vmatprep.subr.mxu0 0.0
        %1099 = vmatpush2.msra.mxu0 0.0
        %1100 = vmatprep.subr.mxu0 0.0
        %1101 = vmatpush2.msra.mxu0 0.0
        %1102 = vmatprep.subr.mxu0 0.0
        %1103 = vmatpush2.msra.mxu0 0.0
        %1104 = vmatprep.subr.mxu0 0.0
        %1105 = vmatpush2.msra.mxu0 0.0
        %1106 = vmatprep.subr.mxu0 0.0
        %1107 = vmatpush2.msra.mxu0 0.0
        %1108 = vmatprep.subr.mxu0 0.0
        %1109 = vmatpush2.msra.mxu0 0.0
        %1110 = vmatprep.subr.mxu0 0.0
        %1111 = vmatpush2.msra.mxu0 0.0
        %1112 = vmatprep.subr.mxu0 0.0
        %1113 = vmatpush2.msra.mxu0 0.0
        %1114 = vmatprep.subr.mxu0 0.0
        %1115 = vmatpush2.msra.mxu0 0.0
        %1116 = vmatprep.subr.mxu0 0.0
        %1117 = vmatpush2.msra.mxu0 0.0
        %1118 = vmatprep.mubr.f32.mxu0 0.0
        %1119 = vmatmul.mubr.f32.gmra.mxu0 %v1038
        %v1120 = vpop.f32.mrf.mxu0
        %v1121 = vadd.f32 0.0, %v1120
        %v1122 = vpop.f32.mrf.mxu0
        %1123 = vmatprep.mubr.f32.mxu0 0.0
        %1124 = vmatmul.mubr.f32.gmra.mxu0 %v1040
        %v1125 = vpop.f32.mrf.mxu0
        %v1126 = vadd.f32 0.0, %v1125
        %v1127 = vpop.f32.mrf.mxu0
        %1128 = vmatprep.mubr.f32.mxu0 0.0
        %1129 = vmatmul.mubr.f32.gmra.mxu0 %v1042
        %v1130 = vpop.f32.mrf.mxu0
        %v1131 = vadd.f32 0.0, %v1130
        %v1132 = vpop.f32.mrf.mxu0
        %1133 = vmatprep.mubr.f32.mxu0 0.0
        %1134 = vmatmul.mubr.f32.gmra.mxu0 %v1044
        %v1135 = vpop.f32.mrf.mxu0
        %v1136 = vadd.f32 0.0, %v1135
        %v1137 = vpop.f32.mrf.mxu0
        %1138 = vmatprep.mubr.f32.mxu0 0.0
        %1139 = vmatmul.mubr.f32.gmra.mxu0 %v1046
        %v1140 = vpop.f32.mrf.mxu0
        %v1141 = vadd.f32 0.0, %v1140
        %v1142 = vpop.f32.mrf.mxu0
        %1143 = vmatprep.mubr.f32.mxu0 0.0
        %1144 = vmatmul.mubr.f32.gmra.mxu0 %v1048
        %v1145 = vpop.f32.mrf.mxu0
        %v1146 = vadd.f32 0.0, %v1145
        %v1147 = vpop.f32.mrf.mxu0
        %1148 = vmatprep.mubr.f32.mxu0 0.0
        %1149 = vmatmul.mubr.f32.gmra.mxu0 %v1050
        %v1150 = vpop.f32.mrf.mxu0
        %v1151 = vadd.f32 0.0, %v1150
        %v1152 = vpop.f32.mrf.mxu0
        %1153 = vmatprep.mubr.f32.mxu0 0.0
        %1154 = vmatmul.mubr.f32.gmra.mxu0 %v1052
        %v1155 = vpop.f32.mrf.mxu0
        %v1156 = vadd.f32 0.0, %v1155
        %v1157 = vpop.f32.mrf.mxu0
        %1158 = vdwg.mxu0
        %v1159 = vadd.f32 %v976, %v1121
        %v1160 = vadd.f32 %v981, %v1126
        %v1161 = vadd.f32 %v986, %v1131
        %v1162 = vadd.f32 %v991, %v1136
        %v1163 = vadd.f32 %v996, %v1141
        %v1164 = vadd.f32 %v1001, %v1146
        %v1165 = vadd.f32 %v1006, %v1151
        %v1166 = vadd.f32 %v1011, %v1156
        %s1167 = scalar_lea.vmem %s2, 1
        %v1168 = vld [vmem:[%s1167] sm:$0x1]
        %v1170 = vlaneseq
        %v1171 = vshrl.u32 %v1170, 7
        %v1172 = vsub.s32 0, %v1171
        %v1173 = vrot.slane %v1168, %v1172
        %v1175 = vadd.f32 %v1159, %v1173
        %v1176 = vadd.f32 %v1160, %v1173
        %v1177 = vadd.f32 %v1161, %v1173
        %v1178 = vadd.f32 %v1162, %v1173
        %v1179 = vadd.f32 %v1163, %v1173
        %v1180 = vadd.f32 %v1164, %v1173
        %v1181 = vadd.f32 %v1165, %v1173
        %v1182 = vadd.f32 %v1166, %v1173
        %vm1183 = vcmp.gt.f32.partialorder %v1175, 0.0
        %vm1184 = vcmp.gt.f32.partialorder %v1176, 0.0
        %vm1185 = vcmp.gt.f32.partialorder %v1177, 0.0
        %vm1186 = vcmp.gt.f32.partialorder %v1178, 0.0
        %vm1187 = vcmp.gt.f32.partialorder %v1179, 0.0
        %vm1188 = vcmp.gt.f32.partialorder %v1180, 0.0
        %vm1189 = vcmp.gt.f32.partialorder %v1181, 0.0
        %vm1190 = vcmp.gt.f32.partialorder %v1182, 0.0
        %v1191 = vmul.f32 %v1175, 0.1
        %v1192 = vmul.f32 %v1176, 0.1
        %v1193 = vmul.f32 %v1177, 0.1
        %v1194 = vmul.f32 %v1178, 0.1
        %v1195 = vmul.f32 %v1179, 0.1
        %v1196 = vmul.f32 %v1180, 0.1
        %v1197 = vmul.f32 %v1181, 0.1
        %v1198 = vmul.f32 %v1182, 0.1
        %v1199 = vsel %vm1183, %v1175, %v1191
        %v1200 = vsel %vm1184, %v1176, %v1192
        %v1201 = vsel %vm1185, %v1177, %v1193
        %v1202 = vsel %vm1186, %v1178, %v1194
        %v1203 = vsel %vm1187, %v1179, %v1195
        %v1204 = vsel %vm1188, %v1180, %v1196
        %v1205 = vsel %vm1189, %v1181, %v1197
        %v1206 = vsel %vm1190, %v1182, %v1198
        %1207 = vst.msk [vmem:[#allocation2 + $0x8] sm:$0xff] %vm194, %v1199
        %1208 = vst.msk [vmem:[#allocation2 + $0x10] sm:$0xff] %vm194, %v1200
        %1209 = vst.msk [vmem:[#allocation2 + $0x18] sm:$0xff] %vm194, %v1201
        %1210 = vst.msk [vmem:[#allocation2 + $0x20] sm:$0xff] %vm194, %v1202
        %1211 = vst.msk [vmem:[#allocation2 + $0x28] sm:$0xff] %vm194, %v1203
        %1212 = vst.msk [vmem:[#allocation2 + $0x30] sm:$0xff] %vm194, %v1204
        %1213 = vst.msk [vmem:[#allocation2 + $0x38] sm:$0xff] %vm194, %v1205
        %1214 = vst.msk [vmem:[#allocation2 + $0x40] sm:$0xff] %vm194, %v1206
        %v1215 = vld [vmem:[#allocation2] sm:$0xff]
        %v1216 = vld [vmem:[#allocation2 + $0x8] sm:$0xff]
        %v1217 = vld [vmem:[#allocation2 + $0x10] sm:$0xff]
        %v1218 = vld [vmem:[#allocation2 + $0x18] sm:$0xff]
        %v1219 = vld [vmem:[#allocation2 + $0x20] sm:$0xff]
        %v1220 = vld [vmem:[#allocation2 + $0x28] sm:$0xff]
        %v1221 = vld [vmem:[#allocation2 + $0x30] sm:$0xff]
        %v1222 = vld [vmem:[#allocation2 + $0x38] sm:$0xff]
        %v1223 = vld [vmem:[#allocation2 + $0x40] sm:$0xff]
        %v1224 = vld [vmem:[#allocation2 + $0x48] sm:$0xff]
        %s1225 = scalar_lea.vmem [#allocation3], 192
        %v1226 = vld [vmem:[%s1225] sm:$0xff]
        %v1227 = vld [vmem:[%s1225 + $0x8] sm:$0xff]
        %v1228 = vld [vmem:[%s1225 + $0x10] sm:$0xff]
        %v1229 = vld [vmem:[%s1225 + $0x18] sm:$0xff]
        %s1230 = scalar_lea.vmem [#allocation3], 224
        %v1231 = vld [vmem:[%s1230] sm:$0xff]
        %v1232 = vld [vmem:[%s1230 + $0x8] sm:$0xff]
        %v1233 = vld [vmem:[%s1230 + $0x10] sm:$0xff]
        %v1234 = vld [vmem:[%s1230 + $0x18] sm:$0xff]
        %v1236 = vsel %vm194, %v1216, 0
        %v1239 = vsel %vm194, %v1217, 0
        %v1242 = vsel %vm194, %v1218, 0
        %v1245 = vsel %vm194, %v1219, 0
        %v1248 = vsel %vm194, %v1220, 0
        %v1251 = vsel %vm194, %v1221, 0
        %v1254 = vsel %vm194, %v1222, 0
        %v1257 = vsel %vm194, %v1223, 0
        %1259 = vmatprep.subr.mxu0 0.0
        %1260 = vmatpush1.msra.mxu0 0.0
        %1261 = vmatprep.subr.mxu0 0.0
        %1262 = vmatpush1.msra.mxu0 0.0
        %1263 = vmatprep.subr.mxu0 0.0
        %1264 = vmatpush1.msra.mxu0 0.0
        %1265 = vmatprep.subr.mxu0 0.0
        %1266 = vmatpush1.msra.mxu0 0.0
        %1267 = vmatprep.subr.mxu0 0.0
        %1268 = vmatpush1.msra.mxu0 0.0
        %1269 = vmatprep.subr.mxu0 0.0
        %1270 = vmatpush1.msra.mxu0 0.0
        %1271 = vmatprep.subr.mxu0 0.0
        %1272 = vmatpush1.msra.mxu0 0.0
        %1273 = vmatprep.subr.mxu0 0.0
        %1274 = vmatpush1.msra.mxu0 0.0
        %1275 = vmatprep.subr.mxu0 0.0
        %1276 = vmatpush1.msra.mxu0 0.0
        %1277 = vmatprep.subr.mxu0 0.0
        %1278 = vmatpush1.msra.mxu0 0.0
        %1279 = vmatprep.subr.mxu0 0.0
        %1280 = vmatpush1.msra.mxu0 0.0
        %1281 = vmatprep.subr.mxu0 0.0
        %1282 = vmatpush1.msra.mxu0 0.0
        %1283 = vmatprep.subr.mxu0 0.0
        %1284 = vmatpush1.msra.mxu0 %v1234
        %1285 = vmatprep.subr.mxu0 0.0
        %1286 = vmatpush1.msra.mxu0 %v1233
        %1287 = vmatprep.subr.mxu0 0.0
        %1288 = vmatpush1.msra.mxu0 %v1232
        %1289 = vmatprep.subr.mxu0 0.0
        %1290 = vmatpush1.msra.mxu0 %v1231
        %1291 = vmatprep.subr.mxu0 0.0
        %1292 = vmatpush2.msra.mxu0 0.0
        %1293 = vmatprep.subr.mxu0 0.0
        %1294 = vmatpush2.msra.mxu0 0.0
        %1295 = vmatprep.subr.mxu0 0.0
        %1296 = vmatpush2.msra.mxu0 0.0
        %1297 = vmatprep.subr.mxu0 0.0
        %1298 = vmatpush2.msra.mxu0 0.0
        %1299 = vmatprep.subr.mxu0 0.0
        %1300 = vmatpush2.msra.mxu0 0.0
        %1301 = vmatprep.subr.mxu0 0.0
        %1302 = vmatpush2.msra.mxu0 0.0
        %1303 = vmatprep.subr.mxu0 0.0
        %1304 = vmatpush2.msra.mxu0 0.0
        %1305 = vmatprep.subr.mxu0 0.0
        %1306 = vmatpush2.msra.mxu0 0.0
        %1307 = vmatprep.subr.mxu0 0.0
        %1308 = vmatpush2.msra.mxu0 0.0
        %1309 = vmatprep.subr.mxu0 0.0
        %1310 = vmatpush2.msra.mxu0 0.0
        %1311 = vmatprep.subr.mxu0 0.0
        %1312 = vmatpush2.msra.mxu0 0.0
        %1313 = vmatprep.subr.mxu0 0.0
        %1314 = vmatpush2.msra.mxu0 0.0
        %1315 = vmatprep.subr.mxu0 0.0
        %1316 = vmatpush2.msra.mxu0 0.0
        %1317 = vmatprep.subr.mxu0 0.0
        %1318 = vmatpush2.msra.mxu0 0.0
        %1319 = vmatprep.subr.mxu0 0.0
        %1320 = vmatpush2.msra.mxu0 0.0
        %1321 = vmatprep.subr.mxu0 0.0
        %1322 = vmatpush2.msra.mxu0 0.0
        %1323 = vmatprep.mubr.f32.mxu0 0.0
        %1324 = vmatmul.mubr.f32.gmra.mxu0 %v1236
        %v1325 = vpop.f32.mrf.mxu0
        %v1326 = vadd.f32 0.0, %v1325
        %v1327 = vpop.f32.mrf.mxu0
        %1328 = vmatprep.mubr.f32.mxu0 0.0
        %1329 = vmatmul.mubr.f32.gmra.mxu0 %v1239
        %v1330 = vpop.f32.mrf.mxu0
        %v1331 = vadd.f32 0.0, %v1330
        %v1332 = vpop.f32.mrf.mxu0
        %1333 = vmatprep.mubr.f32.mxu0 0.0
        %1334 = vmatmul.mubr.f32.gmra.mxu0 %v1242
        %v1335 = vpop.f32.mrf.mxu0
        %v1336 = vadd.f32 0.0, %v1335
        %v1337 = vpop.f32.mrf.mxu0
        %1338 = vmatprep.mubr.f32.mxu0 0.0
        %1339 = vmatmul.mubr.f32.gmra.mxu0 %v1245
        %v1340 = vpop.f32.mrf.mxu0
        %v1341 = vadd.f32 0.0, %v1340
        %v1342 = vpop.f32.mrf.mxu0
        %1343 = vmatprep.mubr.f32.mxu0 0.0
        %1344 = vmatmul.mubr.f32.gmra.mxu0 %v1248
        %v1345 = vpop.f32.mrf.mxu0
        %v1346 = vadd.f32 0.0, %v1345
        %v1347 = vpop.f32.mrf.mxu0
        %1348 = vmatprep.mubr.f32.mxu0 0.0
        %1349 = vmatmul.mubr.f32.gmra.mxu0 %v1251
        %v1350 = vpop.f32.mrf.mxu0
        %v1351 = vadd.f32 0.0, %v1350
        %v1352 = vpop.f32.mrf.mxu0
        %1353 = vmatprep.mubr.f32.mxu0 0.0
        %1354 = vmatmul.mubr.f32.gmra.mxu0 %v1254
        %v1355 = vpop.f32.mrf.mxu0
        %v1356 = vadd.f32 0.0, %v1355
        %v1357 = vpop.f32.mrf.mxu0
        %1358 = vmatprep.mubr.f32.mxu0 0.0
        %1359 = vmatmul.mubr.f32.gmra.mxu0 %v1257
        %v1360 = vpop.f32.mrf.mxu0
        %v1361 = vadd.f32 0.0, %v1360
        %v1362 = vpop.f32.mrf.mxu0
        %1363 = vdwg.mxu0
        %v1365 = vrot.slane %v1215, 3
        %v1366 = vrot.slane %v1216, 3
        %v1367 = vsel %vm1020, %v1365, %v1366
        %v1368 = vrot.slane %v1217, 3
        %v1369 = vsel %vm1020, %v1366, %v1368
        %v1370 = vrot.slane %v1218, 3
        %v1371 = vsel %vm1020, %v1368, %v1370
        %v1372 = vrot.slane %v1219, 3
        %v1373 = vsel %vm1020, %v1370, %v1372
        %v1374 = vrot.slane %v1220, 3
        %v1375 = vsel %vm1020, %v1372, %v1374
        %v1376 = vrot.slane %v1221, 3
        %v1377 = vsel %vm1020, %v1374, %v1376
        %v1378 = vrot.slane %v1222, 3
        %v1379 = vsel %vm1020, %v1376, %v1378
        %v1380 = vrot.slane %v1223, 3
        %v1381 = vsel %vm1020, %v1378, %v1380
        %v1382 = vsel %vm194, %v1367, 0
        %v1384 = vsel %vm194, %v1369, 0
        %v1386 = vsel %vm194, %v1371, 0
        %v1388 = vsel %vm194, %v1373, 0
        %v1390 = vsel %vm194, %v1375, 0
        %v1392 = vsel %vm194, %v1377, 0
        %v1394 = vsel %vm194, %v1379, 0
        %v1396 = vsel %vm194, %v1381, 0
        %1398 = vmatprep.subr.mxu0 0.0
        %1399 = vmatpush1.msra.mxu0 0.0
        %1400 = vmatprep.subr.mxu0 0.0
        %1401 = vmatpush1.msra.mxu0 0.0
        %1402 = vmatprep.subr.mxu0 0.0
        %1403 = vmatpush1.msra.mxu0 0.0
        %1404 = vmatprep.subr.mxu0 0.0
        %1405 = vmatpush1.msra.mxu0 0.0
        %1406 = vmatprep.subr.mxu0 0.0
        %1407 = vmatpush1.msra.mxu0 0.0
        %1408 = vmatprep.subr.mxu0 0.0
        %1409 = vmatpush1.msra.mxu0 0.0
        %1410 = vmatprep.subr.mxu0 0.0
        %1411 = vmatpush1.msra.mxu0 0.0
        %1412 = vmatprep.subr.mxu0 0.0
        %1413 = vmatpush1.msra.mxu0 0.0
        %1414 = vmatprep.subr.mxu0 0.0
        %1415 = vmatpush1.msra.mxu0 0.0
        %1416 = vmatprep.subr.mxu0 0.0
        %1417 = vmatpush1.msra.mxu0 0.0
        %1418 = vmatprep.subr.mxu0 0.0
        %1419 = vmatpush1.msra.mxu0 0.0
        %1420 = vmatprep.subr.mxu0 0.0
        %1421 = vmatpush1.msra.mxu0 0.0
        %1422 = vmatprep.subr.mxu0 0.0
        %1423 = vmatpush1.msra.mxu0 %v1229
        %1424 = vmatprep.subr.mxu0 0.0
        %1425 = vmatpush1.msra.mxu0 %v1228
        %1426 = vmatprep.subr.mxu0 0.0
        %1427 = vmatpush1.msra.mxu0 %v1227
        %1428 = vmatprep.subr.mxu0 0.0
        %1429 = vmatpush1.msra.mxu0 %v1226
        %1430 = vmatprep.subr.mxu0 0.0
        %1431 = vmatpush2.msra.mxu0 0.0
        %1432 = vmatprep.subr.mxu0 0.0
        %1433 = vmatpush2.msra.mxu0 0.0
        %1434 = vmatprep.subr.mxu0 0.0
        %1435 = vmatpush2.msra.mxu0 0.0
        %1436 = vmatprep.subr.mxu0 0.0
        %1437 = vmatpush2.msra.mxu0 0.0
        %1438 = vmatprep.subr.mxu0 0.0
        %1439 = vmatpush2.msra.mxu0 0.0
        %1440 = vmatprep.subr.mxu0 0.0
        %1441 = vmatpush2.msra.mxu0 0.0
        %1442 = vmatprep.subr.mxu0 0.0
        %1443 = vmatpush2.msra.mxu0 0.0
        %1444 = vmatprep.subr.mxu0 0.0
        %1445 = vmatpush2.msra.mxu0 0.0
        %1446 = vmatprep.subr.mxu0 0.0
        %1447 = vmatpush2.msra.mxu0 0.0
        %1448 = vmatprep.subr.mxu0 0.0
        %1449 = vmatpush2.msra.mxu0 0.0
        %1450 = vmatprep.subr.mxu0 0.0
        %1451 = vmatpush2.msra.mxu0 0.0
        %1452 = vmatprep.subr.mxu0 0.0
        %1453 = vmatpush2.msra.mxu0 0.0
        %1454 = vmatprep.subr.mxu0 0.0
        %1455 = vmatpush2.msra.mxu0 0.0
        %1456 = vmatprep.subr.mxu0 0.0
        %1457 = vmatpush2.msra.mxu0 0.0
        %1458 = vmatprep.subr.mxu0 0.0
        %1459 = vmatpush2.msra.mxu0 0.0
        %1460 = vmatprep.subr.mxu0 0.0
        %1461 = vmatpush2.msra.mxu0 0.0
        %1462 = vmatprep.mubr.f32.mxu0 0.0
        %1463 = vmatmul.mubr.f32.gmra.mxu0 %v1382
        %v1464 = vpop.f32.mrf.mxu0
        %v1465 = vadd.f32 %v1326, %v1464
        %v1466 = vpop.f32.mrf.mxu0
        %1467 = vmatprep.mubr.f32.mxu0 0.0
        %1468 = vmatmul.mubr.f32.gmra.mxu0 %v1384
        %v1469 = vpop.f32.mrf.mxu0
        %v1470 = vadd.f32 %v1331, %v1469
        %v1471 = vpop.f32.mrf.mxu0
        %1472 = vmatprep.mubr.f32.mxu0 0.0
        %1473 = vmatmul.mubr.f32.gmra.mxu0 %v1386
        %v1474 = vpop.f32.mrf.mxu0
        %v1475 = vadd.f32 %v1336, %v1474
        %v1476 = vpop.f32.mrf.mxu0
        %1477 = vmatprep.mubr.f32.mxu0 0.0
        %1478 = vmatmul.mubr.f32.gmra.mxu0 %v1388
        %v1479 = vpop.f32.mrf.mxu0
        %v1480 = vadd.f32 %v1341, %v1479
        %v1481 = vpop.f32.mrf.mxu0
        %1482 = vmatprep.mubr.f32.mxu0 0.0
        %1483 = vmatmul.mubr.f32.gmra.mxu0 %v1390
        %v1484 = vpop.f32.mrf.mxu0
        %v1485 = vadd.f32 %v1346, %v1484
        %v1486 = vpop.f32.mrf.mxu0
        %1487 = vmatprep.mubr.f32.mxu0 0.0
        %1488 = vmatmul.mubr.f32.gmra.mxu0 %v1392
        %v1489 = vpop.f32.mrf.mxu0
        %v1490 = vadd.f32 %v1351, %v1489
        %v1491 = vpop.f32.mrf.mxu0
        %1492 = vmatprep.mubr.f32.mxu0 0.0
        %1493 = vmatmul.mubr.f32.gmra.mxu0 %v1394
        %v1494 = vpop.f32.mrf.mxu0
        %v1495 = vadd.f32 %v1356, %v1494
        %v1496 = vpop.f32.mrf.mxu0
        %1497 = vmatprep.mubr.f32.mxu0 0.0
        %1498 = vmatmul.mubr.f32.gmra.mxu0 %v1396
        %v1499 = vpop.f32.mrf.mxu0
        %v1500 = vadd.f32 %v1361, %v1499
        %v1501 = vpop.f32.mrf.mxu0
        %1502 = vdwg.mxu0
        %s1503 = scalar_lea.vmem [#allocation3], 256
        %v1504 = vld [vmem:[%s1503] sm:$0xff]
        %v1505 = vld [vmem:[%s1503 + $0x8] sm:$0xff]
        %v1506 = vld [vmem:[%s1503 + $0x10] sm:$0xff]
        %v1507 = vld [vmem:[%s1503 + $0x18] sm:$0xff]
        %v1509 = vrot.slane %v1216, 5
        %v1510 = vrot.slane %v1217, 5
        %v1511 = vsel %vm875, %v1509, %v1510
        %v1512 = vrot.slane %v1218, 5
        %v1513 = vsel %vm875, %v1510, %v1512
        %v1514 = vrot.slane %v1219, 5
        %v1515 = vsel %vm875, %v1512, %v1514
        %v1516 = vrot.slane %v1220, 5
        %v1517 = vsel %vm875, %v1514, %v1516
        %v1518 = vrot.slane %v1221, 5
        %v1519 = vsel %vm875, %v1516, %v1518
        %v1520 = vrot.slane %v1222, 5
        %v1521 = vsel %vm875, %v1518, %v1520
        %v1522 = vrot.slane %v1223, 5
        %v1523 = vsel %vm875, %v1520, %v1522
        %v1524 = vrot.slane %v1224, 5
        %v1525 = vsel %vm875, %v1522, %v1524
        %v1526 = vsel %vm194, %v1511, 0
        %v1528 = vsel %vm194, %v1513, 0
        %v1530 = vsel %vm194, %v1515, 0
        %v1532 = vsel %vm194, %v1517, 0
        %v1534 = vsel %vm194, %v1519, 0
        %v1536 = vsel %vm194, %v1521, 0
        %v1538 = vsel %vm194, %v1523, 0
        %v1540 = vsel %vm194, %v1525, 0
        %1542 = vmatprep.subr.mxu0 0.0
        %1543 = vmatpush1.msra.mxu0 0.0
        %1544 = vmatprep.subr.mxu0 0.0
        %1545 = vmatpush1.msra.mxu0 0.0
        %1546 = vmatprep.subr.mxu0 0.0
        %1547 = vmatpush1.msra.mxu0 0.0
        %1548 = vmatprep.subr.mxu0 0.0
        %1549 = vmatpush1.msra.mxu0 0.0
        %1550 = vmatprep.subr.mxu0 0.0
        %1551 = vmatpush1.msra.mxu0 0.0
        %1552 = vmatprep.subr.mxu0 0.0
        %1553 = vmatpush1.msra.mxu0 0.0
        %1554 = vmatprep.subr.mxu0 0.0
        %1555 = vmatpush1.msra.mxu0 0.0
        %1556 = vmatprep.subr.mxu0 0.0
        %1557 = vmatpush1.msra.mxu0 0.0
        %1558 = vmatprep.subr.mxu0 0.0
        %1559 = vmatpush1.msra.mxu0 0.0
        %1560 = vmatprep.subr.mxu0 0.0
        %1561 = vmatpush1.msra.mxu0 0.0
        %1562 = vmatprep.subr.mxu0 0.0
        %1563 = vmatpush1.msra.mxu0 0.0
        %1564 = vmatprep.subr.mxu0 0.0
        %1565 = vmatpush1.msra.mxu0 0.0
        %1566 = vmatprep.subr.mxu0 0.0
        %1567 = vmatpush1.msra.mxu0 %v1507
        %1568 = vmatprep.subr.mxu0 0.0
        %1569 = vmatpush1.msra.mxu0 %v1506
        %1570 = vmatprep.subr.mxu0 0.0
        %1571 = vmatpush1.msra.mxu0 %v1505
        %1572 = vmatprep.subr.mxu0 0.0
        %1573 = vmatpush1.msra.mxu0 %v1504
        %1574 = vmatprep.subr.mxu0 0.0
        %1575 = vmatpush2.msra.mxu0 0.0
        %1576 = vmatprep.subr.mxu0 0.0
        %1577 = vmatpush2.msra.mxu0 0.0
        %1578 = vmatprep.subr.mxu0 0.0
        %1579 = vmatpush2.msra.mxu0 0.0
        %1580 = vmatprep.subr.mxu0 0.0
        %1581 = vmatpush2.msra.mxu0 0.0
        %1582 = vmatprep.subr.mxu0 0.0
        %1583 = vmatpush2.msra.mxu0 0.0
        %1584 = vmatprep.subr.mxu0 0.0
        %1585 = vmatpush2.msra.mxu0 0.0
        %1586 = vmatprep.subr.mxu0 0.0
        %1587 = vmatpush2.msra.mxu0 0.0
        %1588 = vmatprep.subr.mxu0 0.0
        %1589 = vmatpush2.msra.mxu0 0.0
        %1590 = vmatprep.subr.mxu0 0.0
        %1591 = vmatpush2.msra.mxu0 0.0
        %1592 = vmatprep.subr.mxu0 0.0
        %1593 = vmatpush2.msra.mxu0 0.0
        %1594 = vmatprep.subr.mxu0 0.0
        %1595 = vmatpush2.msra.mxu0 0.0
        %1596 = vmatprep.subr.mxu0 0.0
        %1597 = vmatpush2.msra.mxu0 0.0
        %1598 = vmatprep.subr.mxu0 0.0
        %1599 = vmatpush2.msra.mxu0 0.0
        %1600 = vmatprep.subr.mxu0 0.0
        %1601 = vmatpush2.msra.mxu0 0.0
        %1602 = vmatprep.subr.mxu0 0.0
        %1603 = vmatpush2.msra.mxu0 0.0
        %1604 = vmatprep.subr.mxu0 0.0
        %1605 = vmatpush2.msra.mxu0 0.0
        %1606 = vmatprep.mubr.f32.mxu0 0.0
        %1607 = vmatmul.mubr.f32.gmra.mxu0 %v1526
        %v1608 = vpop.f32.mrf.mxu0
        %v1609 = vadd.f32 0.0, %v1608
        %v1610 = vpop.f32.mrf.mxu0
        %1611 = vmatprep.mubr.f32.mxu0 0.0
        %1612 = vmatmul.mubr.f32.gmra.mxu0 %v1528
        %v1613 = vpop.f32.mrf.mxu0
        %v1614 = vadd.f32 0.0, %v1613
        %v1615 = vpop.f32.mrf.mxu0
        %1616 = vmatprep.mubr.f32.mxu0 0.0
        %1617 = vmatmul.mubr.f32.gmra.mxu0 %v1530
        %v1618 = vpop.f32.mrf.mxu0
        %v1619 = vadd.f32 0.0, %v1618
        %v1620 = vpop.f32.mrf.mxu0
        %1621 = vmatprep.mubr.f32.mxu0 0.0
        %1622 = vmatmul.mubr.f32.gmra.mxu0 %v1532
        %v1623 = vpop.f32.mrf.mxu0
        %v1624 = vadd.f32 0.0, %v1623
        %v1625 = vpop.f32.mrf.mxu0
        %1626 = vmatprep.mubr.f32.mxu0 0.0
        %1627 = vmatmul.mubr.f32.gmra.mxu0 %v1534
        %v1628 = vpop.f32.mrf.mxu0
        %v1629 = vadd.f32 0.0, %v1628
        %v1630 = vpop.f32.mrf.mxu0
        %1631 = vmatprep.mubr.f32.mxu0 0.0
        %1632 = vmatmul.mubr.f32.gmra.mxu0 %v1536
        %v1633 = vpop.f32.mrf.mxu0
        %v1634 = vadd.f32 0.0, %v1633
        %v1635 = vpop.f32.mrf.mxu0
        %1636 = vmatprep.mubr.f32.mxu0 0.0
        %1637 = vmatmul.mubr.f32.gmra.mxu0 %v1538
        %v1638 = vpop.f32.mrf.mxu0
        %v1639 = vadd.f32 0.0, %v1638
        %v1640 = vpop.f32.mrf.mxu0
        %1641 = vmatprep.mubr.f32.mxu0 0.0
        %1642 = vmatmul.mubr.f32.gmra.mxu0 %v1540
        %v1643 = vpop.f32.mrf.mxu0
        %v1644 = vadd.f32 0.0, %v1643
        %v1645 = vpop.f32.mrf.mxu0
        %1646 = vdwg.mxu0
        %v1647 = vadd.f32 %v1465, %v1609
        %v1648 = vadd.f32 %v1470, %v1614
        %v1649 = vadd.f32 %v1475, %v1619
        %v1650 = vadd.f32 %v1480, %v1624
        %v1651 = vadd.f32 %v1485, %v1629
        %v1652 = vadd.f32 %v1490, %v1634
        %v1653 = vadd.f32 %v1495, %v1639
        %v1654 = vadd.f32 %v1500, %v1644
        %s1655 = scalar_lea.vmem %s2, 2
        %v1656 = vld [vmem:[%s1655] sm:$0x1]
        %v1658 = vlaneseq
        %v1659 = vshrl.u32 %v1658, 7
        %v1660 = vsub.s32 0, %v1659
        %v1661 = vrot.slane %v1656, %v1660
        %v1663 = vadd.f32 %v1647, %v1661
        %v1664 = vadd.f32 %v1648, %v1661
        %v1665 = vadd.f32 %v1649, %v1661
        %v1666 = vadd.f32 %v1650, %v1661
        %v1667 = vadd.f32 %v1651, %v1661
        %v1668 = vadd.f32 %v1652, %v1661
        %v1669 = vadd.f32 %v1653, %v1661
        %v1670 = vadd.f32 %v1654, %v1661
        %1671 = vst.msk [vmem:[#allocation2 + $0x8] sm:$0xff] %vm194, %v221
        %1672 = vst.msk [vmem:[#allocation2 + $0x10] sm:$0xff] %vm194, %v222
        %1673 = vst.msk [vmem:[#allocation2 + $0x18] sm:$0xff] %vm194, %v223
        %1674 = vst.msk [vmem:[#allocation2 + $0x20] sm:$0xff] %vm194, %v224
        %1675 = vst.msk [vmem:[#allocation2 + $0x28] sm:$0xff] %vm194, %v225
        %1676 = vst.msk [vmem:[#allocation2 + $0x30] sm:$0xff] %vm194, %v226
        %1677 = vst.msk [vmem:[#allocation2 + $0x38] sm:$0xff] %vm194, %v227
        %1678 = vst.msk [vmem:[#allocation2 + $0x40] sm:$0xff] %vm194, %v228
        %v1679 = vld [vmem:[#allocation2] sm:$0xff]
        %v1680 = vld [vmem:[#allocation2 + $0x8] sm:$0xff]
        %v1681 = vld [vmem:[#allocation2 + $0x10] sm:$0xff]
        %v1682 = vld [vmem:[#allocation2 + $0x18] sm:$0xff]
        %v1683 = vld [vmem:[#allocation2 + $0x20] sm:$0xff]
        %v1684 = vld [vmem:[#allocation2 + $0x28] sm:$0xff]
        %v1685 = vld [vmem:[#allocation2 + $0x30] sm:$0xff]
        %v1686 = vld [vmem:[#allocation2 + $0x38] sm:$0xff]
        %v1687 = vld [vmem:[#allocation2 + $0x40] sm:$0xff]
        %v1688 = vld [vmem:[#allocation2 + $0x48] sm:$0xff]
        %s1689 = scalar_lea.vmem [#allocation3], 288
        %v1690 = vld [vmem:[%s1689] sm:$0xff]
        %v1691 = vld [vmem:[%s1689 + $0x8] sm:$0xff]
        %v1692 = vld [vmem:[%s1689 + $0x10] sm:$0xff]
        %v1693 = vld [vmem:[%s1689 + $0x18] sm:$0xff]
        %s1694 = scalar_lea.vmem [#allocation3], 320
        %v1695 = vld [vmem:[%s1694] sm:$0xff]
        %v1696 = vld [vmem:[%s1694 + $0x8] sm:$0xff]
        %v1697 = vld [vmem:[%s1694 + $0x10] sm:$0xff]
        %v1698 = vld [vmem:[%s1694 + $0x18] sm:$0xff]
        %v1700 = vsel %vm194, %v1680, 0
        %v1703 = vsel %vm194, %v1681, 0
        %v1706 = vsel %vm194, %v1682, 0
        %v1709 = vsel %vm194, %v1683, 0
        %v1712 = vsel %vm194, %v1684, 0
        %v1715 = vsel %vm194, %v1685, 0
        %v1718 = vsel %vm194, %v1686, 0
        %v1721 = vsel %vm194, %v1687, 0
        %1723 = vmatprep.subr.mxu0 0.0
        %1724 = vmatpush1.msra.mxu0 0.0
        %1725 = vmatprep.subr.mxu0 0.0
        %1726 = vmatpush1.msra.mxu0 0.0
        %1727 = vmatprep.subr.mxu0 0.0
        %1728 = vmatpush1.msra.mxu0 0.0
        %1729 = vmatprep.subr.mxu0 0.0
        %1730 = vmatpush1.msra.mxu0 0.0
        %1731 = vmatprep.subr.mxu0 0.0
        %1732 = vmatpush1.msra.mxu0 0.0
        %1733 = vmatprep.subr.mxu0 0.0
        %1734 = vmatpush1.msra.mxu0 0.0
        %1735 = vmatprep.subr.mxu0 0.0
        %1736 = vmatpush1.msra.mxu0 0.0
        %1737 = vmatprep.subr.mxu0 0.0
        %1738 = vmatpush1.msra.mxu0 0.0
        %1739 = vmatprep.subr.mxu0 0.0
        %1740 = vmatpush1.msra.mxu0 0.0
        %1741 = vmatprep.subr.mxu0 0.0
        %1742 = vmatpush1.msra.mxu0 0.0
        %1743 = vmatprep.subr.mxu0 0.0
        %1744 = vmatpush1.msra.mxu0 0.0
        %1745 = vmatprep.subr.mxu0 0.0
        %1746 = vmatpush1.msra.mxu0 0.0
        %1747 = vmatprep.subr.mxu0 0.0
        %1748 = vmatpush1.msra.mxu0 %v1698
        %1749 = vmatprep.subr.mxu0 0.0
        %1750 = vmatpush1.msra.mxu0 %v1697
        %1751 = vmatprep.subr.mxu0 0.0
        %1752 = vmatpush1.msra.mxu0 %v1696
        %1753 = vmatprep.subr.mxu0 0.0
        %1754 = vmatpush1.msra.mxu0 %v1695
        %1755 = vmatprep.subr.mxu0 0.0
        %1756 = vmatpush2.msra.mxu0 0.0
        %1757 = vmatprep.subr.mxu0 0.0
        %1758 = vmatpush2.msra.mxu0 0.0
        %1759 = vmatprep.subr.mxu0 0.0
        %1760 = vmatpush2.msra.mxu0 0.0
        %1761 = vmatprep.subr.mxu0 0.0
        %1762 = vmatpush2.msra.mxu0 0.0
        %1763 = vmatprep.subr.mxu0 0.0
        %1764 = vmatpush2.msra.mxu0 0.0
        %1765 = vmatprep.subr.mxu0 0.0
        %1766 = vmatpush2.msra.mxu0 0.0
        %1767 = vmatprep.subr.mxu0 0.0
        %1768 = vmatpush2.msra.mxu0 0.0
        %1769 = vmatprep.subr.mxu0 0.0
        %1770 = vmatpush2.msra.mxu0 0.0
        %1771 = vmatprep.subr.mxu0 0.0
        %1772 = vmatpush2.msra.mxu0 0.0
        %1773 = vmatprep.subr.mxu0 0.0
        %1774 = vmatpush2.msra.mxu0 0.0
        %1775 = vmatprep.subr.mxu0 0.0
        %1776 = vmatpush2.msra.mxu0 0.0
        %1777 = vmatprep.subr.mxu0 0.0
        %1778 = vmatpush2.msra.mxu0 0.0
        %1779 = vmatprep.subr.mxu0 0.0
        %1780 = vmatpush2.msra.mxu0 0.0
        %1781 = vmatprep.subr.mxu0 0.0
        %1782 = vmatpush2.msra.mxu0 0.0
        %1783 = vmatprep.subr.mxu0 0.0
        %1784 = vmatpush2.msra.mxu0 0.0
        %1785 = vmatprep.subr.mxu0 0.0
        %1786 = vmatpush2.msra.mxu0 0.0
        %1787 = vmatprep.mubr.f32.mxu0 0.0
        %1788 = vmatmul.mubr.f32.gmra.mxu0 %v1700
        %v1789 = vpop.f32.mrf.mxu0
        %v1790 = vadd.f32 0.0, %v1789
        %v1791 = vpop.f32.mrf.mxu0
        %1792 = vmatprep.mubr.f32.mxu0 0.0
        %1793 = vmatmul.mubr.f32.gmra.mxu0 %v1703
        %v1794 = vpop.f32.mrf.mxu0
        %v1795 = vadd.f32 0.0, %v1794
        %v1796 = vpop.f32.mrf.mxu0
        %1797 = vmatprep.mubr.f32.mxu0 0.0
        %1798 = vmatmul.mubr.f32.gmra.mxu0 %v1706
        %v1799 = vpop.f32.mrf.mxu0
        %v1800 = vadd.f32 0.0, %v1799
        %v1801 = vpop.f32.mrf.mxu0
        %1802 = vmatprep.mubr.f32.mxu0 0.0
        %1803 = vmatmul.mubr.f32.gmra.mxu0 %v1709
        %v1804 = vpop.f32.mrf.mxu0
        %v1805 = vadd.f32 0.0, %v1804
        %v1806 = vpop.f32.mrf.mxu0
        %1807 = vmatprep.mubr.f32.mxu0 0.0
        %1808 = vmatmul.mubr.f32.gmra.mxu0 %v1712
        %v1809 = vpop.f32.mrf.mxu0
        %v1810 = vadd.f32 0.0, %v1809
        %v1811 = vpop.f32.mrf.mxu0
        %1812 = vmatprep.mubr.f32.mxu0 0.0
        %1813 = vmatmul.mubr.f32.gmra.mxu0 %v1715
        %v1814 = vpop.f32.mrf.mxu0
        %v1815 = vadd.f32 0.0, %v1814
        %v1816 = vpop.f32.mrf.mxu0
        %1817 = vmatprep.mubr.f32.mxu0 0.0
        %1818 = vmatmul.mubr.f32.gmra.mxu0 %v1718
        %v1819 = vpop.f32.mrf.mxu0
        %v1820 = vadd.f32 0.0, %v1819
        %v1821 = vpop.f32.mrf.mxu0
        %1822 = vmatprep.mubr.f32.mxu0 0.0
        %1823 = vmatmul.mubr.f32.gmra.mxu0 %v1721
        %v1824 = vpop.f32.mrf.mxu0
        %v1825 = vadd.f32 0.0, %v1824
        %v1826 = vpop.f32.mrf.mxu0
        %1827 = vdwg.mxu0
        %v1829 = vrot.slane %v1679, 7
        %v1830 = vrot.slane %v1680, 7
        %v1831 = vsel %vm386, %v1829, %v1830
        %v1832 = vrot.slane %v1681, 7
        %v1833 = vsel %vm386, %v1830, %v1832
        %v1834 = vrot.slane %v1682, 7
        %v1835 = vsel %vm386, %v1832, %v1834
        %v1836 = vrot.slane %v1683, 7
        %v1837 = vsel %vm386, %v1834, %v1836
        %v1838 = vrot.slane %v1684, 7
        %v1839 = vsel %vm386, %v1836, %v1838
        %v1840 = vrot.slane %v1685, 7
        %v1841 = vsel %vm386, %v1838, %v1840
        %v1842 = vrot.slane %v1686, 7
        %v1843 = vsel %vm386, %v1840, %v1842
        %v1844 = vrot.slane %v1687, 7
        %v1845 = vsel %vm386, %v1842, %v1844
        %v1846 = vsel %vm194, %v1831, 0
        %v1848 = vsel %vm194, %v1833, 0
        %v1850 = vsel %vm194, %v1835, 0
        %v1852 = vsel %vm194, %v1837, 0
        %v1854 = vsel %vm194, %v1839, 0
        %v1856 = vsel %vm194, %v1841, 0
        %v1858 = vsel %vm194, %v1843, 0
        %v1860 = vsel %vm194, %v1845, 0
        %1862 = vmatprep.subr.mxu0 0.0
        %1863 = vmatpush1.msra.mxu0 0.0
        %1864 = vmatprep.subr.mxu0 0.0
        %1865 = vmatpush1.msra.mxu0 0.0
        %1866 = vmatprep.subr.mxu0 0.0
        %1867 = vmatpush1.msra.mxu0 0.0
        %1868 = vmatprep.subr.mxu0 0.0
        %1869 = vmatpush1.msra.mxu0 0.0
        %1870 = vmatprep.subr.mxu0 0.0
        %1871 = vmatpush1.msra.mxu0 0.0
        %1872 = vmatprep.subr.mxu0 0.0
        %1873 = vmatpush1.msra.mxu0 0.0
        %1874 = vmatprep.subr.mxu0 0.0
        %1875 = vmatpush1.msra.mxu0 0.0
        %1876 = vmatprep.subr.mxu0 0.0
        %1877 = vmatpush1.msra.mxu0 0.0
        %1878 = vmatprep.subr.mxu0 0.0
        %1879 = vmatpush1.msra.mxu0 0.0
        %1880 = vmatprep.subr.mxu0 0.0
        %1881 = vmatpush1.msra.mxu0 0.0
        %1882 = vmatprep.subr.mxu0 0.0
        %1883 = vmatpush1.msra.mxu0 0.0
        %1884 = vmatprep.subr.mxu0 0.0
        %1885 = vmatpush1.msra.mxu0 0.0
        %1886 = vmatprep.subr.mxu0 0.0
        %1887 = vmatpush1.msra.mxu0 %v1693
        %1888 = vmatprep.subr.mxu0 0.0
        %1889 = vmatpush1.msra.mxu0 %v1692
        %1890 = vmatprep.subr.mxu0 0.0
        %1891 = vmatpush1.msra.mxu0 %v1691
        %1892 = vmatprep.subr.mxu0 0.0
        %1893 = vmatpush1.msra.mxu0 %v1690
        %1894 = vmatprep.subr.mxu0 0.0
        %1895 = vmatpush2.msra.mxu0 0.0
        %1896 = vmatprep.subr.mxu0 0.0
        %1897 = vmatpush2.msra.mxu0 0.0
        %1898 = vmatprep.subr.mxu0 0.0
        %1899 = vmatpush2.msra.mxu0 0.0
        %1900 = vmatprep.subr.mxu0 0.0
        %1901 = vmatpush2.msra.mxu0 0.0
        %1902 = vmatprep.subr.mxu0 0.0
        %1903 = vmatpush2.msra.mxu0 0.0
        %1904 = vmatprep.subr.mxu0 0.0
        %1905 = vmatpush2.msra.mxu0 0.0
        %1906 = vmatprep.subr.mxu0 0.0
        %1907 = vmatpush2.msra.mxu0 0.0
        %1908 = vmatprep.subr.mxu0 0.0
        %1909 = vmatpush2.msra.mxu0 0.0
        %1910 = vmatprep.subr.mxu0 0.0
        %1911 = vmatpush2.msra.mxu0 0.0
        %1912 = vmatprep.subr.mxu0 0.0
        %1913 = vmatpush2.msra.mxu0 0.0
        %1914 = vmatprep.subr.mxu0 0.0
        %1915 = vmatpush2.msra.mxu0 0.0
        %1916 = vmatprep.subr.mxu0 0.0
        %1917 = vmatpush2.msra.mxu0 0.0
        %1918 = vmatprep.subr.mxu0 0.0
        %1919 = vmatpush2.msra.mxu0 0.0
        %1920 = vmatprep.subr.mxu0 0.0
        %1921 = vmatpush2.msra.mxu0 0.0
        %1922 = vmatprep.subr.mxu0 0.0
        %1923 = vmatpush2.msra.mxu0 0.0
        %1924 = vmatprep.subr.mxu0 0.0
        %1925 = vmatpush2.msra.mxu0 0.0
        %1926 = vmatprep.mubr.f32.mxu0 0.0
        %1927 = vmatmul.mubr.f32.gmra.mxu0 %v1846
        %v1928 = vpop.f32.mrf.mxu0
        %v1929 = vadd.f32 %v1790, %v1928
        %v1930 = vpop.f32.mrf.mxu0
        %1931 = vmatprep.mubr.f32.mxu0 0.0
        %1932 = vmatmul.mubr.f32.gmra.mxu0 %v1848
        %v1933 = vpop.f32.mrf.mxu0
        %v1934 = vadd.f32 %v1795, %v1933
        %v1935 = vpop.f32.mrf.mxu0
        %1936 = vmatprep.mubr.f32.mxu0 0.0
        %1937 = vmatmul.mubr.f32.gmra.mxu0 %v1850
        %v1938 = vpop.f32.mrf.mxu0
        %v1939 = vadd.f32 %v1800, %v1938
        %v1940 = vpop.f32.mrf.mxu0
        %1941 = vmatprep.mubr.f32.mxu0 0.0
        %1942 = vmatmul.mubr.f32.gmra.mxu0 %v1852
        %v1943 = vpop.f32.mrf.mxu0
        %v1944 = vadd.f32 %v1805, %v1943
        %v1945 = vpop.f32.mrf.mxu0
        %1946 = vmatprep.mubr.f32.mxu0 0.0
        %1947 = vmatmul.mubr.f32.gmra.mxu0 %v1854
        %v1948 = vpop.f32.mrf.mxu0
        %v1949 = vadd.f32 %v1810, %v1948
        %v1950 = vpop.f32.mrf.mxu0
        %1951 = vmatprep.mubr.f32.mxu0 0.0
        %1952 = vmatmul.mubr.f32.gmra.mxu0 %v1856
        %v1953 = vpop.f32.mrf.mxu0
        %v1954 = vadd.f32 %v1815, %v1953
        %v1955 = vpop.f32.mrf.mxu0
        %1956 = vmatprep.mubr.f32.mxu0 0.0
        %1957 = vmatmul.mubr.f32.gmra.mxu0 %v1858
        %v1958 = vpop.f32.mrf.mxu0
        %v1959 = vadd.f32 %v1820, %v1958
        %v1960 = vpop.f32.mrf.mxu0
        %1961 = vmatprep.mubr.f32.mxu0 0.0
        %1962 = vmatmul.mubr.f32.gmra.mxu0 %v1860
        %v1963 = vpop.f32.mrf.mxu0
        %v1964 = vadd.f32 %v1825, %v1963
        %v1965 = vpop.f32.mrf.mxu0
        %1966 = vdwg.mxu0
        %s1967 = scalar_lea.vmem [#allocation3], 352
        %v1968 = vld [vmem:[%s1967] sm:$0xff]
        %v1969 = vld [vmem:[%s1967 + $0x8] sm:$0xff]
        %v1970 = vld [vmem:[%s1967 + $0x10] sm:$0xff]
        %v1971 = vld [vmem:[%s1967 + $0x18] sm:$0xff]
        %v1973 = vrot.slane %v1680, 1
        %v1974 = vrot.slane %v1681, 1
        %v1975 = vsel %vm531, %v1973, %v1974
        %v1976 = vrot.slane %v1682, 1
        %v1977 = vsel %vm531, %v1974, %v1976
        %v1978 = vrot.slane %v1683, 1
        %v1979 = vsel %vm531, %v1976, %v1978
        %v1980 = vrot.slane %v1684, 1
        %v1981 = vsel %vm531, %v1978, %v1980
        %v1982 = vrot.slane %v1685, 1
        %v1983 = vsel %vm531, %v1980, %v1982
        %v1984 = vrot.slane %v1686, 1
        %v1985 = vsel %vm531, %v1982, %v1984
        %v1986 = vrot.slane %v1687, 1
        %v1987 = vsel %vm531, %v1984, %v1986
        %v1988 = vrot.slane %v1688, 1
        %v1989 = vsel %vm531, %v1986, %v1988
        %v1990 = vsel %vm194, %v1975, 0
        %v1992 = vsel %vm194, %v1977, 0
        %v1994 = vsel %vm194, %v1979, 0
        %v1996 = vsel %vm194, %v1981, 0
        %v1998 = vsel %vm194, %v1983, 0
        %v2000 = vsel %vm194, %v1985, 0
        %v2002 = vsel %vm194, %v1987, 0
        %v2004 = vsel %vm194, %v1989, 0
        %2006 = vmatprep.subr.mxu0 0.0
        %2007 = vmatpush1.msra.mxu0 0.0
        %2008 = vmatprep.subr.mxu0 0.0
        %2009 = vmatpush1.msra.mxu0 0.0
        %2010 = vmatprep.subr.mxu0 0.0
        %2011 = vmatpush1.msra.mxu0 0.0
        %2012 = vmatprep.subr.mxu0 0.0
        %2013 = vmatpush1.msra.mxu0 0.0
        %2014 = vmatprep.subr.mxu0 0.0
        %2015 = vmatpush1.msra.mxu0 0.0
        %2016 = vmatprep.subr.mxu0 0.0
        %2017 = vmatpush1.msra.mxu0 0.0
        %2018 = vmatprep.subr.mxu0 0.0
        %2019 = vmatpush1.msra.mxu0 0.0
        %2020 = vmatprep.subr.mxu0 0.0
        %2021 = vmatpush1.msra.mxu0 0.0
        %2022 = vmatprep.subr.mxu0 0.0
        %2023 = vmatpush1.msra.mxu0 0.0
        %2024 = vmatprep.subr.mxu0 0.0
        %2025 = vmatpush1.msra.mxu0 0.0
        %2026 = vmatprep.subr.mxu0 0.0
        %2027 = vmatpush1.msra.mxu0 0.0
        %2028 = vmatprep.subr.mxu0 0.0
        %2029 = vmatpush1.msra.mxu0 0.0
        %2030 = vmatprep.subr.mxu0 0.0
        %2031 = vmatpush1.msra.mxu0 %v1971
        %2032 = vmatprep.subr.mxu0 0.0
        %2033 = vmatpush1.msra.mxu0 %v1970
        %2034 = vmatprep.subr.mxu0 0.0
        %2035 = vmatpush1.msra.mxu0 %v1969
        %2036 = vmatprep.subr.mxu0 0.0
        %2037 = vmatpush1.msra.mxu0 %v1968
        %2038 = vmatprep.subr.mxu0 0.0
        %2039 = vmatpush2.msra.mxu0 0.0
        %2040 = vmatprep.subr.mxu0 0.0
        %2041 = vmatpush2.msra.mxu0 0.0
        %2042 = vmatprep.subr.mxu0 0.0
        %2043 = vmatpush2.msra.mxu0 0.0
        %2044 = vmatprep.subr.mxu0 0.0
        %2045 = vmatpush2.msra.mxu0 0.0
        %2046 = vmatprep.subr.mxu0 0.0
        %2047 = vmatpush2.msra.mxu0 0.0
        %2048 = vmatprep.subr.mxu0 0.0
        %2049 = vmatpush2.msra.mxu0 0.0
        %2050 = vmatprep.subr.mxu0 0.0
        %2051 = vmatpush2.msra.mxu0 0.0
        %2052 = vmatprep.subr.mxu0 0.0
        %2053 = vmatpush2.msra.mxu0 0.0
        %2054 = vmatprep.subr.mxu0 0.0
        %2055 = vmatpush2.msra.mxu0 0.0
        %2056 = vmatprep.subr.mxu0 0.0
        %2057 = vmatpush2.msra.mxu0 0.0
        %2058 = vmatprep.subr.mxu0 0.0
        %2059 = vmatpush2.msra.mxu0 0.0
        %2060 = vmatprep.subr.mxu0 0.0
        %2061 = vmatpush2.msra.mxu0 0.0
        %2062 = vmatprep.subr.mxu0 0.0
        %2063 = vmatpush2.msra.mxu0 0.0
        %2064 = vmatprep.subr.mxu0 0.0
        %2065 = vmatpush2.msra.mxu0 0.0
        %2066 = vmatprep.subr.mxu0 0.0
        %2067 = vmatpush2.msra.mxu0 0.0
        %2068 = vmatprep.subr.mxu0 0.0
        %2069 = vmatpush2.msra.mxu0 0.0
        %2070 = vmatprep.mubr.f32.mxu0 0.0
        %2071 = vmatmul.mubr.f32.gmra.mxu0 %v1990
        %v2072 = vpop.f32.mrf.mxu0
        %v2073 = vadd.f32 0.0, %v2072
        %v2074 = vpop.f32.mrf.mxu0
        %2075 = vmatprep.mubr.f32.mxu0 0.0
        %2076 = vmatmul.mubr.f32.gmra.mxu0 %v1992
        %v2077 = vpop.f32.mrf.mxu0
        %v2078 = vadd.f32 0.0, %v2077
        %v2079 = vpop.f32.mrf.mxu0
        %2080 = vmatprep.mubr.f32.mxu0 0.0
        %2081 = vmatmul.mubr.f32.gmra.mxu0 %v1994
        %v2082 = vpop.f32.mrf.mxu0
        %v2083 = vadd.f32 0.0, %v2082
        %v2084 = vpop.f32.mrf.mxu0
        %2085 = vmatprep.mubr.f32.mxu0 0.0
        %2086 = vmatmul.mubr.f32.gmra.mxu0 %v1996
        %v2087 = vpop.f32.mrf.mxu0
        %v2088 = vadd.f32 0.0, %v2087
        %v2089 = vpop.f32.mrf.mxu0
        %2090 = vmatprep.mubr.f32.mxu0 0.0
        %2091 = vmatmul.mubr.f32.gmra.mxu0 %v1998
        %v2092 = vpop.f32.mrf.mxu0
        %v2093 = vadd.f32 0.0, %v2092
        %v2094 = vpop.f32.mrf.mxu0
        %2095 = vmatprep.mubr.f32.mxu0 0.0
        %2096 = vmatmul.mubr.f32.gmra.mxu0 %v2000
        %v2097 = vpop.f32.mrf.mxu0
        %v2098 = vadd.f32 0.0, %v2097
        %v2099 = vpop.f32.mrf.mxu0
        %2100 = vmatprep.mubr.f32.mxu0 0.0
        %2101 = vmatmul.mubr.f32.gmra.mxu0 %v2002
        %v2102 = vpop.f32.mrf.mxu0
        %v2103 = vadd.f32 0.0, %v2102
        %v2104 = vpop.f32.mrf.mxu0
        %2105 = vmatprep.mubr.f32.mxu0 0.0
        %2106 = vmatmul.mubr.f32.gmra.mxu0 %v2004
        %v2107 = vpop.f32.mrf.mxu0
        %v2108 = vadd.f32 0.0, %v2107
        %v2109 = vpop.f32.mrf.mxu0
        %2110 = vdwg.mxu0
        %v2111 = vadd.f32 %v1929, %v2073
        %v2112 = vadd.f32 %v1934, %v2078
        %v2113 = vadd.f32 %v1939, %v2083
        %v2114 = vadd.f32 %v1944, %v2088
        %v2115 = vadd.f32 %v1949, %v2093
        %v2116 = vadd.f32 %v1954, %v2098
        %v2117 = vadd.f32 %v1959, %v2103
        %v2118 = vadd.f32 %v1964, %v2108
        %s2119 = scalar_lea.vmem %s2, 3
        %v2120 = vld [vmem:[%s2119] sm:$0x1]
        %v2122 = vlaneseq
        %v2123 = vshrl.u32 %v2122, 7
        %v2124 = vsub.s32 0, %v2123
        %v2125 = vrot.slane %v2120, %v2124
        %v2127 = vadd.f32 %v2111, %v2125
        %v2128 = vadd.f32 %v2112, %v2125
        %v2129 = vadd.f32 %v2113, %v2125
        %v2130 = vadd.f32 %v2114, %v2125
        %v2131 = vadd.f32 %v2115, %v2125
        %v2132 = vadd.f32 %v2116, %v2125
        %v2133 = vadd.f32 %v2117, %v2125
        %v2134 = vadd.f32 %v2118, %v2125
        %vm2135 = vcmp.gt.f32.partialorder %v2127, 0.0
        %vm2136 = vcmp.gt.f32.partialorder %v2128, 0.0
        %vm2137 = vcmp.gt.f32.partialorder %v2129, 0.0
        %vm2138 = vcmp.gt.f32.partialorder %v2130, 0.0
        %vm2139 = vcmp.gt.f32.partialorder %v2131, 0.0
        %vm2140 = vcmp.gt.f32.partialorder %v2132, 0.0
        %vm2141 = vcmp.gt.f32.partialorder %v2133, 0.0
        %vm2142 = vcmp.gt.f32.partialorder %v2134, 0.0
        %v2143 = vmul.f32 %v2127, 0.1
        %v2144 = vmul.f32 %v2128, 0.1
        %v2145 = vmul.f32 %v2129, 0.1
        %v2146 = vmul.f32 %v2130, 0.1
        %v2147 = vmul.f32 %v2131, 0.1
        %v2148 = vmul.f32 %v2132, 0.1
        %v2149 = vmul.f32 %v2133, 0.1
        %v2150 = vmul.f32 %v2134, 0.1
        %v2151 = vsel %vm2135, %v2127, %v2143
        %v2152 = vsel %vm2136, %v2128, %v2144
        %v2153 = vsel %vm2137, %v2129, %v2145
        %v2154 = vsel %vm2138, %v2130, %v2146
        %v2155 = vsel %vm2139, %v2131, %v2147
        %v2156 = vsel %vm2140, %v2132, %v2148
        %v2157 = vsel %vm2141, %v2133, %v2149
        %v2158 = vsel %vm2142, %v2134, %v2150
        %2159 = vst.msk [vmem:[#allocation2 + $0x8] sm:$0xff] %vm194, %v2151
        %2160 = vst.msk [vmem:[#allocation2 + $0x10] sm:$0xff] %vm194, %v2152
        %2161 = vst.msk [vmem:[#allocation2 + $0x18] sm:$0xff] %vm194, %v2153
        %2162 = vst.msk [vmem:[#allocation2 + $0x20] sm:$0xff] %vm194, %v2154
        %2163 = vst.msk [vmem:[#allocation2 + $0x28] sm:$0xff] %vm194, %v2155
        %2164 = vst.msk [vmem:[#allocation2 + $0x30] sm:$0xff] %vm194, %v2156
        %2165 = vst.msk [vmem:[#allocation2 + $0x38] sm:$0xff] %vm194, %v2157
        %2166 = vst.msk [vmem:[#allocation2 + $0x40] sm:$0xff] %vm194, %v2158
        %v2167 = vld [vmem:[#allocation2] sm:$0xff]
        %v2168 = vld [vmem:[#allocation2 + $0x8] sm:$0xff]
        %v2169 = vld [vmem:[#allocation2 + $0x10] sm:$0xff]
        %v2170 = vld [vmem:[#allocation2 + $0x18] sm:$0xff]
        %v2171 = vld [vmem:[#allocation2 + $0x20] sm:$0xff]
        %v2172 = vld [vmem:[#allocation2 + $0x28] sm:$0xff]
        %v2173 = vld [vmem:[#allocation2 + $0x30] sm:$0xff]
        %v2174 = vld [vmem:[#allocation2 + $0x38] sm:$0xff]
        %v2175 = vld [vmem:[#allocation2 + $0x40] sm:$0xff]
        %v2176 = vld [vmem:[#allocation2 + $0x48] sm:$0xff]
        %s2177 = scalar_lea.vmem [#allocation3], 384
        %v2178 = vld [vmem:[%s2177] sm:$0xff]
        %v2179 = vld [vmem:[%s2177 + $0x8] sm:$0xff]
        %v2180 = vld [vmem:[%s2177 + $0x10] sm:$0xff]
        %v2181 = vld [vmem:[%s2177 + $0x18] sm:$0xff]
        %s2182 = scalar_lea.vmem [#allocation3], 416
        %v2183 = vld [vmem:[%s2182] sm:$0xff]
        %v2184 = vld [vmem:[%s2182 + $0x8] sm:$0xff]
        %v2185 = vld [vmem:[%s2182 + $0x10] sm:$0xff]
        %v2186 = vld [vmem:[%s2182 + $0x18] sm:$0xff]
        %v2188 = vsel %vm194, %v2168, 0
        %v2191 = vsel %vm194, %v2169, 0
        %v2194 = vsel %vm194, %v2170, 0
        %v2197 = vsel %vm194, %v2171, 0
        %v2200 = vsel %vm194, %v2172, 0
        %v2203 = vsel %vm194, %v2173, 0
        %v2206 = vsel %vm194, %v2174, 0
        %v2209 = vsel %vm194, %v2175, 0
        %2211 = vmatprep.subr.mxu0 0.0
        %2212 = vmatpush1.msra.mxu0 0.0
        %2213 = vmatprep.subr.mxu0 0.0
        %2214 = vmatpush1.msra.mxu0 0.0
        %2215 = vmatprep.subr.mxu0 0.0
        %2216 = vmatpush1.msra.mxu0 0.0
        %2217 = vmatprep.subr.mxu0 0.0
        %2218 = vmatpush1.msra.mxu0 0.0
        %2219 = vmatprep.subr.mxu0 0.0
        %2220 = vmatpush1.msra.mxu0 0.0
        %2221 = vmatprep.subr.mxu0 0.0
        %2222 = vmatpush1.msra.mxu0 0.0
        %2223 = vmatprep.subr.mxu0 0.0
        %2224 = vmatpush1.msra.mxu0 0.0
        %2225 = vmatprep.subr.mxu0 0.0
        %2226 = vmatpush1.msra.mxu0 0.0
        %2227 = vmatprep.subr.mxu0 0.0
        %2228 = vmatpush1.msra.mxu0 0.0
        %2229 = vmatprep.subr.mxu0 0.0
        %2230 = vmatpush1.msra.mxu0 0.0
        %2231 = vmatprep.subr.mxu0 0.0
        %2232 = vmatpush1.msra.mxu0 0.0
        %2233 = vmatprep.subr.mxu0 0.0
        %2234 = vmatpush1.msra.mxu0 0.0
        %2235 = vmatprep.subr.mxu0 0.0
        %2236 = vmatpush1.msra.mxu0 %v2186
        %2237 = vmatprep.subr.mxu0 0.0
        %2238 = vmatpush1.msra.mxu0 %v2185
        %2239 = vmatprep.subr.mxu0 0.0
        %2240 = vmatpush1.msra.mxu0 %v2184
        %2241 = vmatprep.subr.mxu0 0.0
        %2242 = vmatpush1.msra.mxu0 %v2183
        %2243 = vmatprep.subr.mxu0 0.0
        %2244 = vmatpush2.msra.mxu0 0.0
        %2245 = vmatprep.subr.mxu0 0.0
        %2246 = vmatpush2.msra.mxu0 0.0
        %2247 = vmatprep.subr.mxu0 0.0
        %2248 = vmatpush2.msra.mxu0 0.0
        %2249 = vmatprep.subr.mxu0 0.0
        %2250 = vmatpush2.msra.mxu0 0.0
        %2251 = vmatprep.subr.mxu0 0.0
        %2252 = vmatpush2.msra.mxu0 0.0
        %2253 = vmatprep.subr.mxu0 0.0
        %2254 = vmatpush2.msra.mxu0 0.0
        %2255 = vmatprep.subr.mxu0 0.0
        %2256 = vmatpush2.msra.mxu0 0.0
        %2257 = vmatprep.subr.mxu0 0.0
        %2258 = vmatpush2.msra.mxu0 0.0
        %2259 = vmatprep.subr.mxu0 0.0
        %2260 = vmatpush2.msra.mxu0 0.0
        %2261 = vmatprep.subr.mxu0 0.0
        %2262 = vmatpush2.msra.mxu0 0.0
        %2263 = vmatprep.subr.mxu0 0.0
        %2264 = vmatpush2.msra.mxu0 0.0
        %2265 = vmatprep.subr.mxu0 0.0
        %2266 = vmatpush2.msra.mxu0 0.0
        %2267 = vmatprep.subr.mxu0 0.0
        %2268 = vmatpush2.msra.mxu0 0.0
        %2269 = vmatprep.subr.mxu0 0.0
        %2270 = vmatpush2.msra.mxu0 0.0
        %2271 = vmatprep.subr.mxu0 0.0
        %2272 = vmatpush2.msra.mxu0 0.0
        %2273 = vmatprep.subr.mxu0 0.0
        %2274 = vmatpush2.msra.mxu0 0.0
        %2275 = vmatprep.mubr.f32.mxu0 0.0
        %2276 = vmatmul.mubr.f32.gmra.mxu0 %v2188
        %v2277 = vpop.f32.mrf.mxu0
        %v2278 = vadd.f32 0.0, %v2277
        %v2279 = vpop.f32.mrf.mxu0
        %2280 = vmatprep.mubr.f32.mxu0 0.0
        %2281 = vmatmul.mubr.f32.gmra.mxu0 %v2191
        %v2282 = vpop.f32.mrf.mxu0
        %v2283 = vadd.f32 0.0, %v2282
        %v2284 = vpop.f32.mrf.mxu0
        %2285 = vmatprep.mubr.f32.mxu0 0.0
        %2286 = vmatmul.mubr.f32.gmra.mxu0 %v2194
        %v2287 = vpop.f32.mrf.mxu0
        %v2288 = vadd.f32 0.0, %v2287
        %v2289 = vpop.f32.mrf.mxu0
        %2290 = vmatprep.mubr.f32.mxu0 0.0
        %2291 = vmatmul.mubr.f32.gmra.mxu0 %v2197
        %v2292 = vpop.f32.mrf.mxu0
        %v2293 = vadd.f32 0.0, %v2292
        %v2294 = vpop.f32.mrf.mxu0
        %2295 = vmatprep.mubr.f32.mxu0 0.0
        %2296 = vmatmul.mubr.f32.gmra.mxu0 %v2200
        %v2297 = vpop.f32.mrf.mxu0
        %v2298 = vadd.f32 0.0, %v2297
        %v2299 = vpop.f32.mrf.mxu0
        %2300 = vmatprep.mubr.f32.mxu0 0.0
        %2301 = vmatmul.mubr.f32.gmra.mxu0 %v2203
        %v2302 = vpop.f32.mrf.mxu0
        %v2303 = vadd.f32 0.0, %v2302
        %v2304 = vpop.f32.mrf.mxu0
        %2305 = vmatprep.mubr.f32.mxu0 0.0
        %2306 = vmatmul.mubr.f32.gmra.mxu0 %v2206
        %v2307 = vpop.f32.mrf.mxu0
        %v2308 = vadd.f32 0.0, %v2307
        %v2309 = vpop.f32.mrf.mxu0
        %2310 = vmatprep.mubr.f32.mxu0 0.0
        %2311 = vmatmul.mubr.f32.gmra.mxu0 %v2209
        %v2312 = vpop.f32.mrf.mxu0
        %v2313 = vadd.f32 0.0, %v2312
        %v2314 = vpop.f32.mrf.mxu0
        %2315 = vdwg.mxu0
        %v2317 = vrot.slane %v2167, 5
        %v2318 = vrot.slane %v2168, 5
        %v2319 = vsel %vm875, %v2317, %v2318
        %v2320 = vrot.slane %v2169, 5
        %v2321 = vsel %vm875, %v2318, %v2320
        %v2322 = vrot.slane %v2170, 5
        %v2323 = vsel %vm875, %v2320, %v2322
        %v2324 = vrot.slane %v2171, 5
        %v2325 = vsel %vm875, %v2322, %v2324
        %v2326 = vrot.slane %v2172, 5
        %v2327 = vsel %vm875, %v2324, %v2326
        %v2328 = vrot.slane %v2173, 5
        %v2329 = vsel %vm875, %v2326, %v2328
        %v2330 = vrot.slane %v2174, 5
        %v2331 = vsel %vm875, %v2328, %v2330
        %v2332 = vrot.slane %v2175, 5
        %v2333 = vsel %vm875, %v2330, %v2332
        %v2334 = vsel %vm194, %v2319, 0
        %v2336 = vsel %vm194, %v2321, 0
        %v2338 = vsel %vm194, %v2323, 0
        %v2340 = vsel %vm194, %v2325, 0
        %v2342 = vsel %vm194, %v2327, 0
        %v2344 = vsel %vm194, %v2329, 0
        %v2346 = vsel %vm194, %v2331, 0
        %v2348 = vsel %vm194, %v2333, 0
        %2350 = vmatprep.subr.mxu0 0.0
        %2351 = vmatpush1.msra.mxu0 0.0
        %2352 = vmatprep.subr.mxu0 0.0
        %2353 = vmatpush1.msra.mxu0 0.0
        %2354 = vmatprep.subr.mxu0 0.0
        %2355 = vmatpush1.msra.mxu0 0.0
        %2356 = vmatprep.subr.mxu0 0.0
        %2357 = vmatpush1.msra.mxu0 0.0
        %2358 = vmatprep.subr.mxu0 0.0
        %2359 = vmatpush1.msra.mxu0 0.0
        %2360 = vmatprep.subr.mxu0 0.0
        %2361 = vmatpush1.msra.mxu0 0.0
        %2362 = vmatprep.subr.mxu0 0.0
        %2363 = vmatpush1.msra.mxu0 0.0
        %2364 = vmatprep.subr.mxu0 0.0
        %2365 = vmatpush1.msra.mxu0 0.0
        %2366 = vmatprep.subr.mxu0 0.0
        %2367 = vmatpush1.msra.mxu0 0.0
        %2368 = vmatprep.subr.mxu0 0.0
        %2369 = vmatpush1.msra.mxu0 0.0
        %2370 = vmatprep.subr.mxu0 0.0
        %2371 = vmatpush1.msra.mxu0 0.0
        %2372 = vmatprep.subr.mxu0 0.0
        %2373 = vmatpush1.msra.mxu0 0.0
        %2374 = vmatprep.subr.mxu0 0.0
        %2375 = vmatpush1.msra.mxu0 %v2181
        %2376 = vmatprep.subr.mxu0 0.0
        %2377 = vmatpush1.msra.mxu0 %v2180
        %2378 = vmatprep.subr.mxu0 0.0
        %2379 = vmatpush1.msra.mxu0 %v2179
        %2380 = vmatprep.subr.mxu0 0.0
        %2381 = vmatpush1.msra.mxu0 %v2178
        %2382 = vmatprep.subr.mxu0 0.0
        %2383 = vmatpush2.msra.mxu0 0.0
        %2384 = vmatprep.subr.mxu0 0.0
        %2385 = vmatpush2.msra.mxu0 0.0
        %2386 = vmatprep.subr.mxu0 0.0
        %2387 = vmatpush2.msra.mxu0 0.0
        %2388 = vmatprep.subr.mxu0 0.0
        %2389 = vmatpush2.msra.mxu0 0.0
        %2390 = vmatprep.subr.mxu0 0.0
        %2391 = vmatpush2.msra.mxu0 0.0
        %2392 = vmatprep.subr.mxu0 0.0
        %2393 = vmatpush2.msra.mxu0 0.0
        %2394 = vmatprep.subr.mxu0 0.0
        %2395 = vmatpush2.msra.mxu0 0.0
        %2396 = vmatprep.subr.mxu0 0.0
        %2397 = vmatpush2.msra.mxu0 0.0
        %2398 = vmatprep.subr.mxu0 0.0
        %2399 = vmatpush2.msra.mxu0 0.0
        %2400 = vmatprep.subr.mxu0 0.0
        %2401 = vmatpush2.msra.mxu0 0.0
        %2402 = vmatprep.subr.mxu0 0.0
        %2403 = vmatpush2.msra.mxu0 0.0
        %2404 = vmatprep.subr.mxu0 0.0
        %2405 = vmatpush2.msra.mxu0 0.0
        %2406 = vmatprep.subr.mxu0 0.0
        %2407 = vmatpush2.msra.mxu0 0.0
        %2408 = vmatprep.subr.mxu0 0.0
        %2409 = vmatpush2.msra.mxu0 0.0
        %2410 = vmatprep.subr.mxu0 0.0
        %2411 = vmatpush2.msra.mxu0 0.0
        %2412 = vmatprep.subr.mxu0 0.0
        %2413 = vmatpush2.msra.mxu0 0.0
        %2414 = vmatprep.mubr.f32.mxu0 0.0
        %2415 = vmatmul.mubr.f32.gmra.mxu0 %v2334
        %v2416 = vpop.f32.mrf.mxu0
        %v2417 = vadd.f32 %v2278, %v2416
        %v2418 = vpop.f32.mrf.mxu0
        %2419 = vmatprep.mubr.f32.mxu0 0.0
        %2420 = vmatmul.mubr.f32.gmra.mxu0 %v2336
        %v2421 = vpop.f32.mrf.mxu0
        %v2422 = vadd.f32 %v2283, %v2421
        %v2423 = vpop.f32.mrf.mxu0
        %2424 = vmatprep.mubr.f32.mxu0 0.0
        %2425 = vmatmul.mubr.f32.gmra.mxu0 %v2338
        %v2426 = vpop.f32.mrf.mxu0
        %v2427 = vadd.f32 %v2288, %v2426
        %v2428 = vpop.f32.mrf.mxu0
        %2429 = vmatprep.mubr.f32.mxu0 0.0
        %2430 = vmatmul.mubr.f32.gmra.mxu0 %v2340
        %v2431 = vpop.f32.mrf.mxu0
        %v2432 = vadd.f32 %v2293, %v2431
        %v2433 = vpop.f32.mrf.mxu0
        %2434 = vmatprep.mubr.f32.mxu0 0.0
        %2435 = vmatmul.mubr.f32.gmra.mxu0 %v2342
        %v2436 = vpop.f32.mrf.mxu0
        %v2437 = vadd.f32 %v2298, %v2436
        %v2438 = vpop.f32.mrf.mxu0
        %2439 = vmatprep.mubr.f32.mxu0 0.0
        %2440 = vmatmul.mubr.f32.gmra.mxu0 %v2344
        %v2441 = vpop.f32.mrf.mxu0
        %v2442 = vadd.f32 %v2303, %v2441
        %v2443 = vpop.f32.mrf.mxu0
        %2444 = vmatprep.mubr.f32.mxu0 0.0
        %2445 = vmatmul.mubr.f32.gmra.mxu0 %v2346
        %v2446 = vpop.f32.mrf.mxu0
        %v2447 = vadd.f32 %v2308, %v2446
        %v2448 = vpop.f32.mrf.mxu0
        %2449 = vmatprep.mubr.f32.mxu0 0.0
        %2450 = vmatmul.mubr.f32.gmra.mxu0 %v2348
        %v2451 = vpop.f32.mrf.mxu0
        %v2452 = vadd.f32 %v2313, %v2451
        %v2453 = vpop.f32.mrf.mxu0
        %2454 = vdwg.mxu0
        %s2455 = scalar_lea.vmem [#allocation3], 448
        %v2456 = vld [vmem:[%s2455] sm:$0xff]
        %v2457 = vld [vmem:[%s2455 + $0x8] sm:$0xff]
        %v2458 = vld [vmem:[%s2455 + $0x10] sm:$0xff]
        %v2459 = vld [vmem:[%s2455 + $0x18] sm:$0xff]
        %v2461 = vrot.slane %v2168, 3
        %v2462 = vrot.slane %v2169, 3
        %v2463 = vsel %vm1020, %v2461, %v2462
        %v2464 = vrot.slane %v2170, 3
        %v2465 = vsel %vm1020, %v2462, %v2464
        %v2466 = vrot.slane %v2171, 3
        %v2467 = vsel %vm1020, %v2464, %v2466
        %v2468 = vrot.slane %v2172, 3
        %v2469 = vsel %vm1020, %v2466, %v2468
        %v2470 = vrot.slane %v2173, 3
        %v2471 = vsel %vm1020, %v2468, %v2470
        %v2472 = vrot.slane %v2174, 3
        %v2473 = vsel %vm1020, %v2470, %v2472
        %v2474 = vrot.slane %v2175, 3
        %v2475 = vsel %vm1020, %v2472, %v2474
        %v2476 = vrot.slane %v2176, 3
        %v2477 = vsel %vm1020, %v2474, %v2476
        %v2478 = vsel %vm194, %v2463, 0
        %v2480 = vsel %vm194, %v2465, 0
        %v2482 = vsel %vm194, %v2467, 0
        %v2484 = vsel %vm194, %v2469, 0
        %v2486 = vsel %vm194, %v2471, 0
        %v2488 = vsel %vm194, %v2473, 0
        %v2490 = vsel %vm194, %v2475, 0
        %v2492 = vsel %vm194, %v2477, 0
        %2494 = vmatprep.subr.mxu0 0.0
        %2495 = vmatpush1.msra.mxu0 0.0
        %2496 = vmatprep.subr.mxu0 0.0
        %2497 = vmatpush1.msra.mxu0 0.0
        %2498 = vmatprep.subr.mxu0 0.0
        %2499 = vmatpush1.msra.mxu0 0.0
        %2500 = vmatprep.subr.mxu0 0.0
        %2501 = vmatpush1.msra.mxu0 0.0
        %2502 = vmatprep.subr.mxu0 0.0
        %2503 = vmatpush1.msra.mxu0 0.0
        %2504 = vmatprep.subr.mxu0 0.0
        %2505 = vmatpush1.msra.mxu0 0.0
        %2506 = vmatprep.subr.mxu0 0.0
        %2507 = vmatpush1.msra.mxu0 0.0
        %2508 = vmatprep.subr.mxu0 0.0
        %2509 = vmatpush1.msra.mxu0 0.0
        %2510 = vmatprep.subr.mxu0 0.0
        %2511 = vmatpush1.msra.mxu0 0.0
        %2512 = vmatprep.subr.mxu0 0.0
        %2513 = vmatpush1.msra.mxu0 0.0
        %2514 = vmatprep.subr.mxu0 0.0
        %2515 = vmatpush1.msra.mxu0 0.0
        %2516 = vmatprep.subr.mxu0 0.0
        %2517 = vmatpush1.msra.mxu0 0.0
        %2518 = vmatprep.subr.mxu0 0.0
        %2519 = vmatpush1.msra.mxu0 %v2459
        %2520 = vmatprep.subr.mxu0 0.0
        %2521 = vmatpush1.msra.mxu0 %v2458
        %2522 = vmatprep.subr.mxu0 0.0
        %2523 = vmatpush1.msra.mxu0 %v2457
        %2524 = vmatprep.subr.mxu0 0.0
        %2525 = vmatpush1.msra.mxu0 %v2456
        %2526 = vmatprep.subr.mxu0 0.0
        %2527 = vmatpush2.msra.mxu0 0.0
        %2528 = vmatprep.subr.mxu0 0.0
        %2529 = vmatpush2.msra.mxu0 0.0
        %2530 = vmatprep.subr.mxu0 0.0
        %2531 = vmatpush2.msra.mxu0 0.0
        %2532 = vmatprep.subr.mxu0 0.0
        %2533 = vmatpush2.msra.mxu0 0.0
        %2534 = vmatprep.subr.mxu0 0.0
        %2535 = vmatpush2.msra.mxu0 0.0
        %2536 = vmatprep.subr.mxu0 0.0
        %2537 = vmatpush2.msra.mxu0 0.0
        %2538 = vmatprep.subr.mxu0 0.0
        %2539 = vmatpush2.msra.mxu0 0.0
        %2540 = vmatprep.subr.mxu0 0.0
        %2541 = vmatpush2.msra.mxu0 0.0
        %2542 = vmatprep.subr.mxu0 0.0
        %2543 = vmatpush2.msra.mxu0 0.0
        %2544 = vmatprep.subr.mxu0 0.0
        %2545 = vmatpush2.msra.mxu0 0.0
        %2546 = vmatprep.subr.mxu0 0.0
        %2547 = vmatpush2.msra.mxu0 0.0
        %2548 = vmatprep.subr.mxu0 0.0
        %2549 = vmatpush2.msra.mxu0 0.0
        %2550 = vmatprep.subr.mxu0 0.0
        %2551 = vmatpush2.msra.mxu0 0.0
        %2552 = vmatprep.subr.mxu0 0.0
        %2553 = vmatpush2.msra.mxu0 0.0
        %2554 = vmatprep.subr.mxu0 0.0
        %2555 = vmatpush2.msra.mxu0 0.0
        %2556 = vmatprep.subr.mxu0 0.0
        %2557 = vmatpush2.msra.mxu0 0.0
        %2558 = vmatprep.mubr.f32.mxu0 0.0
        %2559 = vmatmul.mubr.f32.gmra.mxu0 %v2478
        %v2560 = vpop.f32.mrf.mxu0
        %v2561 = vadd.f32 0.0, %v2560
        %v2562 = vpop.f32.mrf.mxu0
        %2563 = vmatprep.mubr.f32.mxu0 0.0
        %2564 = vmatmul.mubr.f32.gmra.mxu0 %v2480
        %v2565 = vpop.f32.mrf.mxu0
        %v2566 = vadd.f32 0.0, %v2565
        %v2567 = vpop.f32.mrf.mxu0
        %2568 = vmatprep.mubr.f32.mxu0 0.0
        %2569 = vmatmul.mubr.f32.gmra.mxu0 %v2482
        %v2570 = vpop.f32.mrf.mxu0
        %v2571 = vadd.f32 0.0, %v2570
        %v2572 = vpop.f32.mrf.mxu0
        %2573 = vmatprep.mubr.f32.mxu0 0.0
        %2574 = vmatmul.mubr.f32.gmra.mxu0 %v2484
        %v2575 = vpop.f32.mrf.mxu0
        %v2576 = vadd.f32 0.0, %v2575
        %v2577 = vpop.f32.mrf.mxu0
        %2578 = vmatprep.mubr.f32.mxu0 0.0
        %2579 = vmatmul.mubr.f32.gmra.mxu0 %v2486
        %v2580 = vpop.f32.mrf.mxu0
        %v2581 = vadd.f32 0.0, %v2580
        %v2582 = vpop.f32.mrf.mxu0
        %2583 = vmatprep.mubr.f32.mxu0 0.0
        %2584 = vmatmul.mubr.f32.gmra.mxu0 %v2488
        %v2585 = vpop.f32.mrf.mxu0
        %v2586 = vadd.f32 0.0, %v2585
        %v2587 = vpop.f32.mrf.mxu0
        %2588 = vmatprep.mubr.f32.mxu0 0.0
        %2589 = vmatmul.mubr.f32.gmra.mxu0 %v2490
        %v2590 = vpop.f32.mrf.mxu0
        %v2591 = vadd.f32 0.0, %v2590
        %v2592 = vpop.f32.mrf.mxu0
        %2593 = vmatprep.mubr.f32.mxu0 0.0
        %2594 = vmatmul.mubr.f32.gmra.mxu0 %v2492
        %v2595 = vpop.f32.mrf.mxu0
        %v2596 = vadd.f32 0.0, %v2595
        %v2597 = vpop.f32.mrf.mxu0
        %2598 = vdwg.mxu0
        %v2599 = vadd.f32 %v2417, %v2561
        %v2600 = vadd.f32 %v2422, %v2566
        %v2601 = vadd.f32 %v2427, %v2571
        %v2602 = vadd.f32 %v2432, %v2576
        %v2603 = vadd.f32 %v2437, %v2581
        %v2604 = vadd.f32 %v2442, %v2586
        %v2605 = vadd.f32 %v2447, %v2591
        %v2606 = vadd.f32 %v2452, %v2596
        %s2607 = scalar_lea.vmem %s2, 4
        %v2608 = vld [vmem:[%s2607] sm:$0x1]
        %v2610 = vlaneseq
        %v2611 = vshrl.u32 %v2610, 7
        %v2612 = vsub.s32 0, %v2611
        %v2613 = vrot.slane %v2608, %v2612
        %v2615 = vadd.f32 %v2599, %v2613
        %v2616 = vadd.f32 %v2600, %v2613
        %v2617 = vadd.f32 %v2601, %v2613
        %v2618 = vadd.f32 %v2602, %v2613
        %v2619 = vadd.f32 %v2603, %v2613
        %v2620 = vadd.f32 %v2604, %v2613
        %v2621 = vadd.f32 %v2605, %v2613
        %v2622 = vadd.f32 %v2606, %v2613
        %vm2623 = vcmp.gt.f32.partialorder %v2615, 0.0
        %vm2624 = vcmp.gt.f32.partialorder %v2616, 0.0
        %vm2625 = vcmp.gt.f32.partialorder %v2617, 0.0
        %vm2626 = vcmp.gt.f32.partialorder %v2618, 0.0
        %vm2627 = vcmp.gt.f32.partialorder %v2619, 0.0
        %vm2628 = vcmp.gt.f32.partialorder %v2620, 0.0
        %vm2629 = vcmp.gt.f32.partialorder %v2621, 0.0
        %vm2630 = vcmp.gt.f32.partialorder %v2622, 0.0
        %v2631 = vmul.f32 %v2615, 0.1
        %v2632 = vmul.f32 %v2616, 0.1
        %v2633 = vmul.f32 %v2617, 0.1
        %v2634 = vmul.f32 %v2618, 0.1
        %v2635 = vmul.f32 %v2619, 0.1
        %v2636 = vmul.f32 %v2620, 0.1
        %v2637 = vmul.f32 %v2621, 0.1
        %v2638 = vmul.f32 %v2622, 0.1
        %v2639 = vsel %vm2623, %v2615, %v2631
        %v2640 = vsel %vm2624, %v2616, %v2632
        %v2641 = vsel %vm2625, %v2617, %v2633
        %v2642 = vsel %vm2626, %v2618, %v2634
        %v2643 = vsel %vm2627, %v2619, %v2635
        %v2644 = vsel %vm2628, %v2620, %v2636
        %v2645 = vsel %vm2629, %v2621, %v2637
        %v2646 = vsel %vm2630, %v2622, %v2638
        %2647 = vst.msk [vmem:[#allocation2 + $0x8] sm:$0xff] %vm194, %v2639
        %2648 = vst.msk [vmem:[#allocation2 + $0x10] sm:$0xff] %vm194, %v2640
        %2649 = vst.msk [vmem:[#allocation2 + $0x18] sm:$0xff] %vm194, %v2641
        %2650 = vst.msk [vmem:[#allocation2 + $0x20] sm:$0xff] %vm194, %v2642
        %2651 = vst.msk [vmem:[#allocation2 + $0x28] sm:$0xff] %vm194, %v2643
        %2652 = vst.msk [vmem:[#allocation2 + $0x30] sm:$0xff] %vm194, %v2644
        %2653 = vst.msk [vmem:[#allocation2 + $0x38] sm:$0xff] %vm194, %v2645
        %2654 = vst.msk [vmem:[#allocation2 + $0x40] sm:$0xff] %vm194, %v2646
        %v2655 = vld [vmem:[#allocation2] sm:$0xff]
        %v2656 = vld [vmem:[#allocation2 + $0x8] sm:$0xff]
        %v2657 = vld [vmem:[#allocation2 + $0x10] sm:$0xff]
        %v2658 = vld [vmem:[#allocation2 + $0x18] sm:$0xff]
        %v2659 = vld [vmem:[#allocation2 + $0x20] sm:$0xff]
        %v2660 = vld [vmem:[#allocation2 + $0x28] sm:$0xff]
        %v2661 = vld [vmem:[#allocation2 + $0x30] sm:$0xff]
        %v2662 = vld [vmem:[#allocation2 + $0x38] sm:$0xff]
        %v2663 = vld [vmem:[#allocation2 + $0x40] sm:$0xff]
        %v2664 = vld [vmem:[#allocation2 + $0x48] sm:$0xff]
        %s2665 = scalar_lea.vmem [#allocation3], 480
        %v2666 = vld [vmem:[%s2665] sm:$0xff]
        %v2667 = vld [vmem:[%s2665 + $0x8] sm:$0xff]
        %v2668 = vld [vmem:[%s2665 + $0x10] sm:$0xff]
        %v2669 = vld [vmem:[%s2665 + $0x18] sm:$0xff]
        %s2670 = scalar_lea.vmem [#allocation3], 512
        %v2671 = vld [vmem:[%s2670] sm:$0xff]
        %v2672 = vld [vmem:[%s2670 + $0x8] sm:$0xff]
        %v2673 = vld [vmem:[%s2670 + $0x10] sm:$0xff]
        %v2674 = vld [vmem:[%s2670 + $0x18] sm:$0xff]
        %v2676 = vsel %vm194, %v2656, 0
        %v2679 = vsel %vm194, %v2657, 0
        %v2682 = vsel %vm194, %v2658, 0
        %v2685 = vsel %vm194, %v2659, 0
        %v2688 = vsel %vm194, %v2660, 0
        %v2691 = vsel %vm194, %v2661, 0
        %v2694 = vsel %vm194, %v2662, 0
        %v2697 = vsel %vm194, %v2663, 0
        %2699 = vmatprep.subr.mxu0 0.0
        %2700 = vmatpush1.msra.mxu0 0.0
        %2701 = vmatprep.subr.mxu0 0.0
        %2702 = vmatpush1.msra.mxu0 0.0
        %2703 = vmatprep.subr.mxu0 0.0
        %2704 = vmatpush1.msra.mxu0 0.0
        %2705 = vmatprep.subr.mxu0 0.0
        %2706 = vmatpush1.msra.mxu0 0.0
        %2707 = vmatprep.subr.mxu0 0.0
        %2708 = vmatpush1.msra.mxu0 0.0
        %2709 = vmatprep.subr.mxu0 0.0
        %2710 = vmatpush1.msra.mxu0 0.0
        %2711 = vmatprep.subr.mxu0 0.0
        %2712 = vmatpush1.msra.mxu0 0.0
        %2713 = vmatprep.subr.mxu0 0.0
        %2714 = vmatpush1.msra.mxu0 0.0
        %2715 = vmatprep.subr.mxu0 0.0
        %2716 = vmatpush1.msra.mxu0 0.0
        %2717 = vmatprep.subr.mxu0 0.0
        %2718 = vmatpush1.msra.mxu0 0.0
        %2719 = vmatprep.subr.mxu0 0.0
        %2720 = vmatpush1.msra.mxu0 0.0
        %2721 = vmatprep.subr.mxu0 0.0
        %2722 = vmatpush1.msra.mxu0 0.0
        %2723 = vmatprep.subr.mxu0 0.0
        %2724 = vmatpush1.msra.mxu0 %v2674
        %2725 = vmatprep.subr.mxu0 0.0
        %2726 = vmatpush1.msra.mxu0 %v2673
        %2727 = vmatprep.subr.mxu0 0.0
        %2728 = vmatpush1.msra.mxu0 %v2672
        %2729 = vmatprep.subr.mxu0 0.0
        %2730 = vmatpush1.msra.mxu0 %v2671
        %2731 = vmatprep.subr.mxu0 0.0
        %2732 = vmatpush2.msra.mxu0 0.0
        %2733 = vmatprep.subr.mxu0 0.0
        %2734 = vmatpush2.msra.mxu0 0.0
        %2735 = vmatprep.subr.mxu0 0.0
        %2736 = vmatpush2.msra.mxu0 0.0
        %2737 = vmatprep.subr.mxu0 0.0
        %2738 = vmatpush2.msra.mxu0 0.0
        %2739 = vmatprep.subr.mxu0 0.0
        %2740 = vmatpush2.msra.mxu0 0.0
        %2741 = vmatprep.subr.mxu0 0.0
        %2742 = vmatpush2.msra.mxu0 0.0
        %2743 = vmatprep.subr.mxu0 0.0
        %2744 = vmatpush2.msra.mxu0 0.0
        %2745 = vmatprep.subr.mxu0 0.0
        %2746 = vmatpush2.msra.mxu0 0.0
        %2747 = vmatprep.subr.mxu0 0.0
        %2748 = vmatpush2.msra.mxu0 0.0
        %2749 = vmatprep.subr.mxu0 0.0
        %2750 = vmatpush2.msra.mxu0 0.0
        %2751 = vmatprep.subr.mxu0 0.0
        %2752 = vmatpush2.msra.mxu0 0.0
        %2753 = vmatprep.subr.mxu0 0.0
        %2754 = vmatpush2.msra.mxu0 0.0
        %2755 = vmatprep.subr.mxu0 0.0
        %2756 = vmatpush2.msra.mxu0 0.0
        %2757 = vmatprep.subr.mxu0 0.0
        %2758 = vmatpush2.msra.mxu0 0.0
        %2759 = vmatprep.subr.mxu0 0.0
        %2760 = vmatpush2.msra.mxu0 0.0
        %2761 = vmatprep.subr.mxu0 0.0
        %2762 = vmatpush2.msra.mxu0 0.0
        %2763 = vmatprep.mubr.f32.mxu0 0.0
        %2764 = vmatmul.mubr.f32.gmra.mxu0 %v2676
        %v2765 = vpop.f32.mrf.mxu0
        %v2766 = vadd.f32 0.0, %v2765
        %v2767 = vpop.f32.mrf.mxu0
        %2768 = vmatprep.mubr.f32.mxu0 0.0
        %2769 = vmatmul.mubr.f32.gmra.mxu0 %v2679
        %v2770 = vpop.f32.mrf.mxu0
        %v2771 = vadd.f32 0.0, %v2770
        %v2772 = vpop.f32.mrf.mxu0
        %2773 = vmatprep.mubr.f32.mxu0 0.0
        %2774 = vmatmul.mubr.f32.gmra.mxu0 %v2682
        %v2775 = vpop.f32.mrf.mxu0
        %v2776 = vadd.f32 0.0, %v2775
        %v2777 = vpop.f32.mrf.mxu0
        %2778 = vmatprep.mubr.f32.mxu0 0.0
        %2779 = vmatmul.mubr.f32.gmra.mxu0 %v2685
        %v2780 = vpop.f32.mrf.mxu0
        %v2781 = vadd.f32 0.0, %v2780
        %v2782 = vpop.f32.mrf.mxu0
        %2783 = vmatprep.mubr.f32.mxu0 0.0
        %2784 = vmatmul.mubr.f32.gmra.mxu0 %v2688
        %v2785 = vpop.f32.mrf.mxu0
        %v2786 = vadd.f32 0.0, %v2785
        %v2787 = vpop.f32.mrf.mxu0
        %2788 = vmatprep.mubr.f32.mxu0 0.0
        %2789 = vmatmul.mubr.f32.gmra.mxu0 %v2691
        %v2790 = vpop.f32.mrf.mxu0
        %v2791 = vadd.f32 0.0, %v2790
        %v2792 = vpop.f32.mrf.mxu0
        %2793 = vmatprep.mubr.f32.mxu0 0.0
        %2794 = vmatmul.mubr.f32.gmra.mxu0 %v2694
        %v2795 = vpop.f32.mrf.mxu0
        %v2796 = vadd.f32 0.0, %v2795
        %v2797 = vpop.f32.mrf.mxu0
        %2798 = vmatprep.mubr.f32.mxu0 0.0
        %2799 = vmatmul.mubr.f32.gmra.mxu0 %v2697
        %v2800 = vpop.f32.mrf.mxu0
        %v2801 = vadd.f32 0.0, %v2800
        %v2802 = vpop.f32.mrf.mxu0
        %2803 = vdwg.mxu0
        %v2805 = vrot.slane %v2655, 3
        %v2806 = vrot.slane %v2656, 3
        %v2807 = vsel %vm1020, %v2805, %v2806
        %v2808 = vrot.slane %v2657, 3
        %v2809 = vsel %vm1020, %v2806, %v2808
        %v2810 = vrot.slane %v2658, 3
        %v2811 = vsel %vm1020, %v2808, %v2810
        %v2812 = vrot.slane %v2659, 3
        %v2813 = vsel %vm1020, %v2810, %v2812
        %v2814 = vrot.slane %v2660, 3
        %v2815 = vsel %vm1020, %v2812, %v2814
        %v2816 = vrot.slane %v2661, 3
        %v2817 = vsel %vm1020, %v2814, %v2816
        %v2818 = vrot.slane %v2662, 3
        %v2819 = vsel %vm1020, %v2816, %v2818
        %v2820 = vrot.slane %v2663, 3
        %v2821 = vsel %vm1020, %v2818, %v2820
        %v2822 = vsel %vm194, %v2807, 0
        %v2824 = vsel %vm194, %v2809, 0
        %v2826 = vsel %vm194, %v2811, 0
        %v2828 = vsel %vm194, %v2813, 0
        %v2830 = vsel %vm194, %v2815, 0
        %v2832 = vsel %vm194, %v2817, 0
        %v2834 = vsel %vm194, %v2819, 0
        %v2836 = vsel %vm194, %v2821, 0
        %2838 = vmatprep.subr.mxu0 0.0
        %2839 = vmatpush1.msra.mxu0 0.0
        %2840 = vmatprep.subr.mxu0 0.0
        %2841 = vmatpush1.msra.mxu0 0.0
        %2842 = vmatprep.subr.mxu0 0.0
        %2843 = vmatpush1.msra.mxu0 0.0
        %2844 = vmatprep.subr.mxu0 0.0
        %2845 = vmatpush1.msra.mxu0 0.0
        %2846 = vmatprep.subr.mxu0 0.0
        %2847 = vmatpush1.msra.mxu0 0.0
        %2848 = vmatprep.subr.mxu0 0.0
        %2849 = vmatpush1.msra.mxu0 0.0
        %2850 = vmatprep.subr.mxu0 0.0
        %2851 = vmatpush1.msra.mxu0 0.0
        %2852 = vmatprep.subr.mxu0 0.0
        %2853 = vmatpush1.msra.mxu0 0.0
        %2854 = vmatprep.subr.mxu0 0.0
        %2855 = vmatpush1.msra.mxu0 0.0
        %2856 = vmatprep.subr.mxu0 0.0
        %2857 = vmatpush1.msra.mxu0 0.0
        %2858 = vmatprep.subr.mxu0 0.0
        %2859 = vmatpush1.msra.mxu0 0.0
        %2860 = vmatprep.subr.mxu0 0.0
        %2861 = vmatpush1.msra.mxu0 0.0
        %2862 = vmatprep.subr.mxu0 0.0
        %2863 = vmatpush1.msra.mxu0 %v2669
        %2864 = vmatprep.subr.mxu0 0.0
        %2865 = vmatpush1.msra.mxu0 %v2668
        %2866 = vmatprep.subr.mxu0 0.0
        %2867 = vmatpush1.msra.mxu0 %v2667
        %2868 = vmatprep.subr.mxu0 0.0
        %2869 = vmatpush1.msra.mxu0 %v2666
        %2870 = vmatprep.subr.mxu0 0.0
        %2871 = vmatpush2.msra.mxu0 0.0
        %2872 = vmatprep.subr.mxu0 0.0
        %2873 = vmatpush2.msra.mxu0 0.0
        %2874 = vmatprep.subr.mxu0 0.0
        %2875 = vmatpush2.msra.mxu0 0.0
        %2876 = vmatprep.subr.mxu0 0.0
        %2877 = vmatpush2.msra.mxu0 0.0
        %2878 = vmatprep.subr.mxu0 0.0
        %2879 = vmatpush2.msra.mxu0 0.0
        %2880 = vmatprep.subr.mxu0 0.0
        %2881 = vmatpush2.msra.mxu0 0.0
        %2882 = vmatprep.subr.mxu0 0.0
        %2883 = vmatpush2.msra.mxu0 0.0
        %2884 = vmatprep.subr.mxu0 0.0
        %2885 = vmatpush2.msra.mxu0 0.0
        %2886 = vmatprep.subr.mxu0 0.0
        %2887 = vmatpush2.msra.mxu0 0.0
        %2888 = vmatprep.subr.mxu0 0.0
        %2889 = vmatpush2.msra.mxu0 0.0
        %2890 = vmatprep.subr.mxu0 0.0
        %2891 = vmatpush2.msra.mxu0 0.0
        %2892 = vmatprep.subr.mxu0 0.0
        %2893 = vmatpush2.msra.mxu0 0.0
        %2894 = vmatprep.subr.mxu0 0.0
        %2895 = vmatpush2.msra.mxu0 0.0
        %2896 = vmatprep.subr.mxu0 0.0
        %2897 = vmatpush2.msra.mxu0 0.0
        %2898 = vmatprep.subr.mxu0 0.0
        %2899 = vmatpush2.msra.mxu0 0.0
        %2900 = vmatprep.subr.mxu0 0.0
        %2901 = vmatpush2.msra.mxu0 0.0
        %2902 = vmatprep.mubr.f32.mxu0 0.0
        %2903 = vmatmul.mubr.f32.gmra.mxu0 %v2822
        %v2904 = vpop.f32.mrf.mxu0
        %v2905 = vadd.f32 %v2766, %v2904
        %v2906 = vpop.f32.mrf.mxu0
        %2907 = vmatprep.mubr.f32.mxu0 0.0
        %2908 = vmatmul.mubr.f32.gmra.mxu0 %v2824
        %v2909 = vpop.f32.mrf.mxu0
        %v2910 = vadd.f32 %v2771, %v2909
        %v2911 = vpop.f32.mrf.mxu0
        %2912 = vmatprep.mubr.f32.mxu0 0.0
        %2913 = vmatmul.mubr.f32.gmra.mxu0 %v2826
        %v2914 = vpop.f32.mrf.mxu0
        %v2915 = vadd.f32 %v2776, %v2914
        %v2916 = vpop.f32.mrf.mxu0
        %2917 = vmatprep.mubr.f32.mxu0 0.0
        %2918 = vmatmul.mubr.f32.gmra.mxu0 %v2828
        %v2919 = vpop.f32.mrf.mxu0
        %v2920 = vadd.f32 %v2781, %v2919
        %v2921 = vpop.f32.mrf.mxu0
        %2922 = vmatprep.mubr.f32.mxu0 0.0
        %2923 = vmatmul.mubr.f32.gmra.mxu0 %v2830
        %v2924 = vpop.f32.mrf.mxu0
        %v2925 = vadd.f32 %v2786, %v2924
        %v2926 = vpop.f32.mrf.mxu0
        %2927 = vmatprep.mubr.f32.mxu0 0.0
        %2928 = vmatmul.mubr.f32.gmra.mxu0 %v2832
        %v2929 = vpop.f32.mrf.mxu0
        %v2930 = vadd.f32 %v2791, %v2929
        %v2931 = vpop.f32.mrf.mxu0
        %2932 = vmatprep.mubr.f32.mxu0 0.0
        %2933 = vmatmul.mubr.f32.gmra.mxu0 %v2834
        %v2934 = vpop.f32.mrf.mxu0
        %v2935 = vadd.f32 %v2796, %v2934
        %v2936 = vpop.f32.mrf.mxu0
        %2937 = vmatprep.mubr.f32.mxu0 0.0
        %2938 = vmatmul.mubr.f32.gmra.mxu0 %v2836
        %v2939 = vpop.f32.mrf.mxu0
        %v2940 = vadd.f32 %v2801, %v2939
        %v2941 = vpop.f32.mrf.mxu0
        %2942 = vdwg.mxu0
        %s2943 = scalar_lea.vmem [#allocation3], 544
        %v2944 = vld [vmem:[%s2943] sm:$0xff]
        %v2945 = vld [vmem:[%s2943 + $0x8] sm:$0xff]
        %v2946 = vld [vmem:[%s2943 + $0x10] sm:$0xff]
        %v2947 = vld [vmem:[%s2943 + $0x18] sm:$0xff]
        %v2949 = vrot.slane %v2656, 5
        %v2950 = vrot.slane %v2657, 5
        %v2951 = vsel %vm875, %v2949, %v2950
        %v2952 = vrot.slane %v2658, 5
        %v2953 = vsel %vm875, %v2950, %v2952
        %v2954 = vrot.slane %v2659, 5
        %v2955 = vsel %vm875, %v2952, %v2954
        %v2956 = vrot.slane %v2660, 5
        %v2957 = vsel %vm875, %v2954, %v2956
        %v2958 = vrot.slane %v2661, 5
        %v2959 = vsel %vm875, %v2956, %v2958
        %v2960 = vrot.slane %v2662, 5
        %v2961 = vsel %vm875, %v2958, %v2960
        %v2962 = vrot.slane %v2663, 5
        %v2963 = vsel %vm875, %v2960, %v2962
        %v2964 = vrot.slane %v2664, 5
        %v2965 = vsel %vm875, %v2962, %v2964
        %v2966 = vsel %vm194, %v2951, 0
        %v2968 = vsel %vm194, %v2953, 0
        %v2970 = vsel %vm194, %v2955, 0
        %v2972 = vsel %vm194, %v2957, 0
        %v2974 = vsel %vm194, %v2959, 0
        %v2976 = vsel %vm194, %v2961, 0
        %v2978 = vsel %vm194, %v2963, 0
        %v2980 = vsel %vm194, %v2965, 0
        %2982 = vmatprep.subr.mxu0 0.0
        %2983 = vmatpush1.msra.mxu0 0.0
        %2984 = vmatprep.subr.mxu0 0.0
        %2985 = vmatpush1.msra.mxu0 0.0
        %2986 = vmatprep.subr.mxu0 0.0
        %2987 = vmatpush1.msra.mxu0 0.0
        %2988 = vmatprep.subr.mxu0 0.0
        %2989 = vmatpush1.msra.mxu0 0.0
        %2990 = vmatprep.subr.mxu0 0.0
        %2991 = vmatpush1.msra.mxu0 0.0
        %2992 = vmatprep.subr.mxu0 0.0
        %2993 = vmatpush1.msra.mxu0 0.0
        %2994 = vmatprep.subr.mxu0 0.0
        %2995 = vmatpush1.msra.mxu0 0.0
        %2996 = vmatprep.subr.mxu0 0.0
        %2997 = vmatpush1.msra.mxu0 0.0
        %2998 = vmatprep.subr.mxu0 0.0
        %2999 = vmatpush1.msra.mxu0 0.0
        %3000 = vmatprep.subr.mxu0 0.0
        %3001 = vmatpush1.msra.mxu0 0.0
        %3002 = vmatprep.subr.mxu0 0.0
        %3003 = vmatpush1.msra.mxu0 0.0
        %3004 = vmatprep.subr.mxu0 0.0
        %3005 = vmatpush1.msra.mxu0 0.0
        %3006 = vmatprep.subr.mxu0 0.0
        %3007 = vmatpush1.msra.mxu0 %v2947
        %3008 = vmatprep.subr.mxu0 0.0
        %3009 = vmatpush1.msra.mxu0 %v2946
        %3010 = vmatprep.subr.mxu0 0.0
        %3011 = vmatpush1.msra.mxu0 %v2945
        %3012 = vmatprep.subr.mxu0 0.0
        %3013 = vmatpush1.msra.mxu0 %v2944
        %3014 = vmatprep.subr.mxu0 0.0
        %3015 = vmatpush2.msra.mxu0 0.0
        %3016 = vmatprep.subr.mxu0 0.0
        %3017 = vmatpush2.msra.mxu0 0.0
        %3018 = vmatprep.subr.mxu0 0.0
        %3019 = vmatpush2.msra.mxu0 0.0
        %3020 = vmatprep.subr.mxu0 0.0
        %3021 = vmatpush2.msra.mxu0 0.0
        %3022 = vmatprep.subr.mxu0 0.0
        %3023 = vmatpush2.msra.mxu0 0.0
        %3024 = vmatprep.subr.mxu0 0.0
        %3025 = vmatpush2.msra.mxu0 0.0
        %3026 = vmatprep.subr.mxu0 0.0
        %3027 = vmatpush2.msra.mxu0 0.0
        %3028 = vmatprep.subr.mxu0 0.0
        %3029 = vmatpush2.msra.mxu0 0.0
        %3030 = vmatprep.subr.mxu0 0.0
        %3031 = vmatpush2.msra.mxu0 0.0
        %3032 = vmatprep.subr.mxu0 0.0
        %3033 = vmatpush2.msra.mxu0 0.0
        %3034 = vmatprep.subr.mxu0 0.0
        %3035 = vmatpush2.msra.mxu0 0.0
        %3036 = vmatprep.subr.mxu0 0.0
        %3037 = vmatpush2.msra.mxu0 0.0
        %3038 = vmatprep.subr.mxu0 0.0
        %3039 = vmatpush2.msra.mxu0 0.0
        %3040 = vmatprep.subr.mxu0 0.0
        %3041 = vmatpush2.msra.mxu0 0.0
        %3042 = vmatprep.subr.mxu0 0.0
        %3043 = vmatpush2.msra.mxu0 0.0
        %3044 = vmatprep.subr.mxu0 0.0
        %3045 = vmatpush2.msra.mxu0 0.0
        %3046 = vmatprep.mubr.f32.mxu0 0.0
        %3047 = vmatmul.mubr.f32.gmra.mxu0 %v2966
        %v3048 = vpop.f32.mrf.mxu0
        %v3049 = vadd.f32 0.0, %v3048
        %v3050 = vpop.f32.mrf.mxu0
        %3051 = vmatprep.mubr.f32.mxu0 0.0
        %3052 = vmatmul.mubr.f32.gmra.mxu0 %v2968
        %v3053 = vpop.f32.mrf.mxu0
        %v3054 = vadd.f32 0.0, %v3053
        %v3055 = vpop.f32.mrf.mxu0
        %3056 = vmatprep.mubr.f32.mxu0 0.0
        %3057 = vmatmul.mubr.f32.gmra.mxu0 %v2970
        %v3058 = vpop.f32.mrf.mxu0
        %v3059 = vadd.f32 0.0, %v3058
        %v3060 = vpop.f32.mrf.mxu0
        %3061 = vmatprep.mubr.f32.mxu0 0.0
        %3062 = vmatmul.mubr.f32.gmra.mxu0 %v2972
        %v3063 = vpop.f32.mrf.mxu0
        %v3064 = vadd.f32 0.0, %v3063
        %v3065 = vpop.f32.mrf.mxu0
        %3066 = vmatprep.mubr.f32.mxu0 0.0
        %3067 = vmatmul.mubr.f32.gmra.mxu0 %v2974
        %v3068 = vpop.f32.mrf.mxu0
        %v3069 = vadd.f32 0.0, %v3068
        %v3070 = vpop.f32.mrf.mxu0
        %3071 = vmatprep.mubr.f32.mxu0 0.0
        %3072 = vmatmul.mubr.f32.gmra.mxu0 %v2976
        %v3073 = vpop.f32.mrf.mxu0
        %v3074 = vadd.f32 0.0, %v3073
        %v3075 = vpop.f32.mrf.mxu0
        %3076 = vmatprep.mubr.f32.mxu0 0.0
        %3077 = vmatmul.mubr.f32.gmra.mxu0 %v2978
        %v3078 = vpop.f32.mrf.mxu0
        %v3079 = vadd.f32 0.0, %v3078
        %v3080 = vpop.f32.mrf.mxu0
        %3081 = vmatprep.mubr.f32.mxu0 0.0
        %3082 = vmatmul.mubr.f32.gmra.mxu0 %v2980
        %v3083 = vpop.f32.mrf.mxu0
        %v3084 = vadd.f32 0.0, %v3083
        %v3085 = vpop.f32.mrf.mxu0
        %3086 = vdwg.mxu0
        %v3087 = vadd.f32 %v2905, %v3049
        %v3088 = vadd.f32 %v2910, %v3054
        %v3089 = vadd.f32 %v2915, %v3059
        %v3090 = vadd.f32 %v2920, %v3064
        %v3091 = vadd.f32 %v2925, %v3069
        %v3092 = vadd.f32 %v2930, %v3074
        %v3093 = vadd.f32 %v2935, %v3079
        %v3094 = vadd.f32 %v2940, %v3084
        %s3095 = scalar_lea.vmem %s2, 5
        %v3096 = vld [vmem:[%s3095] sm:$0x1]
        %v3098 = vlaneseq
        %v3099 = vshrl.u32 %v3098, 7
        %v3100 = vsub.s32 0, %v3099
        %v3101 = vrot.slane %v3096, %v3100
        %v3103 = vadd.f32 %v3087, %v3101
        %v3104 = vadd.f32 %v3088, %v3101
        %v3105 = vadd.f32 %v3089, %v3101
        %v3106 = vadd.f32 %v3090, %v3101
        %v3107 = vadd.f32 %v3091, %v3101
        %v3108 = vadd.f32 %v3092, %v3101
        %v3109 = vadd.f32 %v3093, %v3101
        %v3110 = vadd.f32 %v3094, %v3101
        %v3111 = vadd.f32 %v1663, %v3103
        %v3112 = vadd.f32 %v1664, %v3104
        %v3113 = vadd.f32 %v1665, %v3105
        %v3114 = vadd.f32 %v1666, %v3106
        %v3115 = vadd.f32 %v1667, %v3107
        %v3116 = vadd.f32 %v1668, %v3108
        %v3117 = vadd.f32 %v1669, %v3109
        %v3118 = vadd.f32 %v1670, %v3110
        %3119 = vst.msk [vmem:[%s185] sm:$0xff] %vm194, %v3111
        %3120 = vst.msk [vmem:[%s185 + $0x8] sm:$0xff] %vm194, %v3112
        %3121 = vst.msk [vmem:[%s185 + $0x10] sm:$0xff] %vm194, %v3113
        %3122 = vst.msk [vmem:[%s185 + $0x18] sm:$0xff] %vm194, %v3114
        %3123 = vst.msk [vmem:[%s185 + $0x20] sm:$0xff] %vm194, %v3115
        %3124 = vst.msk [vmem:[%s185 + $0x28] sm:$0xff] %vm194, %v3116
        %3125 = vst.msk [vmem:[%s185 + $0x30] sm:$0xff] %vm194, %v3117
        %3126 = vst.msk [vmem:[%s185 + $0x38] sm:$0xff] %vm194, %v3118
        %p3127 = scmp.lt.s32.totalorder %s15, 1
        %s3128 = scalar_select %p3127, %s15, 1
        %s3129 = smul.addr %s3128, 8
        %s3130 = smul.addr %s3129, 8
        %s3131 = scalar_lea.vmem %s3, %s3130
        // Predicated region
        $region37: #{tpu_custom_call.1} parent=31 // pred_check
          %p3132 = pneg %p101
        $region38: #{tpu_custom_call.1} parent=31 // pred_check_branch
          %3134 = sbr.rel (%p3132) target = $region40
        $region39: #{tpu_custom_call.1} parent=31 // pred_region
          _
        $region40: #{tpu_custom_call.1} parent=31 // pred_fallthru
          _
      $region32: #{tpu_custom_call.1} parent=5 // pred_fallthru
        _
      %p3135 = scmp.le.s32.totalorder 2, %s10
      // Predicated region
      $region41: #{tpu_custom_call.1} parent=5 // pred_check
        %p3136 = pneg %p3135
      $region42: #{tpu_custom_call.1} parent=5 // pred_check_branch
        %3138 = sbr.rel (%p3136) target = $region44
      $region43: #{tpu_custom_call.1} parent=5 // pred_region
        %s3139 = ssub.s32 %s10, 2
        // Predicated region
        $region45: #{tpu_custom_call.1} parent=43 // pred_check
          %p3140 = pneg %p107
        $region46: #{tpu_custom_call.1} parent=43 // pred_check_branch
          %3142 = sbr.rel (%p3140) target = $region48
        $region47: #{tpu_custom_call.1} parent=43 // pred_region
          %p3143 = scmp.lt.s32.totalorder %s16, 1
          %s3144 = scalar_select %p3143, %s16, 1
          %s3145 = smul.addr %s3144, 8
          %s3146 = smul.addr %s3145, 8
          %s3147 = scalar_lea.vmem %s3, %s3146
        $region48: #{tpu_custom_call.1} parent=43 // pred_fallthru
          _
      $region44: #{tpu_custom_call.1} parent=5 // pred_fallthru
        _
    $region6: #{tpu_custom_call.1} parent=1 // loop_footer
      %s14 = sadd.s32 1, %s10
    $region7: #{tpu_custom_call.1} parent=1 // loop_footer_branch
      %9 = sbr.rel target = $region3
    $region8: #{tpu_custom_call.1} parent=1 // loop_exit
      _
    %3148 = vsyncpa [#allocation4], 1
    %s3149 = scalar_lea.sflag [#allocation4], 1
    %3150 = vsyncpa %s3149, 1

</llo_original>
